<compile_context>
chip_gen: v5e
topology: v5e:2x2
jax: 0.10.0
libtpu: 0.0.40
codegen_flags: <defaults>
</compile_context>

<pallas_src>
import functools
import numpy as np

import jax
import jax.numpy as jnp
from jax.experimental import pallas as pl
from jax.experimental.pallas import tpu as pltpu

EPS = 1e-5
H0 = W0 = 8          # input spatial size implied by fc1 = 128 * 2 * 2
CPAD = 128           # every activation carries 128 channel lanes (zero padded)


# --------------------------------------------------------------------------- #
# in-kernel helpers (traced inline: rolls, aligned concats, one matmul each)
# --------------------------------------------------------------------------- #

def _conv_bn_relu(x, mask_ref, w_ref, g_ref, beta_ref, H, W):
    """x: (M, 128) f32, rows = (b, h, w) row-major.  Returns (M, 128) f32.

    3x3 taps = sublane rolls (XLU) of x; the precomputed (M, 9*128) mask
    zeroes halo rows (image borders / batch boundaries / wrap-around).
    One deep-K (9*128) bf16 MXU matmul per conv layer.
    Conv bias omitted: training-mode BN's mean subtraction cancels it exactly.
    """
    M = x.shape[0]
    taps = []
    for dh in (-1, 0, 1):            # tap k = (dh+1)*3 + (dw+1) = kh*3 + kw
        for dw in (-1, 0, 1):
            d = dh * W + dw
            taps.append(x if d == 0 else pltpu.roll(x, shift=(-d) % M, axis=0))
    col = jnp.concatenate(taps, axis=1) * mask_ref[...]          # (M, 9*128) f32
    acc = jnp.dot(col.astype(jnp.bfloat16), w_ref[...],
                  preferred_element_type=jnp.float32)             # (M, 128) f32
    # BatchNorm2d (training mode): biased variance over all (N, H, W) rows.
    mean = jnp.mean(acc, axis=0, keepdims=True)
    var = jnp.mean(jnp.square(acc - mean), axis=0, keepdims=True)
    y = (acc - mean) * jax.lax.rsqrt(var + EPS) * g_ref[...] + beta_ref[...]
    return jnp.maximum(y, 0.0)


def _maxpool2x2(x, sel_ref, W):
    """MaxPool2d(2,2): 2 rolls + 2 VPU maxes + 1 precomputed compaction matmul."""
    M = x.shape[0]
    m = jnp.maximum(x, pltpu.roll(x, shift=M - 1, axis=0))        # max over w pair
    m = jnp.maximum(m, pltpu.roll(m, shift=M - W, axis=0))        # max over h pair
    return jnp.dot(sel_ref[...], m.astype(jnp.bfloat16),
                   preferred_element_type=jnp.float32)            # (M/4, 128) f32


# --------------------------------------------------------------------------- #
# the single fused kernel
# --------------------------------------------------------------------------- #

def dqn_kernel(x_ref,
               m1_ref, w1_ref, g1_ref, b1_ref, p1_ref,
               m2_ref, w2_ref, g2_ref, b2_ref, p2_ref,
               m3_ref, w3_ref, g3_ref, b3_ref,
               fsel_ref, fc1w_ref, fc1b_ref, fc4w_ref, fc4b_ref,
               o_ref):
    # conv1 + bn1 + relu + maxpool     8x8 -> 4x4
    a = _conv_bn_relu(x_ref[...], m1_ref, w1_ref, g1_ref, b1_ref, 8, 8)
    a = _maxpool2x2(a, p1_ref, 8)
    # conv2 + bn2 + relu + maxpool     4x4 -> 2x2
    a = _conv_bn_relu(a, m2_ref, w2_ref, g2_ref, b2_ref, 4, 4)
    a = _maxpool2x2(a, p2_ref, 4)
    # conv3 + bn3 + relu               2x2
    a = _conv_bn_relu(a, m3_ref, w3_ref, g3_ref, b3_ref, 2, 2)    # (B*4, 128)

    # flatten: row 4b of the lane-concat of rolls holds batch b's full 512
    # feature (ordered s*128 + c); one tiny precomputed row-select compacts it.
    M3 = a.shape[0]
    taps = [a] + [pltpu.roll(a, shift=(M3 - s) % M3, axis=0) for s in (1, 2, 3)]
    cat = jnp.concatenate(taps, axis=1)                           # (B*4, 512)
    feat = jnp.dot(fsel_ref[...], cat.astype(jnp.bfloat16),
                   preferred_element_type=jnp.float32)            # (B, 512)

    # fc1 (flatten permutation folded into the weight) + relu + fc4 (128-lane out)
    h = jnp.dot(feat.astype(jnp.bfloat16), fc1w_ref[...],
                preferred_element_type=jnp.float32) + fc1b_ref[...]
    h = jnp.maximum(h, 0.0)
    o_ref[...] = jnp.dot(h.astype(jnp.bfloat16), fc4w_ref[...],
                         preferred_element_type=jnp.float32) + fc4b_ref[...]


# --------------------------------------------------------------------------- #
# host-side precomputed constants (batch-dependent, numpy, trace-time only)
# --------------------------------------------------------------------------- #

@functools.lru_cache(maxsize=None)
def _batch_constants(B):
    def conv_mask(H, W):
        M = B * H * W
        r = np.arange(M)
        h = (r % (H * W)) // W
        w = r % W
        blocks = []
        for dh in (-1, 0, 1):
            for dw in (-1, 0, 1):
                v = ((h + dh >= 0) & (h + dh < H) & (w + dw >= 0) & (w + dw < W))
                blocks.append(np.broadcast_to(v[:, None], (M, CPAD)))
        return jnp.asarray(np.concatenate(blocks, axis=1).astype(np.float32))

    def pool_sel(H, W):
        Ho, Wo = H // 2, W // 2
        Mo, Mi = B * Ho * Wo, B * H * W
        sel = np.zeros((Mo, Mi), np.float32)
        o = np.arange(Mo)
        b, ho, wo = o // (Ho * Wo), (o % (Ho * Wo)) // Wo, o % Wo
        sel[o, b * H * W + 2 * ho * W + 2 * wo] = 1.0
        return jnp.asarray(sel, dtype=jnp.bfloat16)

    fsel = np.zeros((B, B * 4), np.float32)
    fsel[np.arange(B), np.arange(B) * 4] = 1.0
    return dict(m1=conv_mask(8, 8), p1=pool_sel(8, 8),
                m2=conv_mask(4, 4), p2=pool_sel(4, 4),
                m3=conv_mask(2, 2),
                fsel=jnp.asarray(fsel, dtype=jnp.bfloat16))


# --------------------------------------------------------------------------- #
# parameters & wrapper
# --------------------------------------------------------------------------- #

def init_params(key):
    ks = jax.random.split(key, 10)

    def rnd(k, shape, scale=0.05):
        return jax.random.normal(k, shape, dtype=jnp.float32) * scale

    return {
        "conv1_w": rnd(ks[0], (32, 1, 3, 3)),   "conv1_b": rnd(ks[1], (32,)),
        "conv2_w": rnd(ks[2], (64, 32, 3, 3)),  "conv2_b": rnd(ks[3], (64,)),
        "conv3_w": rnd(ks[4], (128, 64, 3, 3)), "conv3_b": rnd(ks[5], (128,)),
        "bn1_g": jnp.ones((32,), jnp.float32),  "bn1_b": jnp.zeros((32,), jnp.float32),
        "bn2_g": jnp.ones((64,), jnp.float32),  "bn2_b": jnp.zeros((64,), jnp.float32),
        "bn3_g": jnp.ones((128,), jnp.float32), "bn3_b": jnp.zeros((128,), jnp.float32),
        "fc1_w": rnd(ks[6], (512, 512)),        "fc1_b": rnd(ks[7], (512,)),
        "fc4_w": rnd(ks[8], (64, 512)),         "fc4_b": rnd(ks[9], (64,)),
    }


def prepare_params(params):
    """One-time re-layout / bf16 cast of PyTorch-style params for the kernel."""
    def conv_w(w):                       # torch (Cout, Cin, 3, 3) -> (9*128, 128) bf16
        cout, cin = w.shape[0], w.shape[1]
        w9 = jnp.transpose(w.reshape(cout, cin, 9), (2, 1, 0))       # (9, cin, cout)
        wp = jnp.zeros((9, CPAD, CPAD), jnp.float32).at[:, :cin, :cout].set(w9)
        return wp.reshape(9 * CPAD, CPAD).astype(jnp.bfloat16)

    def bn_vec(v):                       # pad per-channel BN vector to 128 lanes
        return jnp.pad(v, (0, CPAD - v.shape[0])).reshape(1, CPAD)

    # fc1 weight: torch input index q = c*4 + s  ->  kernel feature index s*128 + c
    fc1 = jnp.transpose(params["fc1_w"].reshape(512, 128, 4), (2, 1, 0)).reshape(512, 512)

    # conv*_b intentionally unused: cancelled exactly by training-mode BatchNorm.
    return dict(
        w1=conv_w(params["conv1_w"]), g1=bn_vec(params["bn1_g"]), b1=bn_vec(params["bn1_b"]),
        w2=conv_w(params["conv2_w"]), g2=bn_vec(params["bn2_g"]), b2=bn_vec(params["bn2_b"]),
        w3=conv_w(params["conv3_w"]), g3=bn_vec(params["bn3_g"]), b3=bn_vec(params["bn3_b"]),
        fc1w=fc1.astype(jnp.bfloat16),
        fc1b=params["fc1_b"].reshape(1, 512),
        fc4w=jnp.pad(params["fc4_w"].T, ((0, 0), (0, CPAD - 64))).astype(jnp.bfloat16),
        fc4b=jnp.pad(params["fc4_b"], (0, CPAD - 64)).reshape(1, CPAD),
    )


def dqn_forward(prepared, x_nchw):
    """x_nchw: (B, 1, 8, 8) float32 -> (B, 64) float32 in ONE fused kernel."""
    B = x_nchw.shape[0]
    c = _batch_constants(B)

    # rows in (b, h, w) row-major order; single input channel zero-padded to 128 lanes
    x2d = x_nchw.astype(jnp.float32).reshape(B * H0 * W0, 1)
    x2d = jnp.pad(x2d, ((0, 0), (0, CPAD - 1)))

    vmem = pl.BlockSpec(memory_space=pltpu.MemorySpace.VMEM)
    args = (x2d,
            c["m1"], prepared["w1"], prepared["g1"], prepared["b1"], c["p1"],
            c["m2"], prepared["w2"], prepared["g2"], prepared["b2"], c["p2"],
            c["m3"], prepared["w3"], prepared["g3"], prepared["b3"],
            c["fsel"], prepared["fc1w"], prepared["fc1b"],
            prepared["fc4w"], prepared["fc4b"])

    # Gridless single block: all operands (<~3 MiB) are VMEM resident, the whole
    # batch is visible for the training-mode BN reductions, one kernel launch.
    # TODO(synk): for large batches add a leading "parallel" batch grid axis
    # (batch-independent masks + two-pass BN partial sums) to use both v7x cores.
    out = pl.pallas_call(
        dqn_kernel,
        out_shape=jax.ShapeDtypeStruct((B, CPAD), jnp.float32),
        in_specs=[vmem] * len(args),
        out_specs=vmem,
        compiler_params=pltpu.CompilerParams(vmem_limit_bytes=32 * 1024 * 1024),
    )(*args)
    return out[:, :64]   # fc4 padded to a lane-dense 128-wide store; slice back


# --------------------------------------------------------------------------- #
# driver
# --------------------------------------------------------------------------- #

if __name__ == "__main__":
    key = jax.random.PRNGKey(0)
    pkey, xkey = jax.random.split(key)
    params = init_params(pkey)
    prepared = prepare_params(params)          # one-time weight re-layout / cast

    # fc1 expects 128*2*2 features -> input must be (B, 1, 8, 8) like PyTorch.
    x = jax.random.normal(xkey, (2, 1, 8, 8), dtype=jnp.float32)

    fwd = jax.jit(dqn_forward)
    out = jax.block_until_ready(fwd(prepared, x))

    assert out.shape == (2, 64) and out.dtype == jnp.float32
    assert bool(jnp.all(jnp.isfinite(out)))
    print("KERNEL_OK")
</pallas_src>

<mosaic_0001>
module attributes {stable_mosaic.version = 11 : i64} {
  func.func @dqn_kernel(%arg0: memref<128x128xf32, #tpu.memory_space<vmem>>, %arg1: memref<128x1152xf32, #tpu.memory_space<vmem>>, %arg2: memref<1152x128xbf16, #tpu.memory_space<vmem>>, %arg3: memref<1x128xf32, #tpu.memory_space<vmem>>, %arg4: memref<1x128xf32, #tpu.memory_space<vmem>>, %arg5: memref<32x128xbf16, #tpu.memory_space<vmem>>, %arg6: memref<32x1152xf32, #tpu.memory_space<vmem>>, %arg7: memref<1152x128xbf16, #tpu.memory_space<vmem>>, %arg8: memref<1x128xf32, #tpu.memory_space<vmem>>, %arg9: memref<1x128xf32, #tpu.memory_space<vmem>>, %arg10: memref<8x32xbf16, #tpu.memory_space<vmem>>, %arg11: memref<8x1152xf32, #tpu.memory_space<vmem>>, %arg12: memref<1152x128xbf16, #tpu.memory_space<vmem>>, %arg13: memref<1x128xf32, #tpu.memory_space<vmem>>, %arg14: memref<1x128xf32, #tpu.memory_space<vmem>>, %arg15: memref<2x8xbf16, #tpu.memory_space<vmem>>, %arg16: memref<512x512xbf16, #tpu.memory_space<vmem>>, %arg17: memref<1x512xf32, #tpu.memory_space<vmem>>, %arg18: memref<512x128xbf16, #tpu.memory_space<vmem>>, %arg19: memref<1x128xf32, #tpu.memory_space<vmem>>, %arg20: memref<2x128xf32, #tpu.memory_space<vmem>>) attributes {dimension_semantics = [], scalar_prefetch = 0 : i64, scratch_operands = 0 : i64, tpu.core_type = #tpu.core_type<tc>} {
    %c0 = arith.constant 0 : index
    %c0_0 = arith.constant 0 : index
    %0 = vector.load %arg0[%c0, %c0_0] : memref<128x128xf32, #tpu.memory_space<vmem>>, vector<128x128xf32>
    %c9_i32 = arith.constant 9 : i32
    %1 = tpu.dynamic_rotate %0 by %c9_i32 dim 0 : vector<128x128xf32>, i32 -> vector<128x128xf32>
    %c8_i32 = arith.constant 8 : i32
    %2 = tpu.dynamic_rotate %0 by %c8_i32 dim 0 : vector<128x128xf32>, i32 -> vector<128x128xf32>
    %c7_i32 = arith.constant 7 : i32
    %3 = tpu.dynamic_rotate %0 by %c7_i32 dim 0 : vector<128x128xf32>, i32 -> vector<128x128xf32>
    %c1_i32 = arith.constant 1 : i32
    %4 = tpu.dynamic_rotate %0 by %c1_i32 dim 0 : vector<128x128xf32>, i32 -> vector<128x128xf32>
    %c127_i32 = arith.constant 127 : i32
    %5 = tpu.dynamic_rotate %0 by %c127_i32 dim 0 : vector<128x128xf32>, i32 -> vector<128x128xf32>
    %c121_i32 = arith.constant 121 : i32
    %6 = tpu.dynamic_rotate %0 by %c121_i32 dim 0 : vector<128x128xf32>, i32 -> vector<128x128xf32>
    %c120_i32 = arith.constant 120 : i32
    %7 = tpu.dynamic_rotate %0 by %c120_i32 dim 0 : vector<128x128xf32>, i32 -> vector<128x128xf32>
    %c119_i32 = arith.constant 119 : i32
    %8 = tpu.dynamic_rotate %0 by %c119_i32 dim 0 : vector<128x128xf32>, i32 -> vector<128x128xf32>
    %9 = tpu.concatenate %1, %2, %3, %4, %0, %5, %6, %7, %8 in 1 : vector<128x128xf32>, vector<128x128xf32>, vector<128x128xf32>, vector<128x128xf32>, vector<128x128xf32>, vector<128x128xf32>, vector<128x128xf32>, vector<128x128xf32>, vector<128x128xf32> -> vector<128x1152xf32>
    %c0_1 = arith.constant 0 : index
    %c0_2 = arith.constant 0 : index
    %10 = vector.load %arg1[%c0_1, %c0_2] : memref<128x1152xf32, #tpu.memory_space<vmem>>, vector<128x1152xf32>
    %11 = arith.mulf %9, %10 : vector<128x1152xf32>
    %12 = arith.truncf %11 : vector<128x1152xf32> to vector<128x1152xbf16>
    %c0_3 = arith.constant 0 : index
    %c0_4 = arith.constant 0 : index
    %13 = vector.load %arg2[%c0_3, %c0_4] : memref<1152x128xbf16, #tpu.memory_space<vmem>>, vector<1152x128xbf16>
    %cst = arith.constant dense<0.000000e+00> : vector<128x128xf32>
    %14 = tpu.matmul %12, %13, %cst {dimension_numbers = #tpu.dot_dimension_numbers<[1], [0], [0], [1], [0, 0, 1, 1], [], []>} : vector<128x1152xbf16>, vector<1152x128xbf16>, vector<128x128xf32> -> vector<128x128xf32>
    %cst_5 = arith.constant dense<0.000000e+00> : vector<128xf32>
    %15 = vector.multi_reduction <add>, %14, %cst_5 [0] : vector<128x128xf32> to vector<128xf32>
    %16 = vector.shape_cast %15 : vector<128xf32> to vector<1x128xf32>
    %cst_6 = arith.constant 1.280000e+02 : f32
    %17 = vector.broadcast %cst_6 : f32 to vector<1x128xf32>
    %18 = arith.divf %16, %17 : vector<1x128xf32>
    %19 = vector.broadcast %18 : vector<1x128xf32> to vector<128x128xf32>
    %20 = arith.subf %14, %19 : vector<128x128xf32>
    %21 = arith.mulf %20, %20 : vector<128x128xf32>
    %cst_7 = arith.constant dense<0.000000e+00> : vector<128xf32>
    %22 = vector.multi_reduction <add>, %21, %cst_7 [0] : vector<128x128xf32> to vector<128xf32>
    %23 = vector.shape_cast %22 : vector<128xf32> to vector<1x128xf32>
    %cst_8 = arith.constant 1.280000e+02 : f32
    %24 = vector.broadcast %cst_8 : f32 to vector<1x128xf32>
    %25 = arith.divf %23, %24 : vector<1x128xf32>
    %26 = vector.broadcast %18 : vector<1x128xf32> to vector<128x128xf32>
    %27 = arith.subf %14, %26 : vector<128x128xf32>
    %cst_9 = arith.constant 9.99999974E-6 : f32
    %28 = vector.broadcast %cst_9 : f32 to vector<1x128xf32>
    %29 = arith.addf %25, %28 : vector<1x128xf32>
    %30 = math.rsqrt %29 : vector<1x128xf32>
    %31 = vector.broadcast %30 : vector<1x128xf32> to vector<128x128xf32>
    %32 = arith.mulf %27, %31 : vector<128x128xf32>
    %c0_10 = arith.constant 0 : index
    %c0_11 = arith.constant 0 : index
    %33 = vector.load %arg3[%c0_10, %c0_11] : memref<1x128xf32, #tpu.memory_space<vmem>>, vector<1x128xf32>
    %34 = vector.broadcast %33 : vector<1x128xf32> to vector<128x128xf32>
    %35 = arith.mulf %32, %34 : vector<128x128xf32>
    %c0_12 = arith.constant 0 : index
    %c0_13 = arith.constant 0 : index
    %36 = vector.load %arg4[%c0_12, %c0_13] : memref<1x128xf32, #tpu.memory_space<vmem>>, vector<1x128xf32>
    %37 = vector.broadcast %36 : vector<1x128xf32> to vector<128x128xf32>
    %38 = arith.addf %35, %37 : vector<128x128xf32>
    %cst_14 = arith.constant 0.000000e+00 : f32
    %39 = vector.broadcast %cst_14 : f32 to vector<128x128xf32>
    %40 = arith.maximumf %38, %39 : vector<128x128xf32>
    %c127_i32_15 = arith.constant 127 : i32
    %41 = tpu.dynamic_rotate %40 by %c127_i32_15 dim 0 : vector<128x128xf32>, i32 -> vector<128x128xf32>
    %42 = arith.maximumf %40, %41 : vector<128x128xf32>
    %c120_i32_16 = arith.constant 120 : i32
    %43 = tpu.dynamic_rotate %42 by %c120_i32_16 dim 0 : vector<128x128xf32>, i32 -> vector<128x128xf32>
    %44 = arith.maximumf %42, %43 : vector<128x128xf32>
    %c0_17 = arith.constant 0 : index
    %c0_18 = arith.constant 0 : index
    %45 = vector.load %arg5[%c0_17, %c0_18] : memref<32x128xbf16, #tpu.memory_space<vmem>>, vector<32x128xbf16>
    %46 = arith.truncf %44 : vector<128x128xf32> to vector<128x128xbf16>
    %cst_19 = arith.constant dense<0.000000e+00> : vector<32x128xf32>
    %47 = tpu.matmul %45, %46, %cst_19 {dimension_numbers = #tpu.dot_dimension_numbers<[1], [0], [0], [1], [0, 0, 1, 1], [], []>} : vector<32x128xbf16>, vector<128x128xbf16>, vector<32x128xf32> -> vector<32x128xf32>
    %c5_i32 = arith.constant 5 : i32
    %48 = tpu.dynamic_rotate %47 by %c5_i32 dim 0 : vector<32x128xf32>, i32 -> vector<32x128xf32>
    %c4_i32 = arith.constant 4 : i32
    %49 = tpu.dynamic_rotate %47 by %c4_i32 dim 0 : vector<32x128xf32>, i32 -> vector<32x128xf32>
    %c3_i32 = arith.constant 3 : i32
    %50 = tpu.dynamic_rotate %47 by %c3_i32 dim 0 : vector<32x128xf32>, i32 -> vector<32x128xf32>
    %c1_i32_20 = arith.constant 1 : i32
    %51 = tpu.dynamic_rotate %47 by %c1_i32_20 dim 0 : vector<32x128xf32>, i32 -> vector<32x128xf32>
    %c31_i32 = arith.constant 31 : i32
    %52 = tpu.dynamic_rotate %47 by %c31_i32 dim 0 : vector<32x128xf32>, i32 -> vector<32x128xf32>
    %c29_i32 = arith.constant 29 : i32
    %53 = tpu.dynamic_rotate %47 by %c29_i32 dim 0 : vector<32x128xf32>, i32 -> vector<32x128xf32>
    %c28_i32 = arith.constant 28 : i32
    %54 = tpu.dynamic_rotate %47 by %c28_i32 dim 0 : vector<32x128xf32>, i32 -> vector<32x128xf32>
    %c27_i32 = arith.constant 27 : i32
    %55 = tpu.dynamic_rotate %47 by %c27_i32 dim 0 : vector<32x128xf32>, i32 -> vector<32x128xf32>
    %56 = tpu.concatenate %48, %49, %50, %51, %47, %52, %53, %54, %55 in 1 : vector<32x128xf32>, vector<32x128xf32>, vector<32x128xf32>, vector<32x128xf32>, vector<32x128xf32>, vector<32x128xf32>, vector<32x128xf32>, vector<32x128xf32>, vector<32x128xf32> -> vector<32x1152xf32>
    %c0_21 = arith.constant 0 : index
    %c0_22 = arith.constant 0 : index
    %57 = vector.load %arg6[%c0_21, %c0_22] : memref<32x1152xf32, #tpu.memory_space<vmem>>, vector<32x1152xf32>
    %58 = arith.mulf %56, %57 : vector<32x1152xf32>
    %59 = arith.truncf %58 : vector<32x1152xf32> to vector<32x1152xbf16>
    %c0_23 = arith.constant 0 : index
    %c0_24 = arith.constant 0 : index
    %60 = vector.load %arg7[%c0_23, %c0_24] : memref<1152x128xbf16, #tpu.memory_space<vmem>>, vector<1152x128xbf16>
    %cst_25 = arith.constant dense<0.000000e+00> : vector<32x128xf32>
    %61 = tpu.matmul %59, %60, %cst_25 {dimension_numbers = #tpu.dot_dimension_numbers<[1], [0], [0], [1], [0, 0, 1, 1], [], []>} : vector<32x1152xbf16>, vector<1152x128xbf16>, vector<32x128xf32> -> vector<32x128xf32>
    %cst_26 = arith.constant dense<0.000000e+00> : vector<128xf32>
    %62 = vector.multi_reduction <add>, %61, %cst_26 [0] : vector<32x128xf32> to vector<128xf32>
    %63 = vector.shape_cast %62 : vector<128xf32> to vector<1x128xf32>
    %cst_27 = arith.constant 3.200000e+01 : f32
    %64 = vector.broadcast %cst_27 : f32 to vector<1x128xf32>
    %65 = arith.divf %63, %64 : vector<1x128xf32>
    %66 = vector.broadcast %65 : vector<1x128xf32> to vector<32x128xf32>
    %67 = arith.subf %61, %66 : vector<32x128xf32>
    %68 = arith.mulf %67, %67 : vector<32x128xf32>
    %cst_28 = arith.constant dense<0.000000e+00> : vector<128xf32>
    %69 = vector.multi_reduction <add>, %68, %cst_28 [0] : vector<32x128xf32> to vector<128xf32>
    %70 = vector.shape_cast %69 : vector<128xf32> to vector<1x128xf32>
    %cst_29 = arith.constant 3.200000e+01 : f32
    %71 = vector.broadcast %cst_29 : f32 to vector<1x128xf32>
    %72 = arith.divf %70, %71 : vector<1x128xf32>
    %73 = vector.broadcast %65 : vector<1x128xf32> to vector<32x128xf32>
    %74 = arith.subf %61, %73 : vector<32x128xf32>
    %cst_30 = arith.constant 9.99999974E-6 : f32
    %75 = vector.broadcast %cst_30 : f32 to vector<1x128xf32>
    %76 = arith.addf %72, %75 : vector<1x128xf32>
    %77 = math.rsqrt %76 : vector<1x128xf32>
    %78 = vector.broadcast %77 : vector<1x128xf32> to vector<32x128xf32>
    %79 = arith.mulf %74, %78 : vector<32x128xf32>
    %c0_31 = arith.constant 0 : index
    %c0_32 = arith.constant 0 : index
    %80 = vector.load %arg8[%c0_31, %c0_32] : memref<1x128xf32, #tpu.memory_space<vmem>>, vector<1x128xf32>
    %81 = vector.broadcast %80 : vector<1x128xf32> to vector<32x128xf32>
    %82 = arith.mulf %79, %81 : vector<32x128xf32>
    %c0_33 = arith.constant 0 : index
    %c0_34 = arith.constant 0 : index
    %83 = vector.load %arg9[%c0_33, %c0_34] : memref<1x128xf32, #tpu.memory_space<vmem>>, vector<1x128xf32>
    %84 = vector.broadcast %83 : vector<1x128xf32> to vector<32x128xf32>
    %85 = arith.addf %82, %84 : vector<32x128xf32>
    %cst_35 = arith.constant 0.000000e+00 : f32
    %86 = vector.broadcast %cst_35 : f32 to vector<32x128xf32>
    %87 = arith.maximumf %85, %86 : vector<32x128xf32>
    %c31_i32_36 = arith.constant 31 : i32
    %88 = tpu.dynamic_rotate %87 by %c31_i32_36 dim 0 : vector<32x128xf32>, i32 -> vector<32x128xf32>
    %89 = arith.maximumf %87, %88 : vector<32x128xf32>
    %c28_i32_37 = arith.constant 28 : i32
    %90 = tpu.dynamic_rotate %89 by %c28_i32_37 dim 0 : vector<32x128xf32>, i32 -> vector<32x128xf32>
    %91 = arith.maximumf %89, %90 : vector<32x128xf32>
    %c0_38 = arith.constant 0 : index
    %c0_39 = arith.constant 0 : index
    %92 = vector.load %arg10[%c0_38, %c0_39] : memref<8x32xbf16, #tpu.memory_space<vmem>>, vector<8x32xbf16>
    %93 = arith.truncf %91 : vector<32x128xf32> to vector<32x128xbf16>
    %cst_40 = arith.constant dense<0.000000e+00> : vector<8x128xf32>
    %94 = tpu.matmul %92, %93, %cst_40 {dimension_numbers = #tpu.dot_dimension_numbers<[1], [0], [0], [1], [0, 0, 1, 1], [], []>} : vector<8x32xbf16>, vector<32x128xbf16>, vector<8x128xf32> -> vector<8x128xf32>
    %c3_i32_41 = arith.constant 3 : i32
    %95 = tpu.dynamic_rotate %94 by %c3_i32_41 dim 0 : vector<8x128xf32>, i32 -> vector<8x128xf32>
    %c2_i32 = arith.constant 2 : i32
    %96 = tpu.dynamic_rotate %94 by %c2_i32 dim 0 : vector<8x128xf32>, i32 -> vector<8x128xf32>
    %c1_i32_42 = arith.constant 1 : i32
    %97 = tpu.dynamic_rotate %94 by %c1_i32_42 dim 0 : vector<8x128xf32>, i32 -> vector<8x128xf32>
    %c1_i32_43 = arith.constant 1 : i32
    %98 = tpu.dynamic_rotate %94 by %c1_i32_43 dim 0 : vector<8x128xf32>, i32 -> vector<8x128xf32>
    %c7_i32_44 = arith.constant 7 : i32
    %99 = tpu.dynamic_rotate %94 by %c7_i32_44 dim 0 : vector<8x128xf32>, i32 -> vector<8x128xf32>
    %c7_i32_45 = arith.constant 7 : i32
    %100 = tpu.dynamic_rotate %94 by %c7_i32_45 dim 0 : vector<8x128xf32>, i32 -> vector<8x128xf32>
    %c6_i32 = arith.constant 6 : i32
    %101 = tpu.dynamic_rotate %94 by %c6_i32 dim 0 : vector<8x128xf32>, i32 -> vector<8x128xf32>
    %c5_i32_46 = arith.constant 5 : i32
    %102 = tpu.dynamic_rotate %94 by %c5_i32_46 dim 0 : vector<8x128xf32>, i32 -> vector<8x128xf32>
    %103 = tpu.concatenate %95, %96, %97, %98, %94, %99, %100, %101, %102 in 1 : vector<8x128xf32>, vector<8x128xf32>, vector<8x128xf32>, vector<8x128xf32>, vector<8x128xf32>, vector<8x128xf32>, vector<8x128xf32>, vector<8x128xf32>, vector<8x128xf32> -> vector<8x1152xf32>
    %c0_47 = arith.constant 0 : index
    %c0_48 = arith.constant 0 : index
    %104 = vector.load %arg11[%c0_47, %c0_48] : memref<8x1152xf32, #tpu.memory_space<vmem>>, vector<8x1152xf32>
    %105 = arith.mulf %103, %104 : vector<8x1152xf32>
    %106 = arith.truncf %105 : vector<8x1152xf32> to vector<8x1152xbf16>
    %c0_49 = arith.constant 0 : index
    %c0_50 = arith.constant 0 : index
    %107 = vector.load %arg12[%c0_49, %c0_50] : memref<1152x128xbf16, #tpu.memory_space<vmem>>, vector<1152x128xbf16>
    %cst_51 = arith.constant dense<0.000000e+00> : vector<8x128xf32>
    %108 = tpu.matmul %106, %107, %cst_51 {dimension_numbers = #tpu.dot_dimension_numbers<[1], [0], [0], [1], [0, 0, 1, 1], [], []>} : vector<8x1152xbf16>, vector<1152x128xbf16>, vector<8x128xf32> -> vector<8x128xf32>
    %cst_52 = arith.constant dense<0.000000e+00> : vector<128xf32>
    %109 = vector.multi_reduction <add>, %108, %cst_52 [0] : vector<8x128xf32> to vector<128xf32>
    %110 = vector.shape_cast %109 : vector<128xf32> to vector<1x128xf32>
    %cst_53 = arith.constant 8.000000e+00 : f32
    %111 = vector.broadcast %cst_53 : f32 to vector<1x128xf32>
    %112 = arith.divf %110, %111 : vector<1x128xf32>
    %113 = vector.broadcast %112 : vector<1x128xf32> to vector<8x128xf32>
    %114 = arith.subf %108, %113 : vector<8x128xf32>
    %115 = arith.mulf %114, %114 : vector<8x128xf32>
    %cst_54 = arith.constant dense<0.000000e+00> : vector<128xf32>
    %116 = vector.multi_reduction <add>, %115, %cst_54 [0] : vector<8x128xf32> to vector<128xf32>
    %117 = vector.shape_cast %116 : vector<128xf32> to vector<1x128xf32>
    %cst_55 = arith.constant 8.000000e+00 : f32
    %118 = vector.broadcast %cst_55 : f32 to vector<1x128xf32>
    %119 = arith.divf %117, %118 : vector<1x128xf32>
    %120 = vector.broadcast %112 : vector<1x128xf32> to vector<8x128xf32>
    %121 = arith.subf %108, %120 : vector<8x128xf32>
    %cst_56 = arith.constant 9.99999974E-6 : f32
    %122 = vector.broadcast %cst_56 : f32 to vector<1x128xf32>
    %123 = arith.addf %119, %122 : vector<1x128xf32>
    %124 = math.rsqrt %123 : vector<1x128xf32>
    %125 = vector.broadcast %124 : vector<1x128xf32> to vector<8x128xf32>
    %126 = arith.mulf %121, %125 : vector<8x128xf32>
    %c0_57 = arith.constant 0 : index
    %c0_58 = arith.constant 0 : index
    %127 = vector.load %arg13[%c0_57, %c0_58] : memref<1x128xf32, #tpu.memory_space<vmem>>, vector<1x128xf32>
    %128 = vector.broadcast %127 : vector<1x128xf32> to vector<8x128xf32>
    %129 = arith.mulf %126, %128 : vector<8x128xf32>
    %c0_59 = arith.constant 0 : index
    %c0_60 = arith.constant 0 : index
    %130 = vector.load %arg14[%c0_59, %c0_60] : memref<1x128xf32, #tpu.memory_space<vmem>>, vector<1x128xf32>
    %131 = vector.broadcast %130 : vector<1x128xf32> to vector<8x128xf32>
    %132 = arith.addf %129, %131 : vector<8x128xf32>
    %cst_61 = arith.constant 0.000000e+00 : f32
    %133 = vector.broadcast %cst_61 : f32 to vector<8x128xf32>
    %134 = arith.maximumf %132, %133 : vector<8x128xf32>
    %c7_i32_62 = arith.constant 7 : i32
    %135 = tpu.dynamic_rotate %134 by %c7_i32_62 dim 0 : vector<8x128xf32>, i32 -> vector<8x128xf32>
    %c6_i32_63 = arith.constant 6 : i32
    %136 = tpu.dynamic_rotate %134 by %c6_i32_63 dim 0 : vector<8x128xf32>, i32 -> vector<8x128xf32>
    %c5_i32_64 = arith.constant 5 : i32
    %137 = tpu.dynamic_rotate %134 by %c5_i32_64 dim 0 : vector<8x128xf32>, i32 -> vector<8x128xf32>
    %138 = tpu.concatenate %134, %135, %136, %137 in 1 : vector<8x128xf32>, vector<8x128xf32>, vector<8x128xf32>, vector<8x128xf32> -> vector<8x512xf32>
    %c0_65 = arith.constant 0 : index
    %c0_66 = arith.constant 0 : index
    %139 = vector.load %arg15[%c0_65, %c0_66] : memref<2x8xbf16, #tpu.memory_space<vmem>>, vector<2x8xbf16>
    %140 = arith.truncf %138 : vector<8x512xf32> to vector<8x512xbf16>
    %cst_67 = arith.constant dense<0.000000e+00> : vector<2x512xf32>
    %141 = tpu.matmul %139, %140, %cst_67 {dimension_numbers = #tpu.dot_dimension_numbers<[1], [0], [0], [1], [0, 0, 1, 1], [], []>} : vector<2x8xbf16>, vector<8x512xbf16>, vector<2x512xf32> -> vector<2x512xf32>
    %142 = arith.truncf %141 : vector<2x512xf32> to vector<2x512xbf16>
    %c0_68 = arith.constant 0 : index
    %c0_69 = arith.constant 0 : index
    %143 = vector.load %arg16[%c0_68, %c0_69] : memref<512x512xbf16, #tpu.memory_space<vmem>>, vector<512x512xbf16>
    %cst_70 = arith.constant dense<0.000000e+00> : vector<2x512xf32>
    %144 = tpu.matmul %142, %143, %cst_70 {dimension_numbers = #tpu.dot_dimension_numbers<[1], [0], [0], [1], [0, 0, 1, 1], [], []>} : vector<2x512xbf16>, vector<512x512xbf16>, vector<2x512xf32> -> vector<2x512xf32>
    %c0_71 = arith.constant 0 : index
    %c0_72 = arith.constant 0 : index
    %145 = vector.load %arg17[%c0_71, %c0_72] : memref<1x512xf32, #tpu.memory_space<vmem>>, vector<1x512xf32>
    %146 = vector.broadcast %145 : vector<1x512xf32> to vector<2x512xf32>
    %147 = arith.addf %144, %146 : vector<2x512xf32>
    %cst_73 = arith.constant 0.000000e+00 : f32
    %148 = vector.broadcast %cst_73 : f32 to vector<2x512xf32>
    %149 = arith.maximumf %147, %148 : vector<2x512xf32>
    %150 = arith.truncf %149 : vector<2x512xf32> to vector<2x512xbf16>
    %c0_74 = arith.constant 0 : index
    %c0_75 = arith.constant 0 : index
    %151 = vector.load %arg18[%c0_74, %c0_75] : memref<512x128xbf16, #tpu.memory_space<vmem>>, vector<512x128xbf16>
    %cst_76 = arith.constant dense<0.000000e+00> : vector<2x128xf32>
    %152 = tpu.matmul %150, %151, %cst_76 {dimension_numbers = #tpu.dot_dimension_numbers<[1], [0], [0], [1], [0, 0, 1, 1], [], []>} : vector<2x512xbf16>, vector<512x128xbf16>, vector<2x128xf32> -> vector<2x128xf32>
    %c0_77 = arith.constant 0 : index
    %c0_78 = arith.constant 0 : index
    %153 = vector.load %arg19[%c0_77, %c0_78] : memref<1x128xf32, #tpu.memory_space<vmem>>, vector<1x128xf32>
    %154 = vector.broadcast %153 : vector<1x128xf32> to vector<2x128xf32>
    %155 = arith.addf %152, %154 : vector<2x128xf32>
    %c0_79 = arith.constant 0 : index
    %c0_80 = arith.constant 0 : index
    %156 = vector.load %arg20[%c0_79, %c0_80] : memref<2x128xf32, #tpu.memory_space<vmem>>, vector<2x128xf32>
    tpu.vector_store %arg20[%c0_79, %c0_80], %155 {strides = array<i32>} : memref<2x128xf32, #tpu.memory_space<vmem>>, vector<2x128xf32>,
    return
  }
}

</mosaic_0001>

<llo_original>
// kernel: dqn_forward.1
$region0: #{dqn_forward.1}
  #allocation0 [shape = 'u32[]', space=smem, size = 0x4, offset = 0x4, fixed_abs, tag = 'smem constant byte address 0x4 - core index']
  #allocation1 [shape = 'u32[72,128]{1,0:T(1,128)}', space=vmem, size = 0x9000, scoped, tag = 'internal scratch']
  %s0 = inlined_call_operand.vmem [shape: f32[128,128], index: 0, kind: input, shape index: {}]
  %s1 = inlined_call_operand.hbm [shape: f32[128,1152], index: 1, kind: input, shape index: {}]
  %s2 = inlined_call_operand.hbm [shape: bf16[1152,128], index: 2, kind: input, shape index: {}]
  %s3 = inlined_call_operand.vmem [shape: f32[1,128], index: 3, kind: input, shape index: {}]
  %s4 = inlined_call_operand.vmem [shape: f32[1,128], index: 4, kind: input, shape index: {}]
  %s5 = inlined_call_operand.vmem [shape: bf16[32,128], index: 5, kind: input, shape index: {}]
  %s6 = inlined_call_operand.vmem [shape: f32[32,1152], index: 6, kind: input, shape index: {}]
  %s7 = inlined_call_operand.hbm [shape: bf16[1152,128], index: 7, kind: input, shape index: {}]
  %s8 = inlined_call_operand.vmem [shape: f32[1,128], index: 8, kind: input, shape index: {}]
  %s9 = inlined_call_operand.vmem [shape: f32[1,128], index: 9, kind: input, shape index: {}]
  %s10 = inlined_call_operand.vmem [shape: bf16[8,32], index: 10, kind: input, shape index: {}]
  %s11 = inlined_call_operand.vmem [shape: f32[8,1152], index: 11, kind: input, shape index: {}]
  %s12 = inlined_call_operand.hbm [shape: bf16[1152,128], index: 12, kind: input, shape index: {}]
  %s13 = inlined_call_operand.vmem [shape: f32[1,128], index: 13, kind: input, shape index: {}]
  %s14 = inlined_call_operand.vmem [shape: f32[1,128], index: 14, kind: input, shape index: {}]
  %s15 = inlined_call_operand.vmem [shape: bf16[2,8], index: 15, kind: input, shape index: {}]
  %s16 = inlined_call_operand.hbm [shape: bf16[512,512], index: 16, kind: input, shape index: {}]
  %s17 = inlined_call_operand.vmem [shape: f32[1,512], index: 17, kind: input, shape index: {}]
  %s18 = inlined_call_operand.hbm [shape: bf16[512,128], index: 18, kind: input, shape index: {}]
  %s19 = inlined_call_operand.vmem [shape: f32[1,128], index: 19, kind: input, shape index: {}]
  %s20 = inlined_call_operand.hbm [shape: f32[2,128], index: 20, kind: output, shape index: {}]
  %s21 = sld [smem:[#allocation0]]
  $region114: #{dqn_forward.1} parent=0
    _
  %s23 = ssub.s32 1, %s21
  %s24 = scalar_select 0, %s23, %s21
  $region1: #{dqn_forward.1} parent=0
    #allocation2 [shape = 'u8[589824]{0}', space=vmem, size = 0x90000, scoped, tag = 'input window, operand 1, single buffered']
    #allocation3 [shape = 's32[1]{0}', space=sflag, size = 0x4, scoped, tag = 'scoped memory for dqn_forward.1']
    #allocation4 [shape = 's32[1]{0}', space=sflag, size = 0x4, scoped, tag = 'scoped memory for dqn_forward.1']
    #allocation5 [shape = 'u8[294912]{0}', space=vmem, size = 0x48000, scoped, tag = 'input window, operand 2, single buffered']
    #allocation6 [shape = 's32[1]{0}', space=sflag, size = 0x4, scoped, tag = 'scoped memory for dqn_forward.1']
    #allocation7 [shape = 'u8[294912]{0}', space=vmem, size = 0x48000, scoped, tag = 'input window, operand 7, single buffered']
    #allocation8 [shape = 'u8[294912]{0}', space=vmem, size = 0x48000, scoped, tag = 'input window, operand 12, single buffered']
    #allocation9 [shape = 's32[1]{0}', space=sflag, size = 0x4, scoped, tag = 'scoped memory for dqn_forward.1']
    #allocation10 [shape = 'u8[524288]{0}', space=vmem, size = 0x80000, scoped, tag = 'input window, operand 16, single buffered']
    #allocation11 [shape = 'u8[131072]{0}', space=vmem, size = 0x20000, scoped, tag = 'input window, operand 18, single buffered']
    #allocation12 [shape = 's32[1]{0}', space=sflag, size = 0x4, scoped, tag = 'scoped memory for dqn_forward.1']
    #allocation13 [shape = 'u8[1024]{0}', space=vmem, size = 0x400, scoped, tag = 'output window, operand 0, single buffered']
    %25 = vsyncpa [#allocation3], 0
    %26 = vsyncpa [#allocation6], 0
    %27 = vsyncpa [#allocation9], 0
    %28 = vsyncpa [#allocation12], 0
    %29 = vsyncpa [#allocation4], 0
    // Predicated region
    $region2: #{dqn_forward.1} parent=1 // pred_check
      _
    $region3: #{dqn_forward.1} parent=1 // pred_check_branch
      %31 = sbr.rel (0) target = $region5
    $region4: #{dqn_forward.1} parent=1 // pred_region
      _
    $region5: #{dqn_forward.1} parent=1 // pred_fallthru
      _
    // Predicated region
    $region6: #{dqn_forward.1} parent=1 // pred_check
      _
    $region7: #{dqn_forward.1} parent=1 // pred_check_branch
      %33 = sbr.rel (0) target = $region9
    $region8: #{dqn_forward.1} parent=1 // pred_region
      %35 = vsyncadd [#allocation3], 0
      %s36 = sshll.u32 %s1, 4
      %s37 = int_to_ptr.hbm [resolvable:$true] %s36
      %s38 = sshll.u32 [#allocation2], 4
      %s39 = int_to_ptr.vmem [resolvable:$true] %s38
      %44 = dma.hbm_to_vmem [thread:$0]  %s37, 18432, %s39, [#allocation3], 1152, 1152, 72
    $region9: #{dqn_forward.1} parent=1 // pred_fallthru
      _
    // Predicated region
    $region10: #{dqn_forward.1} parent=1 // pred_check
      _
    $region11: #{dqn_forward.1} parent=1 // pred_check_branch
      %46 = sbr.rel (0) target = $region13
    $region12: #{dqn_forward.1} parent=1 // pred_region
      %48 = vsyncadd [#allocation6], 0
      %s49 = sshll.u32 %s2, 4
      %s50 = int_to_ptr.hbm [resolvable:$true] %s49
      %s51 = sshll.u32 [#allocation5], 4
      %s52 = int_to_ptr.vmem [resolvable:$true] %s51
      %57 = dma.hbm_to_vmem [thread:$0]  %s50, 9216, %s52, [#allocation6], 64, 64, 4
    $region13: #{dqn_forward.1} parent=1 // pred_fallthru
      _
    // Predicated region
    $region14: #{dqn_forward.1} parent=1 // pred_check
      _
    $region15: #{dqn_forward.1} parent=1 // pred_check_branch
      %59 = sbr.rel (0) target = $region17
    $region16: #{dqn_forward.1} parent=1 // pred_region
      _
    $region17: #{dqn_forward.1} parent=1 // pred_fallthru
      _
    // Predicated region
    $region18: #{dqn_forward.1} parent=1 // pred_check
      _
    $region19: #{dqn_forward.1} parent=1 // pred_check_branch
      %61 = sbr.rel (0) target = $region21
    $region20: #{dqn_forward.1} parent=1 // pred_region
      _
    $region21: #{dqn_forward.1} parent=1 // pred_fallthru
      _
    // Predicated region
    $region22: #{dqn_forward.1} parent=1 // pred_check
      _
    $region23: #{dqn_forward.1} parent=1 // pred_check_branch
      %63 = sbr.rel (0) target = $region25
    $region24: #{dqn_forward.1} parent=1 // pred_region
      _
    $region25: #{dqn_forward.1} parent=1 // pred_fallthru
      _
    // Predicated region
    $region26: #{dqn_forward.1} parent=1 // pred_check
      _
    $region27: #{dqn_forward.1} parent=1 // pred_check_branch
      %65 = sbr.rel (0) target = $region29
    $region28: #{dqn_forward.1} parent=1 // pred_region
      _
    $region29: #{dqn_forward.1} parent=1 // pred_fallthru
      _
    // Predicated region
    $region30: #{dqn_forward.1} parent=1 // pred_check
      _
    $region31: #{dqn_forward.1} parent=1 // pred_check_branch
      %67 = sbr.rel (0) target = $region33
    $region32: #{dqn_forward.1} parent=1 // pred_region
      %69 = vsyncadd [#allocation6], 0
      %s70 = sshll.u32 %s7, 4
      %s71 = int_to_ptr.hbm [resolvable:$true] %s70
      %s72 = sshll.u32 [#allocation7], 4
      %s73 = int_to_ptr.vmem [resolvable:$true] %s72
      %78 = dma.hbm_to_vmem [thread:$0]  %s71, 9216, %s73, [#allocation6], 64, 64, 4
    $region33: #{dqn_forward.1} parent=1 // pred_fallthru
      _
    // Predicated region
    $region34: #{dqn_forward.1} parent=1 // pred_check
      _
    $region35: #{dqn_forward.1} parent=1 // pred_check_branch
      %80 = sbr.rel (0) target = $region37
    $region36: #{dqn_forward.1} parent=1 // pred_region
      _
    $region37: #{dqn_forward.1} parent=1 // pred_fallthru
      _
    // Predicated region
    $region38: #{dqn_forward.1} parent=1 // pred_check
      _
    $region39: #{dqn_forward.1} parent=1 // pred_check_branch
      %82 = sbr.rel (0) target = $region41
    $region40: #{dqn_forward.1} parent=1 // pred_region
      _
    $region41: #{dqn_forward.1} parent=1 // pred_fallthru
      _
    // Predicated region
    $region42: #{dqn_forward.1} parent=1 // pred_check
      _
    $region43: #{dqn_forward.1} parent=1 // pred_check_branch
      %84 = sbr.rel (0) target = $region45
    $region44: #{dqn_forward.1} parent=1 // pred_region
      _
    $region45: #{dqn_forward.1} parent=1 // pred_fallthru
      _
    // Predicated region
    $region46: #{dqn_forward.1} parent=1 // pred_check
      _
    $region47: #{dqn_forward.1} parent=1 // pred_check_branch
      %86 = sbr.rel (0) target = $region49
    $region48: #{dqn_forward.1} parent=1 // pred_region
      _
    $region49: #{dqn_forward.1} parent=1 // pred_fallthru
      _
    // Predicated region
    $region50: #{dqn_forward.1} parent=1 // pred_check
      _
    $region51: #{dqn_forward.1} parent=1 // pred_check_branch
      %88 = sbr.rel (0) target = $region53
    $region52: #{dqn_forward.1} parent=1 // pred_region
      %90 = vsyncadd [#allocation9], 0
      %s91 = sshll.u32 %s12, 4
      %s92 = int_to_ptr.hbm [resolvable:$true] %s91
      %s93 = sshll.u32 [#allocation8], 4
      %s94 = int_to_ptr.vmem [resolvable:$true] %s93
      %99 = dma.hbm_to_vmem [thread:$0]  %s92, 9216, %s94, [#allocation9], 64, 64, 4
    $region53: #{dqn_forward.1} parent=1 // pred_fallthru
      _
    // Predicated region
    $region54: #{dqn_forward.1} parent=1 // pred_check
      _
    $region55: #{dqn_forward.1} parent=1 // pred_check_branch
      %101 = sbr.rel (0) target = $region57
    $region56: #{dqn_forward.1} parent=1 // pred_region
      _
    $region57: #{dqn_forward.1} parent=1 // pred_fallthru
      _
    // Predicated region
    $region58: #{dqn_forward.1} parent=1 // pred_check
      _
    $region59: #{dqn_forward.1} parent=1 // pred_check_branch
      %103 = sbr.rel (0) target = $region61
    $region60: #{dqn_forward.1} parent=1 // pred_region
      _
    $region61: #{dqn_forward.1} parent=1 // pred_fallthru
      _
    // Predicated region
    $region62: #{dqn_forward.1} parent=1 // pred_check
      _
    $region63: #{dqn_forward.1} parent=1 // pred_check_branch
      %105 = sbr.rel (0) target = $region65
    $region64: #{dqn_forward.1} parent=1 // pred_region
      _
    $region65: #{dqn_forward.1} parent=1 // pred_fallthru
      _
    // Predicated region
    $region66: #{dqn_forward.1} parent=1 // pred_check
      _
    $region67: #{dqn_forward.1} parent=1 // pred_check_branch
      %107 = sbr.rel (0) target = $region69
    $region68: #{dqn_forward.1} parent=1 // pred_region
      %109 = vsyncadd [#allocation9], 0
      %s110 = sshll.u32 %s16, 4
      %s111 = int_to_ptr.hbm [resolvable:$true] %s110
      %s112 = sshll.u32 [#allocation10], 4
      %s113 = int_to_ptr.vmem [resolvable:$true] %s112
      %118 = dma.hbm_to_vmem [thread:$0]  %s111, 16384, %s113, [#allocation9], 256, 256, 16
    $region69: #{dqn_forward.1} parent=1 // pred_fallthru
      _
    // Predicated region
    $region70: #{dqn_forward.1} parent=1 // pred_check
      _
    $region71: #{dqn_forward.1} parent=1 // pred_check_branch
      %120 = sbr.rel (0) target = $region73
    $region72: #{dqn_forward.1} parent=1 // pred_region
      _
    $region73: #{dqn_forward.1} parent=1 // pred_fallthru
      _
    // Predicated region
    $region74: #{dqn_forward.1} parent=1 // pred_check
      _
    $region75: #{dqn_forward.1} parent=1 // pred_check_branch
      %122 = sbr.rel (0) target = $region77
    $region76: #{dqn_forward.1} parent=1 // pred_region
      %124 = vsyncadd [#allocation12], 0
      %s125 = sshll.u32 %s18, 4
      %s126 = int_to_ptr.hbm [resolvable:$true] %s125
      %s127 = sshll.u32 [#allocation11], 4
      %s128 = int_to_ptr.vmem [resolvable:$true] %s127
      %133 = dma.hbm_to_vmem [thread:$0]  %s126, 4096, %s128, [#allocation12], 64, 64, 4
    $region77: #{dqn_forward.1} parent=1 // pred_fallthru
      _
    // Predicated region
    $region78: #{dqn_forward.1} parent=1 // pred_check
      _
    $region79: #{dqn_forward.1} parent=1 // pred_check_branch
      %135 = sbr.rel (0) target = $region81
    $region80: #{dqn_forward.1} parent=1 // pred_region
      _
    $region81: #{dqn_forward.1} parent=1 // pred_fallthru
      _
    // Predicated region
    $region82: #{dqn_forward.1} parent=1 // pred_check
      _
    $region83: #{dqn_forward.1} parent=1 // pred_check_branch
      %137 = sbr.rel (0) target = $region85
    $region84: #{dqn_forward.1} parent=1 // pred_region
      %139 = dma.done [#allocation3], 18432
    $region85: #{dqn_forward.1} parent=1 // pred_fallthru
      _
    // Predicated region
    $region86: #{dqn_forward.1} parent=1 // pred_check
      _
    $region87: #{dqn_forward.1} parent=1 // pred_check_branch
      %141 = sbr.rel (0) target = $region89
    $region88: #{dqn_forward.1} parent=1 // pred_region
      %143 = dma.done [#allocation6], 9216
    $region89: #{dqn_forward.1} parent=1 // pred_fallthru
      _
    // Predicated region
    $region90: #{dqn_forward.1} parent=1 // pred_check
      _
    $region91: #{dqn_forward.1} parent=1 // pred_check_branch
      %145 = sbr.rel (0) target = $region93
    $region92: #{dqn_forward.1} parent=1 // pred_region
      %147 = dma.done [#allocation6], 9216
    $region93: #{dqn_forward.1} parent=1 // pred_fallthru
      _
    // Predicated region
    $region94: #{dqn_forward.1} parent=1 // pred_check
      _
    $region95: #{dqn_forward.1} parent=1 // pred_check_branch
      %149 = sbr.rel (0) target = $region97
    $region96: #{dqn_forward.1} parent=1 // pred_region
      %151 = dma.done [#allocation9], 9216
    $region97: #{dqn_forward.1} parent=1 // pred_fallthru
      _
    // Predicated region
    $region98: #{dqn_forward.1} parent=1 // pred_check
      _
    $region99: #{dqn_forward.1} parent=1 // pred_check_branch
      %153 = sbr.rel (0) target = $region101
    $region100: #{dqn_forward.1} parent=1 // pred_region
      %155 = dma.done [#allocation9], 16384
    $region101: #{dqn_forward.1} parent=1 // pred_fallthru
      _
    // Predicated region
    $region102: #{dqn_forward.1} parent=1 // pred_check
      _
    $region103: #{dqn_forward.1} parent=1 // pred_check_branch
      %157 = sbr.rel (0) target = $region105
    $region104: #{dqn_forward.1} parent=1 // pred_region
      %159 = dma.done [#allocation12], 4096
    $region105: #{dqn_forward.1} parent=1 // pred_fallthru
      _
    %v161 = vld [vmem:[%s0] sm:$0xff]
    %v162 = vld [vmem:[%s0 + $0x8] sm:$0xff]
    %v163 = vld [vmem:[%s0 + $0x10] sm:$0xff]
    %v164 = vld [vmem:[%s0 + $0x18] sm:$0xff]
    %v165 = vld [vmem:[%s0 + $0x20] sm:$0xff]
    %v166 = vld [vmem:[%s0 + $0x28] sm:$0xff]
    %v167 = vld [vmem:[%s0 + $0x30] sm:$0xff]
    %v168 = vld [vmem:[%s0 + $0x38] sm:$0xff]
    %v169 = vld [vmem:[%s0 + $0x40] sm:$0xff]
    %v170 = vld [vmem:[%s0 + $0x48] sm:$0xff]
    %v171 = vld [vmem:[%s0 + $0x50] sm:$0xff]
    %v172 = vld [vmem:[%s0 + $0x58] sm:$0xff]
    %v173 = vld [vmem:[%s0 + $0x60] sm:$0xff]
    %v174 = vld [vmem:[%s0 + $0x68] sm:$0xff]
    %v175 = vld [vmem:[%s0 + $0x70] sm:$0xff]
    %v176 = vld [vmem:[%s0 + $0x78] sm:$0xff]
    %v177 = vrot.slane %v161, 7
    %v178 = vrot.slane %v162, 7
    %v179 = vrot.slane %v163, 7
    %v180 = vrot.slane %v164, 7
    %v181 = vrot.slane %v165, 7
    %v182 = vrot.slane %v166, 7
    %v183 = vrot.slane %v167, 7
    %v184 = vrot.slane %v168, 7
    %v185 = vrot.slane %v169, 7
    %v186 = vrot.slane %v170, 7
    %v187 = vrot.slane %v171, 7
    %v188 = vrot.slane %v172, 7
    %v189 = vrot.slane %v173, 7
    %v190 = vrot.slane %v174, 7
    %v191 = vrot.slane %v175, 7
    %v192 = vrot.slane %v176, 7
    %v193 = vlaneseq
    %v194 = vshrl.u32 %v193, 7
    %vm195 = vcmp.lt.s32.totalorder %v194, 1
    %v196 = vsel %vm195, %v191, %v192
    %v197 = vsel %vm195, %v190, %v191
    %v198 = vsel %vm195, %v189, %v190
    %v199 = vsel %vm195, %v188, %v189
    %v200 = vsel %vm195, %v187, %v188
    %v201 = vsel %vm195, %v186, %v187
    %v202 = vsel %vm195, %v185, %v186
    %v203 = vsel %vm195, %v184, %v185
    %v204 = vsel %vm195, %v183, %v184
    %v205 = vsel %vm195, %v182, %v183
    %v206 = vsel %vm195, %v181, %v182
    %v207 = vsel %vm195, %v180, %v181
    %v208 = vsel %vm195, %v179, %v180
    %v209 = vsel %vm195, %v178, %v179
    %v210 = vsel %vm195, %v177, %v178
    %v211 = vsel %vm195, %v192, %v177
    %v212 = vrot.slane %v161, 1
    %v213 = vrot.slane %v162, 1
    %v214 = vrot.slane %v163, 1
    %v215 = vrot.slane %v164, 1
    %v216 = vrot.slane %v165, 1
    %v217 = vrot.slane %v166, 1
    %v218 = vrot.slane %v167, 1
    %v219 = vrot.slane %v168, 1
    %v220 = vrot.slane %v169, 1
    %v221 = vrot.slane %v170, 1
    %v222 = vrot.slane %v171, 1
    %v223 = vrot.slane %v172, 1
    %v224 = vrot.slane %v173, 1
    %v225 = vrot.slane %v174, 1
    %v226 = vrot.slane %v175, 1
    %v227 = vrot.slane %v176, 1
    %vm228 = vcmp.lt.s32.totalorder %v194, 7
    %v229 = vsel %vm228, %v226, %v227
    %v230 = vsel %vm228, %v225, %v226
    %v231 = vsel %vm228, %v224, %v225
    %v232 = vsel %vm228, %v223, %v224
    %v233 = vsel %vm228, %v222, %v223
    %v234 = vsel %vm228, %v221, %v222
    %v235 = vsel %vm228, %v220, %v221
    %v236 = vsel %vm228, %v219, %v220
    %v237 = vsel %vm228, %v218, %v219
    %v238 = vsel %vm228, %v217, %v218
    %v239 = vsel %vm228, %v216, %v217
    %v240 = vsel %vm228, %v215, %v216
    %v241 = vsel %vm228, %v214, %v215
    %v242 = vsel %vm228, %v213, %v214
    %v243 = vsel %vm228, %v212, %v213
    %v244 = vsel %vm228, %v227, %v212
    %v245 = vld [vmem:[#allocation2] sm:$0xff]
    %v246 = vld [vmem:[#allocation2 + $0x8] sm:$0xff]
    %v247 = vld [vmem:[#allocation2 + $0x10] sm:$0xff]
    %v248 = vld [vmem:[#allocation2 + $0x18] sm:$0xff]
    %v249 = vld [vmem:[#allocation2 + $0x20] sm:$0xff]
    %v250 = vld [vmem:[#allocation2 + $0x28] sm:$0xff]
    %v251 = vld [vmem:[#allocation2 + $0x30] sm:$0xff]
    %v252 = vld [vmem:[#allocation2 + $0x38] sm:$0xff]
    %v253 = vld [vmem:[#allocation2 + $0x40] sm:$0xff]
    %v254 = vld [vmem:[#allocation2 + $0x48] sm:$0xff]
    %v255 = vld [vmem:[#allocation2 + $0x50] sm:$0xff]
    %v256 = vld [vmem:[#allocation2 + $0x58] sm:$0xff]
    %v257 = vld [vmem:[#allocation2 + $0x60] sm:$0xff]
    %v258 = vld [vmem:[#allocation2 + $0x68] sm:$0xff]
    %v259 = vld [vmem:[#allocation2 + $0x70] sm:$0xff]
    %v260 = vld [vmem:[#allocation2 + $0x78] sm:$0xff]
    %v261 = vld [vmem:[#allocation2 + $0x80] sm:$0xff]
    %v262 = vld [vmem:[#allocation2 + $0x88] sm:$0xff]
    %v263 = vld [vmem:[#allocation2 + $0x90] sm:$0xff]
    %v264 = vld [vmem:[#allocation2 + $0x98] sm:$0xff]
    %v265 = vld [vmem:[#allocation2 + $0xa0] sm:$0xff]
    %v266 = vld [vmem:[#allocation2 + $0xa8] sm:$0xff]
    %v267 = vld [vmem:[#allocation2 + $0xb0] sm:$0xff]
    %v268 = vld [vmem:[#allocation2 + $0xb8] sm:$0xff]
    %v269 = vld [vmem:[#allocation2 + $0xc0] sm:$0xff]
    %v270 = vld [vmem:[#allocation2 + $0xc8] sm:$0xff]
    %v271 = vld [vmem:[#allocation2 + $0xd0] sm:$0xff]
    %v272 = vld [vmem:[#allocation2 + $0xd8] sm:$0xff]
    %v273 = vld [vmem:[#allocation2 + $0xe0] sm:$0xff]
    %v274 = vld [vmem:[#allocation2 + $0xe8] sm:$0xff]
    %v275 = vld [vmem:[#allocation2 + $0xf0] sm:$0xff]
    %v276 = vld [vmem:[#allocation2 + $0xf8] sm:$0xff]
    %v277 = vld [vmem:[#allocation2 + $0x100] sm:$0xff]
    %v278 = vld [vmem:[#allocation2 + $0x108] sm:$0xff]
    %v279 = vld [vmem:[#allocation2 + $0x110] sm:$0xff]
    %v280 = vld [vmem:[#allocation2 + $0x118] sm:$0xff]
    %v281 = vld [vmem:[#allocation2 + $0x120] sm:$0xff]
    %v282 = vld [vmem:[#allocation2 + $0x128] sm:$0xff]
    %v283 = vld [vmem:[#allocation2 + $0x130] sm:$0xff]
    %v284 = vld [vmem:[#allocation2 + $0x138] sm:$0xff]
    %v285 = vld [vmem:[#allocation2 + $0x140] sm:$0xff]
    %v286 = vld [vmem:[#allocation2 + $0x148] sm:$0xff]
    %v287 = vld [vmem:[#allocation2 + $0x150] sm:$0xff]
    %v288 = vld [vmem:[#allocation2 + $0x158] sm:$0xff]
    %v289 = vld [vmem:[#allocation2 + $0x160] sm:$0xff]
    %v290 = vld [vmem:[#allocation2 + $0x168] sm:$0xff]
    %v291 = vld [vmem:[#allocation2 + $0x170] sm:$0xff]
    %v292 = vld [vmem:[#allocation2 + $0x178] sm:$0xff]
    %v293 = vld [vmem:[#allocation2 + $0x180] sm:$0xff]
    %v294 = vld [vmem:[#allocation2 + $0x188] sm:$0xff]
    %v295 = vld [vmem:[#allocation2 + $0x190] sm:$0xff]
    %v296 = vld [vmem:[#allocation2 + $0x198] sm:$0xff]
    %v297 = vld [vmem:[#allocation2 + $0x1a0] sm:$0xff]
    %v298 = vld [vmem:[#allocation2 + $0x1a8] sm:$0xff]
    %v299 = vld [vmem:[#allocation2 + $0x1b0] sm:$0xff]
    %v300 = vld [vmem:[#allocation2 + $0x1b8] sm:$0xff]
    %v301 = vld [vmem:[#allocation2 + $0x1c0] sm:$0xff]
    %v302 = vld [vmem:[#allocation2 + $0x1c8] sm:$0xff]
    %v303 = vld [vmem:[#allocation2 + $0x1d0] sm:$0xff]
    %v304 = vld [vmem:[#allocation2 + $0x1d8] sm:$0xff]
    %v305 = vld [vmem:[#allocation2 + $0x1e0] sm:$0xff]
    %v306 = vld [vmem:[#allocation2 + $0x1e8] sm:$0xff]
    %v307 = vld [vmem:[#allocation2 + $0x1f0] sm:$0xff]
    %v308 = vld [vmem:[#allocation2 + $0x1f8] sm:$0xff]
    %v309 = vld [vmem:[#allocation2 + $0x200] sm:$0xff]
    %v310 = vld [vmem:[#allocation2 + $0x208] sm:$0xff]
    %v311 = vld [vmem:[#allocation2 + $0x210] sm:$0xff]
    %v312 = vld [vmem:[#allocation2 + $0x218] sm:$0xff]
    %v313 = vld [vmem:[#allocation2 + $0x220] sm:$0xff]
    %v314 = vld [vmem:[#allocation2 + $0x228] sm:$0xff]
    %v315 = vld [vmem:[#allocation2 + $0x230] sm:$0xff]
    %v316 = vld [vmem:[#allocation2 + $0x238] sm:$0xff]
    %v317 = vld [vmem:[#allocation2 + $0x240] sm:$0xff]
    %v318 = vld [vmem:[#allocation2 + $0x248] sm:$0xff]
    %v319 = vld [vmem:[#allocation2 + $0x250] sm:$0xff]
    %v320 = vld [vmem:[#allocation2 + $0x258] sm:$0xff]
    %v321 = vld [vmem:[#allocation2 + $0x260] sm:$0xff]
    %v322 = vld [vmem:[#allocation2 + $0x268] sm:$0xff]
    %v323 = vld [vmem:[#allocation2 + $0x270] sm:$0xff]
    %v324 = vld [vmem:[#allocation2 + $0x278] sm:$0xff]
    %v325 = vld [vmem:[#allocation2 + $0x280] sm:$0xff]
    %v326 = vld [vmem:[#allocation2 + $0x288] sm:$0xff]
    %v327 = vld [vmem:[#allocation2 + $0x290] sm:$0xff]
    %v328 = vld [vmem:[#allocation2 + $0x298] sm:$0xff]
    %v329 = vld [vmem:[#allocation2 + $0x2a0] sm:$0xff]
    %v330 = vld [vmem:[#allocation2 + $0x2a8] sm:$0xff]
    %v331 = vld [vmem:[#allocation2 + $0x2b0] sm:$0xff]
    %v332 = vld [vmem:[#allocation2 + $0x2b8] sm:$0xff]
    %v333 = vld [vmem:[#allocation2 + $0x2c0] sm:$0xff]
    %v334 = vld [vmem:[#allocation2 + $0x2c8] sm:$0xff]
    %v335 = vld [vmem:[#allocation2 + $0x2d0] sm:$0xff]
    %v336 = vld [vmem:[#allocation2 + $0x2d8] sm:$0xff]
    %v337 = vld [vmem:[#allocation2 + $0x2e0] sm:$0xff]
    %v338 = vld [vmem:[#allocation2 + $0x2e8] sm:$0xff]
    %v339 = vld [vmem:[#allocation2 + $0x2f0] sm:$0xff]
    %v340 = vld [vmem:[#allocation2 + $0x2f8] sm:$0xff]
    %v341 = vld [vmem:[#allocation2 + $0x300] sm:$0xff]
    %v342 = vld [vmem:[#allocation2 + $0x308] sm:$0xff]
    %v343 = vld [vmem:[#allocation2 + $0x310] sm:$0xff]
    %v344 = vld [vmem:[#allocation2 + $0x318] sm:$0xff]
    %v345 = vld [vmem:[#allocation2 + $0x320] sm:$0xff]
    %v346 = vld [vmem:[#allocation2 + $0x328] sm:$0xff]
    %v347 = vld [vmem:[#allocation2 + $0x330] sm:$0xff]
    %v348 = vld [vmem:[#allocation2 + $0x338] sm:$0xff]
    %v349 = vld [vmem:[#allocation2 + $0x340] sm:$0xff]
    %v350 = vld [vmem:[#allocation2 + $0x348] sm:$0xff]
    %v351 = vld [vmem:[#allocation2 + $0x350] sm:$0xff]
    %v352 = vld [vmem:[#allocation2 + $0x358] sm:$0xff]
    %v353 = vld [vmem:[#allocation2 + $0x360] sm:$0xff]
    %v354 = vld [vmem:[#allocation2 + $0x368] sm:$0xff]
    %v355 = vld [vmem:[#allocation2 + $0x370] sm:$0xff]
    %v356 = vld [vmem:[#allocation2 + $0x378] sm:$0xff]
    %v357 = vld [vmem:[#allocation2 + $0x380] sm:$0xff]
    %v358 = vld [vmem:[#allocation2 + $0x388] sm:$0xff]
    %v359 = vld [vmem:[#allocation2 + $0x390] sm:$0xff]
    %v360 = vld [vmem:[#allocation2 + $0x398] sm:$0xff]
    %v361 = vld [vmem:[#allocation2 + $0x3a0] sm:$0xff]
    %v362 = vld [vmem:[#allocation2 + $0x3a8] sm:$0xff]
    %v363 = vld [vmem:[#allocation2 + $0x3b0] sm:$0xff]
    %v364 = vld [vmem:[#allocation2 + $0x3b8] sm:$0xff]
    %v365 = vld [vmem:[#allocation2 + $0x3c0] sm:$0xff]
    %v366 = vld [vmem:[#allocation2 + $0x3c8] sm:$0xff]
    %v367 = vld [vmem:[#allocation2 + $0x3d0] sm:$0xff]
    %v368 = vld [vmem:[#allocation2 + $0x3d8] sm:$0xff]
    %v369 = vld [vmem:[#allocation2 + $0x3e0] sm:$0xff]
    %v370 = vld [vmem:[#allocation2 + $0x3e8] sm:$0xff]
    %v371 = vld [vmem:[#allocation2 + $0x3f0] sm:$0xff]
    %v372 = vld [vmem:[#allocation2 + $0x3f8] sm:$0xff]
    %v373 = vld [vmem:[#allocation2 + $0x400] sm:$0xff]
    %v374 = vld [vmem:[#allocation2 + $0x408] sm:$0xff]
    %v375 = vld [vmem:[#allocation2 + $0x410] sm:$0xff]
    %v376 = vld [vmem:[#allocation2 + $0x418] sm:$0xff]
    %v377 = vld [vmem:[#allocation2 + $0x420] sm:$0xff]
    %v378 = vld [vmem:[#allocation2 + $0x428] sm:$0xff]
    %v379 = vld [vmem:[#allocation2 + $0x430] sm:$0xff]
    %v380 = vld [vmem:[#allocation2 + $0x438] sm:$0xff]
    %v381 = vld [vmem:[#allocation2 + $0x440] sm:$0xff]
    %v382 = vld [vmem:[#allocation2 + $0x448] sm:$0xff]
    %v383 = vld [vmem:[#allocation2 + $0x450] sm:$0xff]
    %v384 = vld [vmem:[#allocation2 + $0x458] sm:$0xff]
    %v385 = vld [vmem:[#allocation2 + $0x460] sm:$0xff]
    %v386 = vld [vmem:[#allocation2 + $0x468] sm:$0xff]
    %v387 = vld [vmem:[#allocation2 + $0x470] sm:$0xff]
    %v388 = vld [vmem:[#allocation2 + $0x478] sm:$0xff]
    %v389 = vmul.f32 %v196, %v245
    %v390 = vmul.f32 %v176, %v246
    %v391 = vmul.f32 %v244, %v247
    %v392 = vmul.f32 %v211, %v248
    %v393 = vmul.f32 %v161, %v249
    %v394 = vmul.f32 %v243, %v250
    %v395 = vmul.f32 %v210, %v251
    %v396 = vmul.f32 %v162, %v252
    %v397 = vmul.f32 %v242, %v253
    %v398 = vmul.f32 %v211, %v254
    %v399 = vmul.f32 %v161, %v255
    %v400 = vmul.f32 %v243, %v256
    %v401 = vmul.f32 %v210, %v257
    %v402 = vmul.f32 %v162, %v258
    %v403 = vmul.f32 %v242, %v259
    %v404 = vmul.f32 %v209, %v260
    %v405 = vmul.f32 %v163, %v261
    %v406 = vmul.f32 %v241, %v262
    %v407 = vmul.f32 %v210, %v263
    %v408 = vmul.f32 %v162, %v264
    %v409 = vmul.f32 %v242, %v265
    %v410 = vmul.f32 %v209, %v266
    %v411 = vmul.f32 %v163, %v267
    %v412 = vmul.f32 %v241, %v268
    %v413 = vmul.f32 %v208, %v269
    %v414 = vmul.f32 %v164, %v270
    %v415 = vmul.f32 %v240, %v271
    %v416 = vmul.f32 %v209, %v272
    %v417 = vmul.f32 %v163, %v273
    %v418 = vmul.f32 %v241, %v274
    %v419 = vmul.f32 %v208, %v275
    %v420 = vmul.f32 %v164, %v276
    %v421 = vmul.f32 %v240, %v277
    %v422 = vmul.f32 %v207, %v278
    %v423 = vmul.f32 %v165, %v279
    %v424 = vmul.f32 %v239, %v280
    %v425 = vmul.f32 %v208, %v281
    %v426 = vmul.f32 %v164, %v282
    %v427 = vmul.f32 %v240, %v283
    %v428 = vmul.f32 %v207, %v284
    %v429 = vmul.f32 %v165, %v285
    %v430 = vmul.f32 %v239, %v286
    %v431 = vmul.f32 %v206, %v287
    %v432 = vmul.f32 %v166, %v288
    %v433 = vmul.f32 %v238, %v289
    %v434 = vmul.f32 %v207, %v290
    %v435 = vmul.f32 %v165, %v291
    %v436 = vmul.f32 %v239, %v292
    %v437 = vmul.f32 %v206, %v293
    %v438 = vmul.f32 %v166, %v294
    %v439 = vmul.f32 %v238, %v295
    %v440 = vmul.f32 %v205, %v296
    %v441 = vmul.f32 %v167, %v297
    %v442 = vmul.f32 %v237, %v298
    %v443 = vmul.f32 %v206, %v299
    %v444 = vmul.f32 %v166, %v300
    %v445 = vmul.f32 %v238, %v301
    %v446 = vmul.f32 %v205, %v302
    %v447 = vmul.f32 %v167, %v303
    %v448 = vmul.f32 %v237, %v304
    %v449 = vmul.f32 %v204, %v305
    %v450 = vmul.f32 %v168, %v306
    %v451 = vmul.f32 %v236, %v307
    %v452 = vmul.f32 %v205, %v308
    %v453 = vmul.f32 %v167, %v309
    %v454 = vmul.f32 %v237, %v310
    %v455 = vmul.f32 %v204, %v311
    %v456 = vmul.f32 %v168, %v312
    %v457 = vmul.f32 %v236, %v313
    %v458 = vmul.f32 %v203, %v314
    %v459 = vmul.f32 %v169, %v315
    %v460 = vmul.f32 %v235, %v316
    %v461 = vmul.f32 %v204, %v317
    %v462 = vmul.f32 %v168, %v318
    %v463 = vmul.f32 %v236, %v319
    %v464 = vmul.f32 %v203, %v320
    %v465 = vmul.f32 %v169, %v321
    %v466 = vmul.f32 %v235, %v322
    %v467 = vmul.f32 %v202, %v323
    %v468 = vmul.f32 %v170, %v324
    %v469 = vmul.f32 %v234, %v325
    %v470 = vmul.f32 %v203, %v326
    %v471 = vmul.f32 %v169, %v327
    %v472 = vmul.f32 %v235, %v328
    %v473 = vmul.f32 %v202, %v329
    %v474 = vmul.f32 %v170, %v330
    %v475 = vmul.f32 %v234, %v331
    %v476 = vmul.f32 %v201, %v332
    %v477 = vmul.f32 %v171, %v333
    %v478 = vmul.f32 %v233, %v334
    %v479 = vmul.f32 %v202, %v335
    %v480 = vmul.f32 %v170, %v336
    %v481 = vmul.f32 %v234, %v337
    %v482 = vmul.f32 %v201, %v338
    %v483 = vmul.f32 %v171, %v339
    %v484 = vmul.f32 %v233, %v340
    %v485 = vmul.f32 %v200, %v341
    %v486 = vmul.f32 %v172, %v342
    %v487 = vmul.f32 %v232, %v343
    %v488 = vmul.f32 %v201, %v344
    %v489 = vmul.f32 %v171, %v345
    %v490 = vmul.f32 %v233, %v346
    %v491 = vmul.f32 %v200, %v347
    %v492 = vmul.f32 %v172, %v348
    %v493 = vmul.f32 %v232, %v349
    %v494 = vmul.f32 %v199, %v350
    %v495 = vmul.f32 %v173, %v351
    %v496 = vmul.f32 %v231, %v352
    %v497 = vmul.f32 %v200, %v353
    %v498 = vmul.f32 %v172, %v354
    %v499 = vmul.f32 %v232, %v355
    %v500 = vmul.f32 %v199, %v356
    %v501 = vmul.f32 %v173, %v357
    %v502 = vmul.f32 %v231, %v358
    %v503 = vmul.f32 %v198, %v359
    %v504 = vmul.f32 %v174, %v360
    %v505 = vmul.f32 %v230, %v361
    %v506 = vmul.f32 %v199, %v362
    %v507 = vmul.f32 %v173, %v363
    %v508 = vmul.f32 %v231, %v364
    %v509 = vmul.f32 %v198, %v365
    %v510 = vmul.f32 %v174, %v366
    %v511 = vmul.f32 %v230, %v367
    %v512 = vmul.f32 %v197, %v368
    %v513 = vmul.f32 %v175, %v369
    %v514 = vmul.f32 %v229, %v370
    %v515 = vmul.f32 %v198, %v371
    %v516 = vmul.f32 %v174, %v372
    %v517 = vmul.f32 %v230, %v373
    %v518 = vmul.f32 %v197, %v374
    %v519 = vmul.f32 %v175, %v375
    %v520 = vmul.f32 %v229, %v376
    %v521 = vmul.f32 %v196, %v377
    %v522 = vmul.f32 %v176, %v378
    %v523 = vmul.f32 %v244, %v379
    %v524 = vmul.f32 %v197, %v380
    %v525 = vmul.f32 %v175, %v381
    %v526 = vmul.f32 %v229, %v382
    %v527 = vmul.f32 %v196, %v383
    %v528 = vmul.f32 %v176, %v384
    %v529 = vmul.f32 %v244, %v385
    %v530 = vmul.f32 %v211, %v386
    %v531 = vmul.f32 %v161, %v387
    %v532 = vmul.f32 %v243, %v388
    %v533 = vpack.c.bf16 %v398, %v389
    %v534 = vpack.c.bf16 %v399, %v390
    %v535 = vpack.c.bf16 %v400, %v391
    %v536 = vpack.c.bf16 %v401, %v392
    %v537 = vpack.c.bf16 %v402, %v393
    %v538 = vpack.c.bf16 %v403, %v394
    %v539 = vpack.c.bf16 %v404, %v395
    %v540 = vpack.c.bf16 %v405, %v396
    %v541 = vpack.c.bf16 %v406, %v397
    %v542 = vpack.c.bf16 %v416, %v407
    %v543 = vpack.c.bf16 %v417, %v408
    %v544 = vpack.c.bf16 %v418, %v409
    %v545 = vpack.c.bf16 %v419, %v410
    %v546 = vpack.c.bf16 %v420, %v411
    %v547 = vpack.c.bf16 %v421, %v412
    %v548 = vpack.c.bf16 %v422, %v413
    %v549 = vpack.c.bf16 %v423, %v414
    %v550 = vpack.c.bf16 %v424, %v415
    %v551 = vpack.c.bf16 %v434, %v425
    %v552 = vpack.c.bf16 %v435, %v426
    %v553 = vpack.c.bf16 %v436, %v427
    %v554 = vpack.c.bf16 %v437, %v428
    %v555 = vpack.c.bf16 %v438, %v429
    %v556 = vpack.c.bf16 %v439, %v430
    %v557 = vpack.c.bf16 %v440, %v431
    %v558 = vpack.c.bf16 %v441, %v432
    %v559 = vpack.c.bf16 %v442, %v433
    %v560 = vpack.c.bf16 %v452, %v443
    %v561 = vpack.c.bf16 %v453, %v444
    %v562 = vpack.c.bf16 %v454, %v445
    %v563 = vpack.c.bf16 %v455, %v446
    %v564 = vpack.c.bf16 %v456, %v447
    %v565 = vpack.c.bf16 %v457, %v448
    %v566 = vpack.c.bf16 %v458, %v449
    %v567 = vpack.c.bf16 %v459, %v450
    %v568 = vpack.c.bf16 %v460, %v451
    %v569 = vpack.c.bf16 %v470, %v461
    %v570 = vpack.c.bf16 %v471, %v462
    %v571 = vpack.c.bf16 %v472, %v463
    %v572 = vpack.c.bf16 %v473, %v464
    %v573 = vpack.c.bf16 %v474, %v465
    %v574 = vpack.c.bf16 %v475, %v466
    %v575 = vpack.c.bf16 %v476, %v467
    %v576 = vpack.c.bf16 %v477, %v468
    %v577 = vpack.c.bf16 %v478, %v469
    %v578 = vpack.c.bf16 %v488, %v479
    %v579 = vpack.c.bf16 %v489, %v480
    %v580 = vpack.c.bf16 %v490, %v481
    %v581 = vpack.c.bf16 %v491, %v482
    %v582 = vpack.c.bf16 %v492, %v483
    %v583 = vpack.c.bf16 %v493, %v484
    %v584 = vpack.c.bf16 %v494, %v485
    %v585 = vpack.c.bf16 %v495, %v486
    %v586 = vpack.c.bf16 %v496, %v487
    %v587 = vpack.c.bf16 %v506, %v497
    %v588 = vpack.c.bf16 %v507, %v498
    %v589 = vpack.c.bf16 %v508, %v499
    %v590 = vpack.c.bf16 %v509, %v500
    %v591 = vpack.c.bf16 %v510, %v501
    %v592 = vpack.c.bf16 %v511, %v502
    %v593 = vpack.c.bf16 %v512, %v503
    %v594 = vpack.c.bf16 %v513, %v504
    %v595 = vpack.c.bf16 %v514, %v505
    %v596 = vpack.c.bf16 %v524, %v515
    %v597 = vpack.c.bf16 %v525, %v516
    %v598 = vpack.c.bf16 %v526, %v517
    %v599 = vpack.c.bf16 %v527, %v518
    %v600 = vpack.c.bf16 %v528, %v519
    %v601 = vpack.c.bf16 %v529, %v520
    %v602 = vpack.c.bf16 %v530, %v521
    %v603 = vpack.c.bf16 %v531, %v522
    %v604 = vpack.c.bf16 %v532, %v523
    %v605 = vld [vmem:[#allocation5] sm:$0xf]
    %v606 = vld [vmem:[#allocation5 + $0x4] sm:$0xf]
    %v607 = vld [vmem:[#allocation5 + $0x8] sm:$0xf]
    %v608 = vld [vmem:[#allocation5 + $0xc] sm:$0xf]
    %v609 = vld [vmem:[#allocation5 + $0x10] sm:$0xf]
    %v610 = vld [vmem:[#allocation5 + $0x14] sm:$0xf]
    %v611 = vld [vmem:[#allocation5 + $0x18] sm:$0xf]
    %v612 = vld [vmem:[#allocation5 + $0x1c] sm:$0xf]
    %v613 = vld [vmem:[#allocation5 + $0x20] sm:$0xf]
    %v614 = vld [vmem:[#allocation5 + $0x24] sm:$0xf]
    %v615 = vld [vmem:[#allocation5 + $0x28] sm:$0xf]
    %v616 = vld [vmem:[#allocation5 + $0x2c] sm:$0xf]
    %v617 = vld [vmem:[#allocation5 + $0x30] sm:$0xf]
    %v618 = vld [vmem:[#allocation5 + $0x34] sm:$0xf]
    %v619 = vld [vmem:[#allocation5 + $0x38] sm:$0xf]
    %v620 = vld [vmem:[#allocation5 + $0x3c] sm:$0xf]
    %v621 = vld [vmem:[#allocation5 + $0x40] sm:$0xf]
    %v622 = vld [vmem:[#allocation5 + $0x44] sm:$0xf]
    %v623 = vld [vmem:[#allocation5 + $0x48] sm:$0xf]
    %v624 = vld [vmem:[#allocation5 + $0x4c] sm:$0xf]
    %v625 = vld [vmem:[#allocation5 + $0x50] sm:$0xf]
    %v626 = vld [vmem:[#allocation5 + $0x54] sm:$0xf]
    %v627 = vld [vmem:[#allocation5 + $0x58] sm:$0xf]
    %v628 = vld [vmem:[#allocation5 + $0x5c] sm:$0xf]
    %v629 = vld [vmem:[#allocation5 + $0x60] sm:$0xf]
    %v630 = vld [vmem:[#allocation5 + $0x64] sm:$0xf]
    %v631 = vld [vmem:[#allocation5 + $0x68] sm:$0xf]
    %v632 = vld [vmem:[#allocation5 + $0x6c] sm:$0xf]
    %v633 = vld [vmem:[#allocation5 + $0x70] sm:$0xf]
    %v634 = vld [vmem:[#allocation5 + $0x74] sm:$0xf]
    %v635 = vld [vmem:[#allocation5 + $0x78] sm:$0xf]
    %v636 = vld [vmem:[#allocation5 + $0x7c] sm:$0xf]
    %v637 = vld [vmem:[#allocation5 + $0x80] sm:$0xf]
    %v638 = vld [vmem:[#allocation5 + $0x84] sm:$0xf]
    %v639 = vld [vmem:[#allocation5 + $0x88] sm:$0xf]
    %v640 = vld [vmem:[#allocation5 + $0x8c] sm:$0xf]
    %v641 = vld [vmem:[#allocation5 + $0x90] sm:$0xf]
    %v642 = vld [vmem:[#allocation5 + $0x94] sm:$0xf]
    %v643 = vld [vmem:[#allocation5 + $0x98] sm:$0xf]
    %v644 = vld [vmem:[#allocation5 + $0x9c] sm:$0xf]
    %v645 = vld [vmem:[#allocation5 + $0xa0] sm:$0xf]
    %v646 = vld [vmem:[#allocation5 + $0xa4] sm:$0xf]
    %v647 = vld [vmem:[#allocation5 + $0xa8] sm:$0xf]
    %v648 = vld [vmem:[#allocation5 + $0xac] sm:$0xf]
    %v649 = vld [vmem:[#allocation5 + $0xb0] sm:$0xf]
    %v650 = vld [vmem:[#allocation5 + $0xb4] sm:$0xf]
    %v651 = vld [vmem:[#allocation5 + $0xb8] sm:$0xf]
    %v652 = vld [vmem:[#allocation5 + $0xbc] sm:$0xf]
    %v653 = vld [vmem:[#allocation5 + $0xc0] sm:$0xf]
    %v654 = vld [vmem:[#allocation5 + $0xc4] sm:$0xf]
    %v655 = vld [vmem:[#allocation5 + $0xc8] sm:$0xf]
    %v656 = vld [vmem:[#allocation5 + $0xcc] sm:$0xf]
    %v657 = vld [vmem:[#allocation5 + $0xd0] sm:$0xf]
    %v658 = vld [vmem:[#allocation5 + $0xd4] sm:$0xf]
    %v659 = vld [vmem:[#allocation5 + $0xd8] sm:$0xf]
    %v660 = vld [vmem:[#allocation5 + $0xdc] sm:$0xf]
    %v661 = vld [vmem:[#allocation5 + $0xe0] sm:$0xf]
    %v662 = vld [vmem:[#allocation5 + $0xe4] sm:$0xf]
    %v663 = vld [vmem:[#allocation5 + $0xe8] sm:$0xf]
    %v664 = vld [vmem:[#allocation5 + $0xec] sm:$0xf]
    %v665 = vld [vmem:[#allocation5 + $0xf0] sm:$0xf]
    %v666 = vld [vmem:[#allocation5 + $0xf4] sm:$0xf]
    %v667 = vld [vmem:[#allocation5 + $0xf8] sm:$0xf]
    %v668 = vld [vmem:[#allocation5 + $0xfc] sm:$0xf]
    %v669 = vld [vmem:[#allocation5 + $0x100] sm:$0xf]
    %v670 = vld [vmem:[#allocation5 + $0x104] sm:$0xf]
    %v671 = vld [vmem:[#allocation5 + $0x108] sm:$0xf]
    %v672 = vld [vmem:[#allocation5 + $0x10c] sm:$0xf]
    %v673 = vld [vmem:[#allocation5 + $0x110] sm:$0xf]
    %v674 = vld [vmem:[#allocation5 + $0x114] sm:$0xf]
    %v675 = vld [vmem:[#allocation5 + $0x118] sm:$0xf]
    %v676 = vld [vmem:[#allocation5 + $0x11c] sm:$0xf]
    %v677 = vld [vmem:[#allocation5 + $0x120] sm:$0xf]
    %v678 = vld [vmem:[#allocation5 + $0x124] sm:$0xf]
    %v679 = vld [vmem:[#allocation5 + $0x128] sm:$0xf]
    %v680 = vld [vmem:[#allocation5 + $0x12c] sm:$0xf]
    %v681 = vld [vmem:[#allocation5 + $0x130] sm:$0xf]
    %v682 = vld [vmem:[#allocation5 + $0x134] sm:$0xf]
    %v683 = vld [vmem:[#allocation5 + $0x138] sm:$0xf]
    %v684 = vld [vmem:[#allocation5 + $0x13c] sm:$0xf]
    %v685 = vld [vmem:[#allocation5 + $0x140] sm:$0xf]
    %v686 = vld [vmem:[#allocation5 + $0x144] sm:$0xf]
    %v687 = vld [vmem:[#allocation5 + $0x148] sm:$0xf]
    %v688 = vld [vmem:[#allocation5 + $0x14c] sm:$0xf]
    %v689 = vld [vmem:[#allocation5 + $0x150] sm:$0xf]
    %v690 = vld [vmem:[#allocation5 + $0x154] sm:$0xf]
    %v691 = vld [vmem:[#allocation5 + $0x158] sm:$0xf]
    %v692 = vld [vmem:[#allocation5 + $0x15c] sm:$0xf]
    %v693 = vld [vmem:[#allocation5 + $0x160] sm:$0xf]
    %v694 = vld [vmem:[#allocation5 + $0x164] sm:$0xf]
    %v695 = vld [vmem:[#allocation5 + $0x168] sm:$0xf]
    %v696 = vld [vmem:[#allocation5 + $0x16c] sm:$0xf]
    %v697 = vld [vmem:[#allocation5 + $0x170] sm:$0xf]
    %v698 = vld [vmem:[#allocation5 + $0x174] sm:$0xf]
    %v699 = vld [vmem:[#allocation5 + $0x178] sm:$0xf]
    %v700 = vld [vmem:[#allocation5 + $0x17c] sm:$0xf]
    %v701 = vld [vmem:[#allocation5 + $0x180] sm:$0xf]
    %v702 = vld [vmem:[#allocation5 + $0x184] sm:$0xf]
    %v703 = vld [vmem:[#allocation5 + $0x188] sm:$0xf]
    %v704 = vld [vmem:[#allocation5 + $0x18c] sm:$0xf]
    %v705 = vld [vmem:[#allocation5 + $0x190] sm:$0xf]
    %v706 = vld [vmem:[#allocation5 + $0x194] sm:$0xf]
    %v707 = vld [vmem:[#allocation5 + $0x198] sm:$0xf]
    %v708 = vld [vmem:[#allocation5 + $0x19c] sm:$0xf]
    %v709 = vld [vmem:[#allocation5 + $0x1a0] sm:$0xf]
    %v710 = vld [vmem:[#allocation5 + $0x1a4] sm:$0xf]
    %v711 = vld [vmem:[#allocation5 + $0x1a8] sm:$0xf]
    %v712 = vld [vmem:[#allocation5 + $0x1ac] sm:$0xf]
    %v713 = vld [vmem:[#allocation5 + $0x1b0] sm:$0xf]
    %v714 = vld [vmem:[#allocation5 + $0x1b4] sm:$0xf]
    %v715 = vld [vmem:[#allocation5 + $0x1b8] sm:$0xf]
    %v716 = vld [vmem:[#allocation5 + $0x1bc] sm:$0xf]
    %v717 = vld [vmem:[#allocation5 + $0x1c0] sm:$0xf]
    %v718 = vld [vmem:[#allocation5 + $0x1c4] sm:$0xf]
    %v719 = vld [vmem:[#allocation5 + $0x1c8] sm:$0xf]
    %v720 = vld [vmem:[#allocation5 + $0x1cc] sm:$0xf]
    %v721 = vld [vmem:[#allocation5 + $0x1d0] sm:$0xf]
    %v722 = vld [vmem:[#allocation5 + $0x1d4] sm:$0xf]
    %v723 = vld [vmem:[#allocation5 + $0x1d8] sm:$0xf]
    %v724 = vld [vmem:[#allocation5 + $0x1dc] sm:$0xf]
    %v725 = vld [vmem:[#allocation5 + $0x1e0] sm:$0xf]
    %v726 = vld [vmem:[#allocation5 + $0x1e4] sm:$0xf]
    %v727 = vld [vmem:[#allocation5 + $0x1e8] sm:$0xf]
    %v728 = vld [vmem:[#allocation5 + $0x1ec] sm:$0xf]
    %v729 = vld [vmem:[#allocation5 + $0x1f0] sm:$0xf]
    %v730 = vld [vmem:[#allocation5 + $0x1f4] sm:$0xf]
    %v731 = vld [vmem:[#allocation5 + $0x1f8] sm:$0xf]
    %v732 = vld [vmem:[#allocation5 + $0x1fc] sm:$0xf]
    %v733 = vld [vmem:[#allocation5 + $0x200] sm:$0xf]
    %v734 = vld [vmem:[#allocation5 + $0x204] sm:$0xf]
    %v735 = vld [vmem:[#allocation5 + $0x208] sm:$0xf]
    %v736 = vld [vmem:[#allocation5 + $0x20c] sm:$0xf]
    %v737 = vld [vmem:[#allocation5 + $0x210] sm:$0xf]
    %v738 = vld [vmem:[#allocation5 + $0x214] sm:$0xf]
    %v739 = vld [vmem:[#allocation5 + $0x218] sm:$0xf]
    %v740 = vld [vmem:[#allocation5 + $0x21c] sm:$0xf]
    %v741 = vld [vmem:[#allocation5 + $0x220] sm:$0xf]
    %v742 = vld [vmem:[#allocation5 + $0x224] sm:$0xf]
    %v743 = vld [vmem:[#allocation5 + $0x228] sm:$0xf]
    %v744 = vld [vmem:[#allocation5 + $0x22c] sm:$0xf]
    %v745 = vld [vmem:[#allocation5 + $0x230] sm:$0xf]
    %v746 = vld [vmem:[#allocation5 + $0x234] sm:$0xf]
    %v747 = vld [vmem:[#allocation5 + $0x238] sm:$0xf]
    %v748 = vld [vmem:[#allocation5 + $0x23c] sm:$0xf]
    %v893 = vunpack.c.l.b16 %v605
    %v894 = vunpack.c.l.b16 %v606
    %v895 = vunpack.c.l.b16 %v607
    %v896 = vunpack.c.l.b16 %v608
    %v897 = vunpack.c.l.b16 %v609
    %v898 = vunpack.c.l.b16 %v610
    %v899 = vunpack.c.l.b16 %v611
    %v900 = vunpack.c.l.b16 %v612
    %v901 = vunpack.c.l.b16 %v613
    %v902 = vunpack.c.l.b16 %v614
    %v903 = vunpack.c.l.b16 %v615
    %v904 = vunpack.c.l.b16 %v616
    %v905 = vunpack.c.l.b16 %v617
    %v906 = vunpack.c.l.b16 %v618
    %v907 = vunpack.c.l.b16 %v619
    %v908 = vunpack.c.l.b16 %v620
    %v909 = vunpack.c.l.b16 %v621
    %v910 = vunpack.c.l.b16 %v622
    %v911 = vunpack.c.l.b16 %v623
    %v912 = vunpack.c.l.b16 %v624
    %v913 = vunpack.c.l.b16 %v625
    %v914 = vunpack.c.l.b16 %v626
    %v915 = vunpack.c.l.b16 %v627
    %v916 = vunpack.c.l.b16 %v628
    %v917 = vunpack.c.l.b16 %v629
    %v918 = vunpack.c.l.b16 %v630
    %v919 = vunpack.c.l.b16 %v631
    %v920 = vunpack.c.l.b16 %v632
    %v921 = vunpack.c.l.b16 %v633
    %v922 = vunpack.c.l.b16 %v634
    %v923 = vunpack.c.l.b16 %v635
    %v924 = vunpack.c.l.b16 %v636
    %v925 = vunpack.c.l.b16 %v637
    %v926 = vunpack.c.l.b16 %v638
    %v927 = vunpack.c.l.b16 %v639
    %v928 = vunpack.c.l.b16 %v640
    %v929 = vunpack.c.l.b16 %v641
    %v930 = vunpack.c.l.b16 %v642
    %v931 = vunpack.c.l.b16 %v643
    %v932 = vunpack.c.l.b16 %v644
    %v933 = vunpack.c.l.b16 %v645
    %v934 = vunpack.c.l.b16 %v646
    %v935 = vunpack.c.l.b16 %v647
    %v936 = vunpack.c.l.b16 %v648
    %v937 = vunpack.c.l.b16 %v649
    %v938 = vunpack.c.l.b16 %v650
    %v939 = vunpack.c.l.b16 %v651
    %v940 = vunpack.c.l.b16 %v652
    %v941 = vunpack.c.l.b16 %v653
    %v942 = vunpack.c.l.b16 %v654
    %v943 = vunpack.c.l.b16 %v655
    %v944 = vunpack.c.l.b16 %v656
    %v945 = vunpack.c.l.b16 %v657
    %v946 = vunpack.c.l.b16 %v658
    %v947 = vunpack.c.l.b16 %v659
    %v948 = vunpack.c.l.b16 %v660
    %v949 = vunpack.c.l.b16 %v661
    %v950 = vunpack.c.l.b16 %v662
    %v951 = vunpack.c.l.b16 %v663
    %v952 = vunpack.c.l.b16 %v664
    %v953 = vunpack.c.l.b16 %v665
    %v954 = vunpack.c.l.b16 %v666
    %v955 = vunpack.c.l.b16 %v667
    %v956 = vunpack.c.l.b16 %v668
    %v957 = vunpack.c.l.b16 %v669
    %v958 = vunpack.c.l.b16 %v670
    %v959 = vunpack.c.l.b16 %v671
    %v960 = vunpack.c.l.b16 %v672
    %v961 = vunpack.c.l.b16 %v673
    %v962 = vunpack.c.l.b16 %v674
    %v963 = vunpack.c.l.b16 %v675
    %v964 = vunpack.c.l.b16 %v676
    %v965 = vunpack.c.l.b16 %v677
    %v966 = vunpack.c.l.b16 %v678
    %v967 = vunpack.c.l.b16 %v679
    %v968 = vunpack.c.l.b16 %v680
    %v969 = vunpack.c.l.b16 %v681
    %v970 = vunpack.c.l.b16 %v682
    %v971 = vunpack.c.l.b16 %v683
    %v972 = vunpack.c.l.b16 %v684
    %v973 = vunpack.c.l.b16 %v685
    %v974 = vunpack.c.l.b16 %v686
    %v975 = vunpack.c.l.b16 %v687
    %v976 = vunpack.c.l.b16 %v688
    %v977 = vunpack.c.l.b16 %v689
    %v978 = vunpack.c.l.b16 %v690
    %v979 = vunpack.c.l.b16 %v691
    %v980 = vunpack.c.l.b16 %v692
    %v981 = vunpack.c.l.b16 %v693
    %v982 = vunpack.c.l.b16 %v694
    %v983 = vunpack.c.l.b16 %v695
    %v984 = vunpack.c.l.b16 %v696
    %v985 = vunpack.c.l.b16 %v697
    %v986 = vunpack.c.l.b16 %v698
    %v987 = vunpack.c.l.b16 %v699
    %v988 = vunpack.c.l.b16 %v700
    %v989 = vunpack.c.l.b16 %v701
    %v990 = vunpack.c.l.b16 %v702
    %v991 = vunpack.c.l.b16 %v703
    %v992 = vunpack.c.l.b16 %v704
    %v993 = vunpack.c.l.b16 %v705
    %v994 = vunpack.c.l.b16 %v706
    %v995 = vunpack.c.l.b16 %v707
    %v996 = vunpack.c.l.b16 %v708
    %v997 = vunpack.c.l.b16 %v709
    %v998 = vunpack.c.l.b16 %v710
    %v999 = vunpack.c.l.b16 %v711
    %v1000 = vunpack.c.l.b16 %v712
    %v1001 = vunpack.c.l.b16 %v713
    %v1002 = vunpack.c.l.b16 %v714
    %v1003 = vunpack.c.l.b16 %v715
    %v1004 = vunpack.c.l.b16 %v716
    %v1005 = vunpack.c.l.b16 %v717
    %v1006 = vunpack.c.l.b16 %v718
    %v1007 = vunpack.c.l.b16 %v719
    %v1008 = vunpack.c.l.b16 %v720
    %v1009 = vunpack.c.l.b16 %v721
    %v1010 = vunpack.c.l.b16 %v722
    %v1011 = vunpack.c.l.b16 %v723
    %v1012 = vunpack.c.l.b16 %v724
    %v1013 = vunpack.c.l.b16 %v725
    %v1014 = vunpack.c.l.b16 %v726
    %v1015 = vunpack.c.l.b16 %v727
    %v1016 = vunpack.c.l.b16 %v728
    %v1017 = vunpack.c.l.b16 %v729
    %v1018 = vunpack.c.l.b16 %v730
    %v1019 = vunpack.c.l.b16 %v731
    %v1020 = vunpack.c.l.b16 %v732
    %v1021 = vunpack.c.l.b16 %v733
    %v1022 = vunpack.c.l.b16 %v734
    %v1023 = vunpack.c.l.b16 %v735
    %v1024 = vunpack.c.l.b16 %v736
    %v1025 = vunpack.c.l.b16 %v737
    %v1026 = vunpack.c.l.b16 %v738
    %v1027 = vunpack.c.l.b16 %v739
    %v1028 = vunpack.c.l.b16 %v740
    %v1029 = vunpack.c.l.b16 %v741
    %v1030 = vunpack.c.l.b16 %v742
    %v1031 = vunpack.c.l.b16 %v743
    %v1032 = vunpack.c.l.b16 %v744
    %v1033 = vunpack.c.l.b16 %v745
    %v1034 = vunpack.c.l.b16 %v746
    %v1035 = vunpack.c.l.b16 %v747
    %v1036 = vunpack.c.l.b16 %v748
    %v1037 = vpack.c.b16 %v894, %v893
    %v1038 = vpack.c.b16 %v896, %v895
    %v1039 = vpack.c.b16 %v898, %v897
    %v1040 = vpack.c.b16 %v900, %v899
    %v1041 = vpack.c.b16 %v902, %v901
    %v1042 = vpack.c.b16 %v904, %v903
    %v1043 = vpack.c.b16 %v906, %v905
    %v1044 = vpack.c.b16 %v908, %v907
    %v1045 = vpack.c.b16 %v910, %v909
    %v1046 = vpack.c.b16 %v912, %v911
    %v1047 = vpack.c.b16 %v914, %v913
    %v1048 = vpack.c.b16 %v916, %v915
    %v1049 = vpack.c.b16 %v918, %v917
    %v1050 = vpack.c.b16 %v920, %v919
    %v1051 = vpack.c.b16 %v922, %v921
    %v1052 = vpack.c.b16 %v924, %v923
    %v1053 = vpack.c.b16 %v926, %v925
    %v1054 = vpack.c.b16 %v928, %v927
    %v1055 = vpack.c.b16 %v930, %v929
    %v1056 = vpack.c.b16 %v932, %v931
    %v1057 = vpack.c.b16 %v934, %v933
    %v1058 = vpack.c.b16 %v936, %v935
    %v1059 = vpack.c.b16 %v938, %v937
    %v1060 = vpack.c.b16 %v940, %v939
    %v1061 = vpack.c.b16 %v942, %v941
    %v1062 = vpack.c.b16 %v944, %v943
    %v1063 = vpack.c.b16 %v946, %v945
    %v1064 = vpack.c.b16 %v948, %v947
    %v1065 = vpack.c.b16 %v950, %v949
    %v1066 = vpack.c.b16 %v952, %v951
    %v1067 = vpack.c.b16 %v954, %v953
    %v1068 = vpack.c.b16 %v956, %v955
    %v1069 = vpack.c.b16 %v958, %v957
    %v1070 = vpack.c.b16 %v960, %v959
    %v1071 = vpack.c.b16 %v962, %v961
    %v1072 = vpack.c.b16 %v964, %v963
    %v1073 = vpack.c.b16 %v966, %v965
    %v1074 = vpack.c.b16 %v968, %v967
    %v1075 = vpack.c.b16 %v970, %v969
    %v1076 = vpack.c.b16 %v972, %v971
    %v1077 = vpack.c.b16 %v974, %v973
    %v1078 = vpack.c.b16 %v976, %v975
    %v1079 = vpack.c.b16 %v978, %v977
    %v1080 = vpack.c.b16 %v980, %v979
    %v1081 = vpack.c.b16 %v982, %v981
    %v1082 = vpack.c.b16 %v984, %v983
    %v1083 = vpack.c.b16 %v986, %v985
    %v1084 = vpack.c.b16 %v988, %v987
    %v1085 = vpack.c.b16 %v990, %v989
    %v1086 = vpack.c.b16 %v992, %v991
    %v1087 = vpack.c.b16 %v994, %v993
    %v1088 = vpack.c.b16 %v996, %v995
    %v1089 = vpack.c.b16 %v998, %v997
    %v1090 = vpack.c.b16 %v1000, %v999
    %v1091 = vpack.c.b16 %v1002, %v1001
    %v1092 = vpack.c.b16 %v1004, %v1003
    %v1093 = vpack.c.b16 %v1006, %v1005
    %v1094 = vpack.c.b16 %v1008, %v1007
    %v1095 = vpack.c.b16 %v1010, %v1009
    %v1096 = vpack.c.b16 %v1012, %v1011
    %v1097 = vpack.c.b16 %v1014, %v1013
    %v1098 = vpack.c.b16 %v1016, %v1015
    %v1099 = vpack.c.b16 %v1018, %v1017
    %v1100 = vpack.c.b16 %v1020, %v1019
    %v1101 = vpack.c.b16 %v1022, %v1021
    %v1102 = vpack.c.b16 %v1024, %v1023
    %v1103 = vpack.c.b16 %v1026, %v1025
    %v1104 = vpack.c.b16 %v1028, %v1027
    %v1105 = vpack.c.b16 %v1030, %v1029
    %v1106 = vpack.c.b16 %v1032, %v1031
    %v1107 = vpack.c.b16 %v1034, %v1033
    %v1108 = vpack.c.b16 %v1036, %v1035
    %1181 = vmatpush.bf16.msra.mxu0 %v1044
    %1182 = vmatpush.bf16.msra.mxu0 %v1043
    %1183 = vmatpush.bf16.msra.mxu0 %v1042
    %1184 = vmatpush.bf16.msra.mxu0 %v1041
    %1185 = vmatpush.bf16.msra.mxu0 %v1040
    %1186 = vmatpush.bf16.msra.mxu0 %v1039
    %1187 = vmatpush.bf16.msra.mxu0 %v1038
    %1188 = vmatpush.bf16.msra.mxu0 %v1037
    %1189 = vmatmul.bf16.gmra.mxu0 %v533
    %v1190 = vpop.f32.mrf.mxu0
    %v1191 = vadd.f32 0.0, %v1190
    %v1192 = vpop.f32.mrf.mxu0
    %v1193 = vadd.f32 0.0, %v1192
    %1194 = vmatmul.bf16.gmra.mxu0 %v542
    %v1195 = vpop.f32.mrf.mxu0
    %v1196 = vadd.f32 0.0, %v1195
    %v1197 = vpop.f32.mrf.mxu0
    %v1198 = vadd.f32 0.0, %v1197
    %1199 = vmatmul.bf16.gmra.mxu0 %v551
    %v1200 = vpop.f32.mrf.mxu0
    %v1201 = vadd.f32 0.0, %v1200
    %v1202 = vpop.f32.mrf.mxu0
    %v1203 = vadd.f32 0.0, %v1202
    %1204 = vmatmul.bf16.gmra.mxu0 %v560
    %v1205 = vpop.f32.mrf.mxu0
    %v1206 = vadd.f32 0.0, %v1205
    %v1207 = vpop.f32.mrf.mxu0
    %v1208 = vadd.f32 0.0, %v1207
    %1209 = vmatmul.bf16.gmra.mxu0 %v569
    %v1210 = vpop.f32.mrf.mxu0
    %v1211 = vadd.f32 0.0, %v1210
    %v1212 = vpop.f32.mrf.mxu0
    %v1213 = vadd.f32 0.0, %v1212
    %1214 = vmatmul.bf16.gmra.mxu0 %v578
    %v1215 = vpop.f32.mrf.mxu0
    %v1216 = vadd.f32 0.0, %v1215
    %v1217 = vpop.f32.mrf.mxu0
    %v1218 = vadd.f32 0.0, %v1217
    %1219 = vmatmul.bf16.gmra.mxu0 %v587
    %v1220 = vpop.f32.mrf.mxu0
    %v1221 = vadd.f32 0.0, %v1220
    %v1222 = vpop.f32.mrf.mxu0
    %v1223 = vadd.f32 0.0, %v1222
    %1224 = vmatmul.bf16.gmra.mxu0 %v596
    %v1225 = vpop.f32.mrf.mxu0
    %v1226 = vadd.f32 0.0, %v1225
    %v1227 = vpop.f32.mrf.mxu0
    %v1228 = vadd.f32 0.0, %v1227
    %1229 = vdwg.mxu0
    %1230 = vmatpush.bf16.msra.mxu0 %v1052
    %1231 = vmatpush.bf16.msra.mxu0 %v1051
    %1232 = vmatpush.bf16.msra.mxu0 %v1050
    %1233 = vmatpush.bf16.msra.mxu0 %v1049
    %1234 = vmatpush.bf16.msra.mxu0 %v1048
    %1235 = vmatpush.bf16.msra.mxu0 %v1047
    %1236 = vmatpush.bf16.msra.mxu0 %v1046
    %1237 = vmatpush.bf16.msra.mxu0 %v1045
    %1238 = vmatmul.bf16.gmra.mxu0 %v534
    %v1239 = vpop.f32.mrf.mxu0
    %v1240 = vadd.f32 %v1191, %v1239
    %v1241 = vpop.f32.mrf.mxu0
    %v1242 = vadd.f32 %v1193, %v1241
    %1243 = vmatmul.bf16.gmra.mxu0 %v543
    %v1244 = vpop.f32.mrf.mxu0
    %v1245 = vadd.f32 %v1196, %v1244
    %v1246 = vpop.f32.mrf.mxu0
    %v1247 = vadd.f32 %v1198, %v1246
    %1248 = vmatmul.bf16.gmra.mxu0 %v552
    %v1249 = vpop.f32.mrf.mxu0
    %v1250 = vadd.f32 %v1201, %v1249
    %v1251 = vpop.f32.mrf.mxu0
    %v1252 = vadd.f32 %v1203, %v1251
    %1253 = vmatmul.bf16.gmra.mxu0 %v561
    %v1254 = vpop.f32.mrf.mxu0
    %v1255 = vadd.f32 %v1206, %v1254
    %v1256 = vpop.f32.mrf.mxu0
    %v1257 = vadd.f32 %v1208, %v1256
    %1258 = vmatmul.bf16.gmra.mxu0 %v570
    %v1259 = vpop.f32.mrf.mxu0
    %v1260 = vadd.f32 %v1211, %v1259
    %v1261 = vpop.f32.mrf.mxu0
    %v1262 = vadd.f32 %v1213, %v1261
    %1263 = vmatmul.bf16.gmra.mxu0 %v579
    %v1264 = vpop.f32.mrf.mxu0
    %v1265 = vadd.f32 %v1216, %v1264
    %v1266 = vpop.f32.mrf.mxu0
    %v1267 = vadd.f32 %v1218, %v1266
    %1268 = vmatmul.bf16.gmra.mxu0 %v588
    %v1269 = vpop.f32.mrf.mxu0
    %v1270 = vadd.f32 %v1221, %v1269
    %v1271 = vpop.f32.mrf.mxu0
    %v1272 = vadd.f32 %v1223, %v1271
    %1273 = vmatmul.bf16.gmra.mxu0 %v597
    %v1274 = vpop.f32.mrf.mxu0
    %v1275 = vadd.f32 %v1226, %v1274
    %v1276 = vpop.f32.mrf.mxu0
    %v1277 = vadd.f32 %v1228, %v1276
    %1278 = vdwg.mxu0
    %1279 = vmatpush.bf16.msra.mxu0 %v1060
    %1280 = vmatpush.bf16.msra.mxu0 %v1059
    %1281 = vmatpush.bf16.msra.mxu0 %v1058
    %1282 = vmatpush.bf16.msra.mxu0 %v1057
    %1283 = vmatpush.bf16.msra.mxu0 %v1056
    %1284 = vmatpush.bf16.msra.mxu0 %v1055
    %1285 = vmatpush.bf16.msra.mxu0 %v1054
    %1286 = vmatpush.bf16.msra.mxu0 %v1053
    %1287 = vmatmul.bf16.gmra.mxu0 %v535
    %v1288 = vpop.f32.mrf.mxu0
    %v1289 = vadd.f32 %v1240, %v1288
    %v1290 = vpop.f32.mrf.mxu0
    %v1291 = vadd.f32 %v1242, %v1290
    %1292 = vmatmul.bf16.gmra.mxu0 %v544
    %v1293 = vpop.f32.mrf.mxu0
    %v1294 = vadd.f32 %v1245, %v1293
    %v1295 = vpop.f32.mrf.mxu0
    %v1296 = vadd.f32 %v1247, %v1295
    %1297 = vmatmul.bf16.gmra.mxu0 %v553
    %v1298 = vpop.f32.mrf.mxu0
    %v1299 = vadd.f32 %v1250, %v1298
    %v1300 = vpop.f32.mrf.mxu0
    %v1301 = vadd.f32 %v1252, %v1300
    %1302 = vmatmul.bf16.gmra.mxu0 %v562
    %v1303 = vpop.f32.mrf.mxu0
    %v1304 = vadd.f32 %v1255, %v1303
    %v1305 = vpop.f32.mrf.mxu0
    %v1306 = vadd.f32 %v1257, %v1305
    %1307 = vmatmul.bf16.gmra.mxu0 %v571
    %v1308 = vpop.f32.mrf.mxu0
    %v1309 = vadd.f32 %v1260, %v1308
    %v1310 = vpop.f32.mrf.mxu0
    %v1311 = vadd.f32 %v1262, %v1310
    %1312 = vmatmul.bf16.gmra.mxu0 %v580
    %v1313 = vpop.f32.mrf.mxu0
    %v1314 = vadd.f32 %v1265, %v1313
    %v1315 = vpop.f32.mrf.mxu0
    %v1316 = vadd.f32 %v1267, %v1315
    %1317 = vmatmul.bf16.gmra.mxu0 %v589
    %v1318 = vpop.f32.mrf.mxu0
    %v1319 = vadd.f32 %v1270, %v1318
    %v1320 = vpop.f32.mrf.mxu0
    %v1321 = vadd.f32 %v1272, %v1320
    %1322 = vmatmul.bf16.gmra.mxu0 %v598
    %v1323 = vpop.f32.mrf.mxu0
    %v1324 = vadd.f32 %v1275, %v1323
    %v1325 = vpop.f32.mrf.mxu0
    %v1326 = vadd.f32 %v1277, %v1325
    %1327 = vdwg.mxu0
    %1328 = vmatpush.bf16.msra.mxu0 %v1068
    %1329 = vmatpush.bf16.msra.mxu0 %v1067
    %1330 = vmatpush.bf16.msra.mxu0 %v1066
    %1331 = vmatpush.bf16.msra.mxu0 %v1065
    %1332 = vmatpush.bf16.msra.mxu0 %v1064
    %1333 = vmatpush.bf16.msra.mxu0 %v1063
    %1334 = vmatpush.bf16.msra.mxu0 %v1062
    %1335 = vmatpush.bf16.msra.mxu0 %v1061
    %1336 = vmatmul.bf16.gmra.mxu0 %v536
    %v1337 = vpop.f32.mrf.mxu0
    %v1338 = vadd.f32 %v1289, %v1337
    %v1339 = vpop.f32.mrf.mxu0
    %v1340 = vadd.f32 %v1291, %v1339
    %1341 = vmatmul.bf16.gmra.mxu0 %v545
    %v1342 = vpop.f32.mrf.mxu0
    %v1343 = vadd.f32 %v1294, %v1342
    %v1344 = vpop.f32.mrf.mxu0
    %v1345 = vadd.f32 %v1296, %v1344
    %1346 = vmatmul.bf16.gmra.mxu0 %v554
    %v1347 = vpop.f32.mrf.mxu0
    %v1348 = vadd.f32 %v1299, %v1347
    %v1349 = vpop.f32.mrf.mxu0
    %v1350 = vadd.f32 %v1301, %v1349
    %1351 = vmatmul.bf16.gmra.mxu0 %v563
    %v1352 = vpop.f32.mrf.mxu0
    %v1353 = vadd.f32 %v1304, %v1352
    %v1354 = vpop.f32.mrf.mxu0
    %v1355 = vadd.f32 %v1306, %v1354
    %1356 = vmatmul.bf16.gmra.mxu0 %v572
    %v1357 = vpop.f32.mrf.mxu0
    %v1358 = vadd.f32 %v1309, %v1357
    %v1359 = vpop.f32.mrf.mxu0
    %v1360 = vadd.f32 %v1311, %v1359
    %1361 = vmatmul.bf16.gmra.mxu0 %v581
    %v1362 = vpop.f32.mrf.mxu0
    %v1363 = vadd.f32 %v1314, %v1362
    %v1364 = vpop.f32.mrf.mxu0
    %v1365 = vadd.f32 %v1316, %v1364
    %1366 = vmatmul.bf16.gmra.mxu0 %v590
    %v1367 = vpop.f32.mrf.mxu0
    %v1368 = vadd.f32 %v1319, %v1367
    %v1369 = vpop.f32.mrf.mxu0
    %v1370 = vadd.f32 %v1321, %v1369
    %1371 = vmatmul.bf16.gmra.mxu0 %v599
    %v1372 = vpop.f32.mrf.mxu0
    %v1373 = vadd.f32 %v1324, %v1372
    %v1374 = vpop.f32.mrf.mxu0
    %v1375 = vadd.f32 %v1326, %v1374
    %1376 = vdwg.mxu0
    %1377 = vmatpush.bf16.msra.mxu0 %v1076
    %1378 = vmatpush.bf16.msra.mxu0 %v1075
    %1379 = vmatpush.bf16.msra.mxu0 %v1074
    %1380 = vmatpush.bf16.msra.mxu0 %v1073
    %1381 = vmatpush.bf16.msra.mxu0 %v1072
    %1382 = vmatpush.bf16.msra.mxu0 %v1071
    %1383 = vmatpush.bf16.msra.mxu0 %v1070
    %1384 = vmatpush.bf16.msra.mxu0 %v1069
    %1385 = vmatmul.bf16.gmra.mxu0 %v537
    %v1386 = vpop.f32.mrf.mxu0
    %v1387 = vadd.f32 %v1338, %v1386
    %v1388 = vpop.f32.mrf.mxu0
    %v1389 = vadd.f32 %v1340, %v1388
    %1390 = vmatmul.bf16.gmra.mxu0 %v546
    %v1391 = vpop.f32.mrf.mxu0
    %v1392 = vadd.f32 %v1343, %v1391
    %v1393 = vpop.f32.mrf.mxu0
    %v1394 = vadd.f32 %v1345, %v1393
    %1395 = vmatmul.bf16.gmra.mxu0 %v555
    %v1396 = vpop.f32.mrf.mxu0
    %v1397 = vadd.f32 %v1348, %v1396
    %v1398 = vpop.f32.mrf.mxu0
    %v1399 = vadd.f32 %v1350, %v1398
    %1400 = vmatmul.bf16.gmra.mxu0 %v564
    %v1401 = vpop.f32.mrf.mxu0
    %v1402 = vadd.f32 %v1353, %v1401
    %v1403 = vpop.f32.mrf.mxu0
    %v1404 = vadd.f32 %v1355, %v1403
    %1405 = vmatmul.bf16.gmra.mxu0 %v573
    %v1406 = vpop.f32.mrf.mxu0
    %v1407 = vadd.f32 %v1358, %v1406
    %v1408 = vpop.f32.mrf.mxu0
    %v1409 = vadd.f32 %v1360, %v1408
    %1410 = vmatmul.bf16.gmra.mxu0 %v582
    %v1411 = vpop.f32.mrf.mxu0
    %v1412 = vadd.f32 %v1363, %v1411
    %v1413 = vpop.f32.mrf.mxu0
    %v1414 = vadd.f32 %v1365, %v1413
    %1415 = vmatmul.bf16.gmra.mxu0 %v591
    %v1416 = vpop.f32.mrf.mxu0
    %v1417 = vadd.f32 %v1368, %v1416
    %v1418 = vpop.f32.mrf.mxu0
    %v1419 = vadd.f32 %v1370, %v1418
    %1420 = vmatmul.bf16.gmra.mxu0 %v600
    %v1421 = vpop.f32.mrf.mxu0
    %v1422 = vadd.f32 %v1373, %v1421
    %v1423 = vpop.f32.mrf.mxu0
    %v1424 = vadd.f32 %v1375, %v1423
    %1425 = vdwg.mxu0
    %1426 = vmatpush.bf16.msra.mxu0 %v1084
    %1427 = vmatpush.bf16.msra.mxu0 %v1083
    %1428 = vmatpush.bf16.msra.mxu0 %v1082
    %1429 = vmatpush.bf16.msra.mxu0 %v1081
    %1430 = vmatpush.bf16.msra.mxu0 %v1080
    %1431 = vmatpush.bf16.msra.mxu0 %v1079
    %1432 = vmatpush.bf16.msra.mxu0 %v1078
    %1433 = vmatpush.bf16.msra.mxu0 %v1077
    %1434 = vmatmul.bf16.gmra.mxu0 %v538
    %v1435 = vpop.f32.mrf.mxu0
    %v1436 = vadd.f32 %v1387, %v1435
    %v1437 = vpop.f32.mrf.mxu0
    %v1438 = vadd.f32 %v1389, %v1437
    %1439 = vmatmul.bf16.gmra.mxu0 %v547
    %v1440 = vpop.f32.mrf.mxu0
    %v1441 = vadd.f32 %v1392, %v1440
    %v1442 = vpop.f32.mrf.mxu0
    %v1443 = vadd.f32 %v1394, %v1442
    %1444 = vmatmul.bf16.gmra.mxu0 %v556
    %v1445 = vpop.f32.mrf.mxu0
    %v1446 = vadd.f32 %v1397, %v1445
    %v1447 = vpop.f32.mrf.mxu0
    %v1448 = vadd.f32 %v1399, %v1447
    %1449 = vmatmul.bf16.gmra.mxu0 %v565
    %v1450 = vpop.f32.mrf.mxu0
    %v1451 = vadd.f32 %v1402, %v1450
    %v1452 = vpop.f32.mrf.mxu0
    %v1453 = vadd.f32 %v1404, %v1452
    %1454 = vmatmul.bf16.gmra.mxu0 %v574
    %v1455 = vpop.f32.mrf.mxu0
    %v1456 = vadd.f32 %v1407, %v1455
    %v1457 = vpop.f32.mrf.mxu0
    %v1458 = vadd.f32 %v1409, %v1457
    %1459 = vmatmul.bf16.gmra.mxu0 %v583
    %v1460 = vpop.f32.mrf.mxu0
    %v1461 = vadd.f32 %v1412, %v1460
    %v1462 = vpop.f32.mrf.mxu0
    %v1463 = vadd.f32 %v1414, %v1462
    %1464 = vmatmul.bf16.gmra.mxu0 %v592
    %v1465 = vpop.f32.mrf.mxu0
    %v1466 = vadd.f32 %v1417, %v1465
    %v1467 = vpop.f32.mrf.mxu0
    %v1468 = vadd.f32 %v1419, %v1467
    %1469 = vmatmul.bf16.gmra.mxu0 %v601
    %v1470 = vpop.f32.mrf.mxu0
    %v1471 = vadd.f32 %v1422, %v1470
    %v1472 = vpop.f32.mrf.mxu0
    %v1473 = vadd.f32 %v1424, %v1472
    %1474 = vdwg.mxu0
    %1475 = vmatpush.bf16.msra.mxu0 %v1092
    %1476 = vmatpush.bf16.msra.mxu0 %v1091
    %1477 = vmatpush.bf16.msra.mxu0 %v1090
    %1478 = vmatpush.bf16.msra.mxu0 %v1089
    %1479 = vmatpush.bf16.msra.mxu0 %v1088
    %1480 = vmatpush.bf16.msra.mxu0 %v1087
    %1481 = vmatpush.bf16.msra.mxu0 %v1086
    %1482 = vmatpush.bf16.msra.mxu0 %v1085
    %1483 = vmatmul.bf16.gmra.mxu0 %v539
    %v1484 = vpop.f32.mrf.mxu0
    %v1485 = vadd.f32 %v1436, %v1484
    %v1486 = vpop.f32.mrf.mxu0
    %v1487 = vadd.f32 %v1438, %v1486
    %1488 = vmatmul.bf16.gmra.mxu0 %v548
    %v1489 = vpop.f32.mrf.mxu0
    %v1490 = vadd.f32 %v1441, %v1489
    %v1491 = vpop.f32.mrf.mxu0
    %v1492 = vadd.f32 %v1443, %v1491
    %1493 = vmatmul.bf16.gmra.mxu0 %v557
    %v1494 = vpop.f32.mrf.mxu0
    %v1495 = vadd.f32 %v1446, %v1494
    %v1496 = vpop.f32.mrf.mxu0
    %v1497 = vadd.f32 %v1448, %v1496
    %1498 = vmatmul.bf16.gmra.mxu0 %v566
    %v1499 = vpop.f32.mrf.mxu0
    %v1500 = vadd.f32 %v1451, %v1499
    %v1501 = vpop.f32.mrf.mxu0
    %v1502 = vadd.f32 %v1453, %v1501
    %1503 = vmatmul.bf16.gmra.mxu0 %v575
    %v1504 = vpop.f32.mrf.mxu0
    %v1505 = vadd.f32 %v1456, %v1504
    %v1506 = vpop.f32.mrf.mxu0
    %v1507 = vadd.f32 %v1458, %v1506
    %1508 = vmatmul.bf16.gmra.mxu0 %v584
    %v1509 = vpop.f32.mrf.mxu0
    %v1510 = vadd.f32 %v1461, %v1509
    %v1511 = vpop.f32.mrf.mxu0
    %v1512 = vadd.f32 %v1463, %v1511
    %1513 = vmatmul.bf16.gmra.mxu0 %v593
    %v1514 = vpop.f32.mrf.mxu0
    %v1515 = vadd.f32 %v1466, %v1514
    %v1516 = vpop.f32.mrf.mxu0
    %v1517 = vadd.f32 %v1468, %v1516
    %1518 = vmatmul.bf16.gmra.mxu0 %v602
    %v1519 = vpop.f32.mrf.mxu0
    %v1520 = vadd.f32 %v1471, %v1519
    %v1521 = vpop.f32.mrf.mxu0
    %v1522 = vadd.f32 %v1473, %v1521
    %1523 = vdwg.mxu0
    %1524 = vmatpush.bf16.msra.mxu0 %v1100
    %1525 = vmatpush.bf16.msra.mxu0 %v1099
    %1526 = vmatpush.bf16.msra.mxu0 %v1098
    %1527 = vmatpush.bf16.msra.mxu0 %v1097
    %1528 = vmatpush.bf16.msra.mxu0 %v1096
    %1529 = vmatpush.bf16.msra.mxu0 %v1095
    %1530 = vmatpush.bf16.msra.mxu0 %v1094
    %1531 = vmatpush.bf16.msra.mxu0 %v1093
    %1532 = vmatmul.bf16.gmra.mxu0 %v540
    %v1533 = vpop.f32.mrf.mxu0
    %v1534 = vadd.f32 %v1485, %v1533
    %v1535 = vpop.f32.mrf.mxu0
    %v1536 = vadd.f32 %v1487, %v1535
    %1537 = vmatmul.bf16.gmra.mxu0 %v549
    %v1538 = vpop.f32.mrf.mxu0
    %v1539 = vadd.f32 %v1490, %v1538
    %v1540 = vpop.f32.mrf.mxu0
    %v1541 = vadd.f32 %v1492, %v1540
    %1542 = vmatmul.bf16.gmra.mxu0 %v558
    %v1543 = vpop.f32.mrf.mxu0
    %v1544 = vadd.f32 %v1495, %v1543
    %v1545 = vpop.f32.mrf.mxu0
    %v1546 = vadd.f32 %v1497, %v1545
    %1547 = vmatmul.bf16.gmra.mxu0 %v567
    %v1548 = vpop.f32.mrf.mxu0
    %v1549 = vadd.f32 %v1500, %v1548
    %v1550 = vpop.f32.mrf.mxu0
    %v1551 = vadd.f32 %v1502, %v1550
    %1552 = vmatmul.bf16.gmra.mxu0 %v576
    %v1553 = vpop.f32.mrf.mxu0
    %v1554 = vadd.f32 %v1505, %v1553
    %v1555 = vpop.f32.mrf.mxu0
    %v1556 = vadd.f32 %v1507, %v1555
    %1557 = vmatmul.bf16.gmra.mxu0 %v585
    %v1558 = vpop.f32.mrf.mxu0
    %v1559 = vadd.f32 %v1510, %v1558
    %v1560 = vpop.f32.mrf.mxu0
    %v1561 = vadd.f32 %v1512, %v1560
    %1562 = vmatmul.bf16.gmra.mxu0 %v594
    %v1563 = vpop.f32.mrf.mxu0
    %v1564 = vadd.f32 %v1515, %v1563
    %v1565 = vpop.f32.mrf.mxu0
    %v1566 = vadd.f32 %v1517, %v1565
    %1567 = vmatmul.bf16.gmra.mxu0 %v603
    %v1568 = vpop.f32.mrf.mxu0
    %v1569 = vadd.f32 %v1520, %v1568
    %v1570 = vpop.f32.mrf.mxu0
    %v1571 = vadd.f32 %v1522, %v1570
    %1572 = vdwg.mxu0
    %1573 = vmatpush.bf16.msra.mxu0 %v1108
    %1574 = vmatpush.bf16.msra.mxu0 %v1107
    %1575 = vmatpush.bf16.msra.mxu0 %v1106
    %1576 = vmatpush.bf16.msra.mxu0 %v1105
    %1577 = vmatpush.bf16.msra.mxu0 %v1104
    %1578 = vmatpush.bf16.msra.mxu0 %v1103
    %1579 = vmatpush.bf16.msra.mxu0 %v1102
    %1580 = vmatpush.bf16.msra.mxu0 %v1101
    %1581 = vmatmul.bf16.gmra.mxu0 %v541
    %v1582 = vpop.f32.mrf.mxu0
    %v1583 = vadd.f32 %v1534, %v1582
    %v1584 = vpop.f32.mrf.mxu0
    %v1585 = vadd.f32 %v1536, %v1584
    %1586 = vmatmul.bf16.gmra.mxu0 %v550
    %v1587 = vpop.f32.mrf.mxu0
    %v1588 = vadd.f32 %v1539, %v1587
    %v1589 = vpop.f32.mrf.mxu0
    %v1590 = vadd.f32 %v1541, %v1589
    %1591 = vmatmul.bf16.gmra.mxu0 %v559
    %v1592 = vpop.f32.mrf.mxu0
    %v1593 = vadd.f32 %v1544, %v1592
    %v1594 = vpop.f32.mrf.mxu0
    %v1595 = vadd.f32 %v1546, %v1594
    %1596 = vmatmul.bf16.gmra.mxu0 %v568
    %v1597 = vpop.f32.mrf.mxu0
    %v1598 = vadd.f32 %v1549, %v1597
    %v1599 = vpop.f32.mrf.mxu0
    %v1600 = vadd.f32 %v1551, %v1599
    %1601 = vmatmul.bf16.gmra.mxu0 %v577
    %v1602 = vpop.f32.mrf.mxu0
    %v1603 = vadd.f32 %v1554, %v1602
    %v1604 = vpop.f32.mrf.mxu0
    %v1605 = vadd.f32 %v1556, %v1604
    %1606 = vmatmul.bf16.gmra.mxu0 %v586
    %v1607 = vpop.f32.mrf.mxu0
    %v1608 = vadd.f32 %v1559, %v1607
    %v1609 = vpop.f32.mrf.mxu0
    %v1610 = vadd.f32 %v1561, %v1609
    %1611 = vmatmul.bf16.gmra.mxu0 %v595
    %v1612 = vpop.f32.mrf.mxu0
    %v1613 = vadd.f32 %v1564, %v1612
    %v1614 = vpop.f32.mrf.mxu0
    %v1615 = vadd.f32 %v1566, %v1614
    %1616 = vmatmul.bf16.gmra.mxu0 %v604
    %v1617 = vpop.f32.mrf.mxu0
    %v1618 = vadd.f32 %v1569, %v1617
    %v1619 = vpop.f32.mrf.mxu0
    %v1620 = vadd.f32 %v1571, %v1619
    %1621 = vdwg.mxu0
    %v1622 = vadd.f32 %v1583, %v1585
    %v1623 = vadd.f32 %v1622, %v1588
    %v1624 = vadd.f32 %v1623, %v1590
    %v1625 = vadd.f32 %v1624, %v1593
    %v1626 = vadd.f32 %v1625, %v1595
    %v1627 = vadd.f32 %v1626, %v1598
    %v1628 = vadd.f32 %v1627, %v1600
    %v1629 = vadd.f32 %v1628, %v1603
    %v1630 = vadd.f32 %v1629, %v1605
    %v1631 = vadd.f32 %v1630, %v1608
    %v1632 = vadd.f32 %v1631, %v1610
    %v1633 = vadd.f32 %v1632, %v1613
    %v1634 = vadd.f32 %v1633, %v1615
    %v1635 = vadd.f32 %v1634, %v1618
    %v1636 = vadd.f32 %v1635, %v1620
    %v1637 = vrot.slane %v1636, 4
    %v1638 = vadd.f32 %v1636, %v1637
    %v1639 = vrot.slane %v1638, 2
    %v1640 = vadd.f32 %v1638, %v1639
    %v1641 = vrot.slane %v1640, 1
    %v1642 = vadd.f32 %v1640, %v1641
    %v1643 = vrcp.pop 128.0
    %v1644 = vmul.f32 128.0, %v1643
    %v1645 = vsub.f32 1.0, %v1644
    %v1646 = vmul.f32 %v1643, %v1645
    %v1647 = vadd.f32 %v1643, %v1646
    %vm1648 = vweird.f32 %v1643
    %v1649 = vsel %vm1648, %v1643, %v1647
    %v1650 = vmul.f32 %v1642, %v1649
    %v1651 = vsub.f32 %v1583, %v1650
    %v1652 = vsub.f32 %v1585, %v1650
    %v1653 = vsub.f32 %v1588, %v1650
    %v1654 = vsub.f32 %v1590, %v1650
    %v1655 = vsub.f32 %v1593, %v1650
    %v1656 = vsub.f32 %v1595, %v1650
    %v1657 = vsub.f32 %v1598, %v1650
    %v1658 = vsub.f32 %v1600, %v1650
    %v1659 = vsub.f32 %v1603, %v1650
    %v1660 = vsub.f32 %v1605, %v1650
    %v1661 = vsub.f32 %v1608, %v1650
    %v1662 = vsub.f32 %v1610, %v1650
    %v1663 = vsub.f32 %v1613, %v1650
    %v1664 = vsub.f32 %v1615, %v1650
    %v1665 = vsub.f32 %v1618, %v1650
    %v1666 = vsub.f32 %v1620, %v1650
    %v1667 = vmul.f32 %v1651, %v1651
    %v1668 = vmul.f32 %v1652, %v1652
    %v1669 = vmul.f32 %v1653, %v1653
    %v1670 = vmul.f32 %v1654, %v1654
    %v1671 = vmul.f32 %v1655, %v1655
    %v1672 = vmul.f32 %v1656, %v1656
    %v1673 = vmul.f32 %v1657, %v1657
    %v1674 = vmul.f32 %v1658, %v1658
    %v1675 = vmul.f32 %v1659, %v1659
    %v1676 = vmul.f32 %v1660, %v1660
    %v1677 = vmul.f32 %v1661, %v1661
    %v1678 = vmul.f32 %v1662, %v1662
    %v1679 = vmul.f32 %v1663, %v1663
    %v1680 = vmul.f32 %v1664, %v1664
    %v1681 = vmul.f32 %v1665, %v1665
    %v1682 = vmul.f32 %v1666, %v1666
    %v1683 = vadd.f32 %v1667, %v1668
    %v1684 = vadd.f32 %v1683, %v1669
    %v1685 = vadd.f32 %v1684, %v1670
    %v1686 = vadd.f32 %v1685, %v1671
    %v1687 = vadd.f32 %v1686, %v1672
    %v1688 = vadd.f32 %v1687, %v1673
    %v1689 = vadd.f32 %v1688, %v1674
    %v1690 = vadd.f32 %v1689, %v1675
    %v1691 = vadd.f32 %v1690, %v1676
    %v1692 = vadd.f32 %v1691, %v1677
    %v1693 = vadd.f32 %v1692, %v1678
    %v1694 = vadd.f32 %v1693, %v1679
    %v1695 = vadd.f32 %v1694, %v1680
    %v1696 = vadd.f32 %v1695, %v1681
    %v1697 = vadd.f32 %v1696, %v1682
    %v1698 = vrot.slane %v1697, 4
    %v1699 = vadd.f32 %v1697, %v1698
    %v1700 = vrot.slane %v1699, 2
    %v1701 = vadd.f32 %v1699, %v1700
    %v1702 = vrot.slane %v1701, 1
    %v1703 = vadd.f32 %v1701, %v1702
    %v1704 = vmul.f32 %v1703, %v1649
    %v1705 = vadd.f32 %v1704, 1e-05
    %v1706 = vrsqrt.pop %v1705
    %v1707 = vmul.f32 %v1706, %v1705
    %v1708 = vmul.f32 %v1707, %v1706
    %v1709 = vmul.f32 0.5, %v1708
    %v1710 = vsub.f32 1.5, %v1709
    %v1711 = vmul.f32 %v1706, %v1710
    %vm1712 = vweird.f32 %v1705
    %vm1713 = vweird.f32 %v1706
    %vm1714 = vmor %vm1712, %vm1713
    %v1715 = vsel %vm1714, %v1706, %v1711
    %v1716 = vmul.f32 %v1651, %v1715
    %v1717 = vmul.f32 %v1652, %v1715
    %v1718 = vmul.f32 %v1653, %v1715
    %v1719 = vmul.f32 %v1654, %v1715
    %v1720 = vmul.f32 %v1655, %v1715
    %v1721 = vmul.f32 %v1656, %v1715
    %v1722 = vmul.f32 %v1657, %v1715
    %v1723 = vmul.f32 %v1658, %v1715
    %v1724 = vmul.f32 %v1659, %v1715
    %v1725 = vmul.f32 %v1660, %v1715
    %v1726 = vmul.f32 %v1661, %v1715
    %v1727 = vmul.f32 %v1662, %v1715
    %v1728 = vmul.f32 %v1663, %v1715
    %v1729 = vmul.f32 %v1664, %v1715
    %v1730 = vmul.f32 %v1665, %v1715
    %v1731 = vmul.f32 %v1666, %v1715
    %v1732 = vld [vmem:[%s3] sm:$0x1]
    %v1734 = vperm.slane %v1732, 0
    %v1736 = vmul.f32 %v1716, %v1734
    %v1737 = vmul.f32 %v1717, %v1734
    %v1738 = vmul.f32 %v1718, %v1734
    %v1739 = vmul.f32 %v1719, %v1734
    %v1740 = vmul.f32 %v1720, %v1734
    %v1741 = vmul.f32 %v1721, %v1734
    %v1742 = vmul.f32 %v1722, %v1734
    %v1743 = vmul.f32 %v1723, %v1734
    %v1744 = vmul.f32 %v1724, %v1734
    %v1745 = vmul.f32 %v1725, %v1734
    %v1746 = vmul.f32 %v1726, %v1734
    %v1747 = vmul.f32 %v1727, %v1734
    %v1748 = vmul.f32 %v1728, %v1734
    %v1749 = vmul.f32 %v1729, %v1734
    %v1750 = vmul.f32 %v1730, %v1734
    %v1751 = vmul.f32 %v1731, %v1734
    %v1752 = vld [vmem:[%s4] sm:$0x1]
    %v1754 = vperm.slane %v1752, 0
    %v1756 = vadd.f32 %v1736, %v1754
    %v1757 = vadd.f32 %v1737, %v1754
    %v1758 = vadd.f32 %v1738, %v1754
    %v1759 = vadd.f32 %v1739, %v1754
    %v1760 = vadd.f32 %v1740, %v1754
    %v1761 = vadd.f32 %v1741, %v1754
    %v1762 = vadd.f32 %v1742, %v1754
    %v1763 = vadd.f32 %v1743, %v1754
    %v1764 = vadd.f32 %v1744, %v1754
    %v1765 = vadd.f32 %v1745, %v1754
    %v1766 = vadd.f32 %v1746, %v1754
    %v1767 = vadd.f32 %v1747, %v1754
    %v1768 = vadd.f32 %v1748, %v1754
    %v1769 = vadd.f32 %v1749, %v1754
    %v1770 = vadd.f32 %v1750, %v1754
    %v1771 = vadd.f32 %v1751, %v1754
    %v1772 = vmax.f32 %v1756, 0.0
    %v1773 = vmax.f32 %v1757, 0.0
    %v1774 = vmax.f32 %v1758, 0.0
    %v1775 = vmax.f32 %v1759, 0.0
    %v1776 = vmax.f32 %v1760, 0.0
    %v1777 = vmax.f32 %v1761, 0.0
    %v1778 = vmax.f32 %v1762, 0.0
    %v1779 = vmax.f32 %v1763, 0.0
    %v1780 = vmax.f32 %v1764, 0.0
    %v1781 = vmax.f32 %v1765, 0.0
    %v1782 = vmax.f32 %v1766, 0.0
    %v1783 = vmax.f32 %v1767, 0.0
    %v1784 = vmax.f32 %v1768, 0.0
    %v1785 = vmax.f32 %v1769, 0.0
    %v1786 = vmax.f32 %v1770, 0.0
    %v1787 = vmax.f32 %v1771, 0.0
    %v1788 = vrot.slane %v1772, 1
    %v1789 = vrot.slane %v1773, 1
    %v1790 = vrot.slane %v1774, 1
    %v1791 = vrot.slane %v1775, 1
    %v1792 = vrot.slane %v1776, 1
    %v1793 = vrot.slane %v1777, 1
    %v1794 = vrot.slane %v1778, 1
    %v1795 = vrot.slane %v1779, 1
    %v1796 = vrot.slane %v1780, 1
    %v1797 = vrot.slane %v1781, 1
    %v1798 = vrot.slane %v1782, 1
    %v1799 = vrot.slane %v1783, 1
    %v1800 = vrot.slane %v1784, 1
    %v1801 = vrot.slane %v1785, 1
    %v1802 = vrot.slane %v1786, 1
    %v1803 = vrot.slane %v1787, 1
    %v1804 = vsel %vm228, %v1802, %v1803
    %v1805 = vsel %vm228, %v1801, %v1802
    %v1806 = vsel %vm228, %v1800, %v1801
    %v1807 = vsel %vm228, %v1799, %v1800
    %v1808 = vsel %vm228, %v1798, %v1799
    %v1809 = vsel %vm228, %v1797, %v1798
    %v1810 = vsel %vm228, %v1796, %v1797
    %v1811 = vsel %vm228, %v1795, %v1796
    %v1812 = vsel %vm228, %v1794, %v1795
    %v1813 = vsel %vm228, %v1793, %v1794
    %v1814 = vsel %vm228, %v1792, %v1793
    %v1815 = vsel %vm228, %v1791, %v1792
    %v1816 = vsel %vm228, %v1790, %v1791
    %v1817 = vsel %vm228, %v1789, %v1790
    %v1818 = vsel %vm228, %v1788, %v1789
    %v1819 = vsel %vm228, %v1803, %v1788
    %v1820 = vmax.f32 %v1772, %v1818
    %v1821 = vmax.f32 %v1773, %v1817
    %v1822 = vmax.f32 %v1774, %v1816
    %v1823 = vmax.f32 %v1775, %v1815
    %v1824 = vmax.f32 %v1776, %v1814
    %v1825 = vmax.f32 %v1777, %v1813
    %v1826 = vmax.f32 %v1778, %v1812
    %v1827 = vmax.f32 %v1779, %v1811
    %v1828 = vmax.f32 %v1780, %v1810
    %v1829 = vmax.f32 %v1781, %v1809
    %v1830 = vmax.f32 %v1782, %v1808
    %v1831 = vmax.f32 %v1783, %v1807
    %v1832 = vmax.f32 %v1784, %v1806
    %v1833 = vmax.f32 %v1785, %v1805
    %v1834 = vmax.f32 %v1786, %v1804
    %v1835 = vmax.f32 %v1787, %v1819
    %v1836 = vmax.f32 %v1820, %v1821
    %v1837 = vmax.f32 %v1821, %v1822
    %v1838 = vmax.f32 %v1822, %v1823
    %v1839 = vmax.f32 %v1823, %v1824
    %v1840 = vmax.f32 %v1824, %v1825
    %v1841 = vmax.f32 %v1825, %v1826
    %v1842 = vmax.f32 %v1826, %v1827
    %v1843 = vmax.f32 %v1827, %v1828
    %v1844 = vmax.f32 %v1828, %v1829
    %v1845 = vmax.f32 %v1829, %v1830
    %v1846 = vmax.f32 %v1830, %v1831
    %v1847 = vmax.f32 %v1831, %v1832
    %v1848 = vmax.f32 %v1832, %v1833
    %v1849 = vmax.f32 %v1833, %v1834
    %v1850 = vmax.f32 %v1834, %v1835
    %v1851 = vmax.f32 %v1835, %v1820
    %v1852 = vld [vmem:[%s5] sm:$0xf]
    %v1853 = vld [vmem:[%s5 + $0x4] sm:$0xf]
    %v1854 = vld [vmem:[%s5 + $0x8] sm:$0xf]
    %v1855 = vld [vmem:[%s5 + $0xc] sm:$0xf]
    %v1856 = vpack.c.bf16 %v1837, %v1836
    %v1857 = vpack.c.bf16 %v1839, %v1838
    %v1858 = vpack.c.bf16 %v1841, %v1840
    %v1859 = vpack.c.bf16 %v1843, %v1842
    %v1860 = vpack.c.bf16 %v1845, %v1844
    %v1861 = vpack.c.bf16 %v1847, %v1846
    %v1862 = vpack.c.bf16 %v1849, %v1848
    %v1863 = vpack.c.bf16 %v1851, %v1850
    %v1868 = vunpack.c.l.b16 %v1852
    %v1869 = vunpack.c.l.b16 %v1853
    %v1870 = vunpack.c.l.b16 %v1854
    %v1871 = vunpack.c.l.b16 %v1855
    %v1872 = vpack.c.b16 %v1869, %v1868
    %v1873 = vpack.c.b16 %v1871, %v1870
    %1876 = vmatpush.bf16.msra.mxu0 %v1863
    %1877 = vmatpush.bf16.msra.mxu0 %v1862
    %1878 = vmatpush.bf16.msra.mxu0 %v1861
    %1879 = vmatpush.bf16.msra.mxu0 %v1860
    %1880 = vmatpush.bf16.msra.mxu0 %v1859
    %1881 = vmatpush.bf16.msra.mxu0 %v1858
    %1882 = vmatpush.bf16.msra.mxu0 %v1857
    %1883 = vmatpush.bf16.msra.mxu0 %v1856
    %1884 = vmatmul.bf16.gmra.mxu0 %v1872
    %v1885 = vpop.f32.mrf.mxu0
    %v1886 = vadd.f32 0.0, %v1885
    %v1887 = vpop.f32.mrf.mxu0
    %v1888 = vadd.f32 0.0, %v1887
    %1889 = vmatmul.bf16.gmra.mxu0 %v1873
    %v1890 = vpop.f32.mrf.mxu0
    %v1891 = vadd.f32 0.0, %v1890
    %v1892 = vpop.f32.mrf.mxu0
    %v1893 = vadd.f32 0.0, %v1892
    %1894 = vdwg.mxu0
    %v1895 = vrot.slane %v1886, 3
    %v1896 = vrot.slane %v1888, 3
    %v1897 = vrot.slane %v1891, 3
    %v1898 = vrot.slane %v1893, 3
    %vm1899 = vcmp.lt.s32.totalorder %v194, 5
    %v1900 = vsel %vm1899, %v1897, %v1898
    %v1901 = vsel %vm1899, %v1896, %v1897
    %v1902 = vsel %vm1899, %v1895, %v1896
    %v1903 = vsel %vm1899, %v1898, %v1895
    %v1904 = vrot.slane %v1886, 4
    %v1905 = vrot.slane %v1888, 4
    %v1906 = vrot.slane %v1891, 4
    %v1907 = vrot.slane %v1893, 4
    %vm1908 = vcmp.lt.s32.totalorder %v194, 4
    %v1909 = vsel %vm1908, %v1906, %v1907
    %v1910 = vsel %vm1908, %v1905, %v1906
    %v1911 = vsel %vm1908, %v1904, %v1905
    %v1912 = vsel %vm1908, %v1907, %v1904
    %v1913 = vrot.slane %v1886, 5
    %v1914 = vrot.slane %v1888, 5
    %v1915 = vrot.slane %v1891, 5
    %v1916 = vrot.slane %v1893, 5
    %vm1917 = vcmp.lt.s32.totalorder %v194, 3
    %v1918 = vsel %vm1917, %v1915, %v1916
    %v1919 = vsel %vm1917, %v1914, %v1915
    %v1920 = vsel %vm1917, %v1913, %v1914
    %v1921 = vsel %vm1917, %v1916, %v1913
    %v1922 = vrot.slane %v1886, 7
    %v1923 = vrot.slane %v1888, 7
    %v1924 = vrot.slane %v1891, 7
    %v1925 = vrot.slane %v1893, 7
    %v1926 = vsel %vm195, %v1924, %v1925
    %v1927 = vsel %vm195, %v1923, %v1924
    %v1928 = vsel %vm195, %v1922, %v1923
    %v1929 = vsel %vm195, %v1925, %v1922
    %v1930 = vrot.slane %v1886, 1
    %v1931 = vrot.slane %v1888, 1
    %v1932 = vrot.slane %v1891, 1
    %v1933 = vrot.slane %v1893, 1
    %v1934 = vsel %vm228, %v1932, %v1933
    %v1935 = vsel %vm228, %v1931, %v1932
    %v1936 = vsel %vm228, %v1930, %v1931
    %v1937 = vsel %vm228, %v1933, %v1930
    %v1938 = vld [vmem:[%s6] sm:$0xff]
    %v1939 = vld [vmem:[%s6 + $0x8] sm:$0xff]
    %v1940 = vld [vmem:[%s6 + $0x10] sm:$0xff]
    %v1941 = vld [vmem:[%s6 + $0x18] sm:$0xff]
    %v1942 = vld [vmem:[%s6 + $0x20] sm:$0xff]
    %v1943 = vld [vmem:[%s6 + $0x28] sm:$0xff]
    %v1944 = vld [vmem:[%s6 + $0x30] sm:$0xff]
    %v1945 = vld [vmem:[%s6 + $0x38] sm:$0xff]
    %v1946 = vld [vmem:[%s6 + $0x40] sm:$0xff]
    %v1947 = vld [vmem:[%s6 + $0x48] sm:$0xff]
    %v1948 = vld [vmem:[%s6 + $0x50] sm:$0xff]
    %v1949 = vld [vmem:[%s6 + $0x58] sm:$0xff]
    %v1950 = vld [vmem:[%s6 + $0x60] sm:$0xff]
    %v1951 = vld [vmem:[%s6 + $0x68] sm:$0xff]
    %v1952 = vld [vmem:[%s6 + $0x70] sm:$0xff]
    %v1953 = vld [vmem:[%s6 + $0x78] sm:$0xff]
    %v1954 = vld [vmem:[%s6 + $0x80] sm:$0xff]
    %v1955 = vld [vmem:[%s6 + $0x88] sm:$0xff]
    %v1956 = vld [vmem:[%s6 + $0x90] sm:$0xff]
    %v1957 = vld [vmem:[%s6 + $0x98] sm:$0xff]
    %v1958 = vld [vmem:[%s6 + $0xa0] sm:$0xff]
    %v1959 = vld [vmem:[%s6 + $0xa8] sm:$0xff]
    %v1960 = vld [vmem:[%s6 + $0xb0] sm:$0xff]
    %v1961 = vld [vmem:[%s6 + $0xb8] sm:$0xff]
    %v1962 = vld [vmem:[%s6 + $0xc0] sm:$0xff]
    %v1963 = vld [vmem:[%s6 + $0xc8] sm:$0xff]
    %v1964 = vld [vmem:[%s6 + $0xd0] sm:$0xff]
    %v1965 = vld [vmem:[%s6 + $0xd8] sm:$0xff]
    %v1966 = vld [vmem:[%s6 + $0xe0] sm:$0xff]
    %v1967 = vld [vmem:[%s6 + $0xe8] sm:$0xff]
    %v1968 = vld [vmem:[%s6 + $0xf0] sm:$0xff]
    %v1969 = vld [vmem:[%s6 + $0xf8] sm:$0xff]
    %v1970 = vld [vmem:[%s6 + $0x100] sm:$0xff]
    %v1971 = vld [vmem:[%s6 + $0x108] sm:$0xff]
    %v1972 = vld [vmem:[%s6 + $0x110] sm:$0xff]
    %v1973 = vld [vmem:[%s6 + $0x118] sm:$0xff]
    %v1974 = vmul.f32 %v1903, %v1938
    %v1975 = vmul.f32 %v1912, %v1939
    %v1976 = vmul.f32 %v1921, %v1940
    %v1977 = vmul.f32 %v1929, %v1941
    %v1978 = vmul.f32 %v1886, %v1942
    %v1979 = vmul.f32 %v1936, %v1943
    %v1980 = vmul.f32 %v1902, %v1944
    %v1981 = vmul.f32 %v1911, %v1945
    %v1982 = vmul.f32 %v1920, %v1946
    %v1983 = vmul.f32 %v1902, %v1947
    %v1984 = vmul.f32 %v1911, %v1948
    %v1985 = vmul.f32 %v1920, %v1949
    %v1986 = vmul.f32 %v1928, %v1950
    %v1987 = vmul.f32 %v1888, %v1951
    %v1988 = vmul.f32 %v1935, %v1952
    %v1989 = vmul.f32 %v1901, %v1953
    %v1990 = vmul.f32 %v1910, %v1954
    %v1991 = vmul.f32 %v1919, %v1955
    %v1992 = vmul.f32 %v1901, %v1956
    %v1993 = vmul.f32 %v1910, %v1957
    %v1994 = vmul.f32 %v1919, %v1958
    %v1995 = vmul.f32 %v1927, %v1959
    %v1996 = vmul.f32 %v1891, %v1960
    %v1997 = vmul.f32 %v1934, %v1961
    %v1998 = vmul.f32 %v1900, %v1962
    %v1999 = vmul.f32 %v1909, %v1963
    %v2000 = vmul.f32 %v1918, %v1964
    %v2001 = vmul.f32 %v1900, %v1965
    %v2002 = vmul.f32 %v1909, %v1966
    %v2003 = vmul.f32 %v1918, %v1967
    %v2004 = vmul.f32 %v1926, %v1968
    %v2005 = vmul.f32 %v1893, %v1969
    %v2006 = vmul.f32 %v1937, %v1970
    %v2007 = vmul.f32 %v1903, %v1971
    %v2008 = vmul.f32 %v1912, %v1972
    %v2009 = vmul.f32 %v1921, %v1973
    %v2010 = vpack.c.bf16 %v1983, %v1974
    %v2011 = vpack.c.bf16 %v1984, %v1975
    %v2012 = vpack.c.bf16 %v1985, %v1976
    %v2013 = vpack.c.bf16 %v1986, %v1977
    %v2014 = vpack.c.bf16 %v1987, %v1978
    %v2015 = vpack.c.bf16 %v1988, %v1979
    %v2016 = vpack.c.bf16 %v1989, %v1980
    %v2017 = vpack.c.bf16 %v1990, %v1981
    %v2018 = vpack.c.bf16 %v1991, %v1982
    %v2019 = vpack.c.bf16 %v2001, %v1992
    %v2020 = vpack.c.bf16 %v2002, %v1993
    %v2021 = vpack.c.bf16 %v2003, %v1994
    %v2022 = vpack.c.bf16 %v2004, %v1995
    %v2023 = vpack.c.bf16 %v2005, %v1996
    %v2024 = vpack.c.bf16 %v2006, %v1997
    %v2025 = vpack.c.bf16 %v2007, %v1998
    %v2026 = vpack.c.bf16 %v2008, %v1999
    %v2027 = vpack.c.bf16 %v2009, %v2000
    %v2028 = vld [vmem:[#allocation7] sm:$0xf]
    %v2029 = vld [vmem:[#allocation7 + $0x4] sm:$0xf]
    %v2030 = vld [vmem:[#allocation7 + $0x8] sm:$0xf]
    %v2031 = vld [vmem:[#allocation7 + $0xc] sm:$0xf]
    %v2032 = vld [vmem:[#allocation7 + $0x10] sm:$0xf]
    %v2033 = vld [vmem:[#allocation7 + $0x14] sm:$0xf]
    %v2034 = vld [vmem:[#allocation7 + $0x18] sm:$0xf]
    %v2035 = vld [vmem:[#allocation7 + $0x1c] sm:$0xf]
    %v2036 = vld [vmem:[#allocation7 + $0x20] sm:$0xf]
    %v2037 = vld [vmem:[#allocation7 + $0x24] sm:$0xf]
    %v2038 = vld [vmem:[#allocation7 + $0x28] sm:$0xf]
    %v2039 = vld [vmem:[#allocation7 + $0x2c] sm:$0xf]
    %v2040 = vld [vmem:[#allocation7 + $0x30] sm:$0xf]
    %v2041 = vld [vmem:[#allocation7 + $0x34] sm:$0xf]
    %v2042 = vld [vmem:[#allocation7 + $0x38] sm:$0xf]
    %v2043 = vld [vmem:[#allocation7 + $0x3c] sm:$0xf]
    %v2044 = vld [vmem:[#allocation7 + $0x40] sm:$0xf]
    %v2045 = vld [vmem:[#allocation7 + $0x44] sm:$0xf]
    %v2046 = vld [vmem:[#allocation7 + $0x48] sm:$0xf]
    %v2047 = vld [vmem:[#allocation7 + $0x4c] sm:$0xf]
    %v2048 = vld [vmem:[#allocation7 + $0x50] sm:$0xf]
    %v2049 = vld [vmem:[#allocation7 + $0x54] sm:$0xf]
    %v2050 = vld [vmem:[#allocation7 + $0x58] sm:$0xf]
    %v2051 = vld [vmem:[#allocation7 + $0x5c] sm:$0xf]
    %v2052 = vld [vmem:[#allocation7 + $0x60] sm:$0xf]
    %v2053 = vld [vmem:[#allocation7 + $0x64] sm:$0xf]
    %v2054 = vld [vmem:[#allocation7 + $0x68] sm:$0xf]
    %v2055 = vld [vmem:[#allocation7 + $0x6c] sm:$0xf]
    %v2056 = vld [vmem:[#allocation7 + $0x70] sm:$0xf]
    %v2057 = vld [vmem:[#allocation7 + $0x74] sm:$0xf]
    %v2058 = vld [vmem:[#allocation7 + $0x78] sm:$0xf]
    %v2059 = vld [vmem:[#allocation7 + $0x7c] sm:$0xf]
    %v2060 = vld [vmem:[#allocation7 + $0x80] sm:$0xf]
    %v2061 = vld [vmem:[#allocation7 + $0x84] sm:$0xf]
    %v2062 = vld [vmem:[#allocation7 + $0x88] sm:$0xf]
    %v2063 = vld [vmem:[#allocation7 + $0x8c] sm:$0xf]
    %v2064 = vld [vmem:[#allocation7 + $0x90] sm:$0xf]
    %v2065 = vld [vmem:[#allocation7 + $0x94] sm:$0xf]
    %v2066 = vld [vmem:[#allocation7 + $0x98] sm:$0xf]
    %v2067 = vld [vmem:[#allocation7 + $0x9c] sm:$0xf]
    %v2068 = vld [vmem:[#allocation7 + $0xa0] sm:$0xf]
    %v2069 = vld [vmem:[#allocation7 + $0xa4] sm:$0xf]
    %v2070 = vld [vmem:[#allocation7 + $0xa8] sm:$0xf]
    %v2071 = vld [vmem:[#allocation7 + $0xac] sm:$0xf]
    %v2072 = vld [vmem:[#allocation7 + $0xb0] sm:$0xf]
    %v2073 = vld [vmem:[#allocation7 + $0xb4] sm:$0xf]
    %v2074 = vld [vmem:[#allocation7 + $0xb8] sm:$0xf]
    %v2075 = vld [vmem:[#allocation7 + $0xbc] sm:$0xf]
    %v2076 = vld [vmem:[#allocation7 + $0xc0] sm:$0xf]
    %v2077 = vld [vmem:[#allocation7 + $0xc4] sm:$0xf]
    %v2078 = vld [vmem:[#allocation7 + $0xc8] sm:$0xf]
    %v2079 = vld [vmem:[#allocation7 + $0xcc] sm:$0xf]
    %v2080 = vld [vmem:[#allocation7 + $0xd0] sm:$0xf]
    %v2081 = vld [vmem:[#allocation7 + $0xd4] sm:$0xf]
    %v2082 = vld [vmem:[#allocation7 + $0xd8] sm:$0xf]
    %v2083 = vld [vmem:[#allocation7 + $0xdc] sm:$0xf]
    %v2084 = vld [vmem:[#allocation7 + $0xe0] sm:$0xf]
    %v2085 = vld [vmem:[#allocation7 + $0xe4] sm:$0xf]
    %v2086 = vld [vmem:[#allocation7 + $0xe8] sm:$0xf]
    %v2087 = vld [vmem:[#allocation7 + $0xec] sm:$0xf]
    %v2088 = vld [vmem:[#allocation7 + $0xf0] sm:$0xf]
    %v2089 = vld [vmem:[#allocation7 + $0xf4] sm:$0xf]
    %v2090 = vld [vmem:[#allocation7 + $0xf8] sm:$0xf]
    %v2091 = vld [vmem:[#allocation7 + $0xfc] sm:$0xf]
    %v2092 = vld [vmem:[#allocation7 + $0x100] sm:$0xf]
    %v2093 = vld [vmem:[#allocation7 + $0x104] sm:$0xf]
    %v2094 = vld [vmem:[#allocation7 + $0x108] sm:$0xf]
    %v2095 = vld [vmem:[#allocation7 + $0x10c] sm:$0xf]
    %v2096 = vld [vmem:[#allocation7 + $0x110] sm:$0xf]
    %v2097 = vld [vmem:[#allocation7 + $0x114] sm:$0xf]
    %v2098 = vld [vmem:[#allocation7 + $0x118] sm:$0xf]
    %v2099 = vld [vmem:[#allocation7 + $0x11c] sm:$0xf]
    %v2100 = vld [vmem:[#allocation7 + $0x120] sm:$0xf]
    %v2101 = vld [vmem:[#allocation7 + $0x124] sm:$0xf]
    %v2102 = vld [vmem:[#allocation7 + $0x128] sm:$0xf]
    %v2103 = vld [vmem:[#allocation7 + $0x12c] sm:$0xf]
    %v2104 = vld [vmem:[#allocation7 + $0x130] sm:$0xf]
    %v2105 = vld [vmem:[#allocation7 + $0x134] sm:$0xf]
    %v2106 = vld [vmem:[#allocation7 + $0x138] sm:$0xf]
    %v2107 = vld [vmem:[#allocation7 + $0x13c] sm:$0xf]
    %v2108 = vld [vmem:[#allocation7 + $0x140] sm:$0xf]
    %v2109 = vld [vmem:[#allocation7 + $0x144] sm:$0xf]
    %v2110 = vld [vmem:[#allocation7 + $0x148] sm:$0xf]
    %v2111 = vld [vmem:[#allocation7 + $0x14c] sm:$0xf]
    %v2112 = vld [vmem:[#allocation7 + $0x150] sm:$0xf]
    %v2113 = vld [vmem:[#allocation7 + $0x154] sm:$0xf]
    %v2114 = vld [vmem:[#allocation7 + $0x158] sm:$0xf]
    %v2115 = vld [vmem:[#allocation7 + $0x15c] sm:$0xf]
    %v2116 = vld [vmem:[#allocation7 + $0x160] sm:$0xf]
    %v2117 = vld [vmem:[#allocation7 + $0x164] sm:$0xf]
    %v2118 = vld [vmem:[#allocation7 + $0x168] sm:$0xf]
    %v2119 = vld [vmem:[#allocation7 + $0x16c] sm:$0xf]
    %v2120 = vld [vmem:[#allocation7 + $0x170] sm:$0xf]
    %v2121 = vld [vmem:[#allocation7 + $0x174] sm:$0xf]
    %v2122 = vld [vmem:[#allocation7 + $0x178] sm:$0xf]
    %v2123 = vld [vmem:[#allocation7 + $0x17c] sm:$0xf]
    %v2124 = vld [vmem:[#allocation7 + $0x180] sm:$0xf]
    %v2125 = vld [vmem:[#allocation7 + $0x184] sm:$0xf]
    %v2126 = vld [vmem:[#allocation7 + $0x188] sm:$0xf]
    %v2127 = vld [vmem:[#allocation7 + $0x18c] sm:$0xf]
    %v2128 = vld [vmem:[#allocation7 + $0x190] sm:$0xf]
    %v2129 = vld [vmem:[#allocation7 + $0x194] sm:$0xf]
    %v2130 = vld [vmem:[#allocation7 + $0x198] sm:$0xf]
    %v2131 = vld [vmem:[#allocation7 + $0x19c] sm:$0xf]
    %v2132 = vld [vmem:[#allocation7 + $0x1a0] sm:$0xf]
    %v2133 = vld [vmem:[#allocation7 + $0x1a4] sm:$0xf]
    %v2134 = vld [vmem:[#allocation7 + $0x1a8] sm:$0xf]
    %v2135 = vld [vmem:[#allocation7 + $0x1ac] sm:$0xf]
    %v2136 = vld [vmem:[#allocation7 + $0x1b0] sm:$0xf]
    %v2137 = vld [vmem:[#allocation7 + $0x1b4] sm:$0xf]
    %v2138 = vld [vmem:[#allocation7 + $0x1b8] sm:$0xf]
    %v2139 = vld [vmem:[#allocation7 + $0x1bc] sm:$0xf]
    %v2140 = vld [vmem:[#allocation7 + $0x1c0] sm:$0xf]
    %v2141 = vld [vmem:[#allocation7 + $0x1c4] sm:$0xf]
    %v2142 = vld [vmem:[#allocation7 + $0x1c8] sm:$0xf]
    %v2143 = vld [vmem:[#allocation7 + $0x1cc] sm:$0xf]
    %v2144 = vld [vmem:[#allocation7 + $0x1d0] sm:$0xf]
    %v2145 = vld [vmem:[#allocation7 + $0x1d4] sm:$0xf]
    %v2146 = vld [vmem:[#allocation7 + $0x1d8] sm:$0xf]
    %v2147 = vld [vmem:[#allocation7 + $0x1dc] sm:$0xf]
    %v2148 = vld [vmem:[#allocation7 + $0x1e0] sm:$0xf]
    %v2149 = vld [vmem:[#allocation7 + $0x1e4] sm:$0xf]
    %v2150 = vld [vmem:[#allocation7 + $0x1e8] sm:$0xf]
    %v2151 = vld [vmem:[#allocation7 + $0x1ec] sm:$0xf]
    %v2152 = vld [vmem:[#allocation7 + $0x1f0] sm:$0xf]
    %v2153 = vld [vmem:[#allocation7 + $0x1f4] sm:$0xf]
    %v2154 = vld [vmem:[#allocation7 + $0x1f8] sm:$0xf]
    %v2155 = vld [vmem:[#allocation7 + $0x1fc] sm:$0xf]
    %v2156 = vld [vmem:[#allocation7 + $0x200] sm:$0xf]
    %v2157 = vld [vmem:[#allocation7 + $0x204] sm:$0xf]
    %v2158 = vld [vmem:[#allocation7 + $0x208] sm:$0xf]
    %v2159 = vld [vmem:[#allocation7 + $0x20c] sm:$0xf]
    %v2160 = vld [vmem:[#allocation7 + $0x210] sm:$0xf]
    %v2161 = vld [vmem:[#allocation7 + $0x214] sm:$0xf]
    %v2162 = vld [vmem:[#allocation7 + $0x218] sm:$0xf]
    %v2163 = vld [vmem:[#allocation7 + $0x21c] sm:$0xf]
    %v2164 = vld [vmem:[#allocation7 + $0x220] sm:$0xf]
    %v2165 = vld [vmem:[#allocation7 + $0x224] sm:$0xf]
    %v2166 = vld [vmem:[#allocation7 + $0x228] sm:$0xf]
    %v2167 = vld [vmem:[#allocation7 + $0x22c] sm:$0xf]
    %v2168 = vld [vmem:[#allocation7 + $0x230] sm:$0xf]
    %v2169 = vld [vmem:[#allocation7 + $0x234] sm:$0xf]
    %v2170 = vld [vmem:[#allocation7 + $0x238] sm:$0xf]
    %v2171 = vld [vmem:[#allocation7 + $0x23c] sm:$0xf]
    %v2316 = vunpack.c.l.b16 %v2028
    %v2317 = vunpack.c.l.b16 %v2029
    %v2318 = vunpack.c.l.b16 %v2030
    %v2319 = vunpack.c.l.b16 %v2031
    %v2320 = vunpack.c.l.b16 %v2032
    %v2321 = vunpack.c.l.b16 %v2033
    %v2322 = vunpack.c.l.b16 %v2034
    %v2323 = vunpack.c.l.b16 %v2035
    %v2324 = vunpack.c.l.b16 %v2036
    %v2325 = vunpack.c.l.b16 %v2037
    %v2326 = vunpack.c.l.b16 %v2038
    %v2327 = vunpack.c.l.b16 %v2039
    %v2328 = vunpack.c.l.b16 %v2040
    %v2329 = vunpack.c.l.b16 %v2041
    %v2330 = vunpack.c.l.b16 %v2042
    %v2331 = vunpack.c.l.b16 %v2043
    %v2332 = vunpack.c.l.b16 %v2044
    %v2333 = vunpack.c.l.b16 %v2045
    %v2334 = vunpack.c.l.b16 %v2046
    %v2335 = vunpack.c.l.b16 %v2047
    %v2336 = vunpack.c.l.b16 %v2048
    %v2337 = vunpack.c.l.b16 %v2049
    %v2338 = vunpack.c.l.b16 %v2050
    %v2339 = vunpack.c.l.b16 %v2051
    %v2340 = vunpack.c.l.b16 %v2052
    %v2341 = vunpack.c.l.b16 %v2053
    %v2342 = vunpack.c.l.b16 %v2054
    %v2343 = vunpack.c.l.b16 %v2055
    %v2344 = vunpack.c.l.b16 %v2056
    %v2345 = vunpack.c.l.b16 %v2057
    %v2346 = vunpack.c.l.b16 %v2058
    %v2347 = vunpack.c.l.b16 %v2059
    %v2348 = vunpack.c.l.b16 %v2060
    %v2349 = vunpack.c.l.b16 %v2061
    %v2350 = vunpack.c.l.b16 %v2062
    %v2351 = vunpack.c.l.b16 %v2063
    %v2352 = vunpack.c.l.b16 %v2064
    %v2353 = vunpack.c.l.b16 %v2065
    %v2354 = vunpack.c.l.b16 %v2066
    %v2355 = vunpack.c.l.b16 %v2067
    %v2356 = vunpack.c.l.b16 %v2068
    %v2357 = vunpack.c.l.b16 %v2069
    %v2358 = vunpack.c.l.b16 %v2070
    %v2359 = vunpack.c.l.b16 %v2071
    %v2360 = vunpack.c.l.b16 %v2072
    %v2361 = vunpack.c.l.b16 %v2073
    %v2362 = vunpack.c.l.b16 %v2074
    %v2363 = vunpack.c.l.b16 %v2075
    %v2364 = vunpack.c.l.b16 %v2076
    %v2365 = vunpack.c.l.b16 %v2077
    %v2366 = vunpack.c.l.b16 %v2078
    %v2367 = vunpack.c.l.b16 %v2079
    %v2368 = vunpack.c.l.b16 %v2080
    %v2369 = vunpack.c.l.b16 %v2081
    %v2370 = vunpack.c.l.b16 %v2082
    %v2371 = vunpack.c.l.b16 %v2083
    %v2372 = vunpack.c.l.b16 %v2084
    %v2373 = vunpack.c.l.b16 %v2085
    %v2374 = vunpack.c.l.b16 %v2086
    %v2375 = vunpack.c.l.b16 %v2087
    %v2376 = vunpack.c.l.b16 %v2088
    %v2377 = vunpack.c.l.b16 %v2089
    %v2378 = vunpack.c.l.b16 %v2090
    %v2379 = vunpack.c.l.b16 %v2091
    %v2380 = vunpack.c.l.b16 %v2092
    %v2381 = vunpack.c.l.b16 %v2093
    %v2382 = vunpack.c.l.b16 %v2094
    %v2383 = vunpack.c.l.b16 %v2095
    %v2384 = vunpack.c.l.b16 %v2096
    %v2385 = vunpack.c.l.b16 %v2097
    %v2386 = vunpack.c.l.b16 %v2098
    %v2387 = vunpack.c.l.b16 %v2099
    %v2388 = vunpack.c.l.b16 %v2100
    %v2389 = vunpack.c.l.b16 %v2101
    %v2390 = vunpack.c.l.b16 %v2102
    %v2391 = vunpack.c.l.b16 %v2103
    %v2392 = vunpack.c.l.b16 %v2104
    %v2393 = vunpack.c.l.b16 %v2105
    %v2394 = vunpack.c.l.b16 %v2106
    %v2395 = vunpack.c.l.b16 %v2107
    %v2396 = vunpack.c.l.b16 %v2108
    %v2397 = vunpack.c.l.b16 %v2109
    %v2398 = vunpack.c.l.b16 %v2110
    %v2399 = vunpack.c.l.b16 %v2111
    %v2400 = vunpack.c.l.b16 %v2112
    %v2401 = vunpack.c.l.b16 %v2113
    %v2402 = vunpack.c.l.b16 %v2114
    %v2403 = vunpack.c.l.b16 %v2115
    %v2404 = vunpack.c.l.b16 %v2116
    %v2405 = vunpack.c.l.b16 %v2117
    %v2406 = vunpack.c.l.b16 %v2118
    %v2407 = vunpack.c.l.b16 %v2119
    %v2408 = vunpack.c.l.b16 %v2120
    %v2409 = vunpack.c.l.b16 %v2121
    %v2410 = vunpack.c.l.b16 %v2122
    %v2411 = vunpack.c.l.b16 %v2123
    %v2412 = vunpack.c.l.b16 %v2124
    %v2413 = vunpack.c.l.b16 %v2125
    %v2414 = vunpack.c.l.b16 %v2126
    %v2415 = vunpack.c.l.b16 %v2127
    %v2416 = vunpack.c.l.b16 %v2128
    %v2417 = vunpack.c.l.b16 %v2129
    %v2418 = vunpack.c.l.b16 %v2130
    %v2419 = vunpack.c.l.b16 %v2131
    %v2420 = vunpack.c.l.b16 %v2132
    %v2421 = vunpack.c.l.b16 %v2133
    %v2422 = vunpack.c.l.b16 %v2134
    %v2423 = vunpack.c.l.b16 %v2135
    %v2424 = vunpack.c.l.b16 %v2136
    %v2425 = vunpack.c.l.b16 %v2137
    %v2426 = vunpack.c.l.b16 %v2138
    %v2427 = vunpack.c.l.b16 %v2139
    %v2428 = vunpack.c.l.b16 %v2140
    %v2429 = vunpack.c.l.b16 %v2141
    %v2430 = vunpack.c.l.b16 %v2142
    %v2431 = vunpack.c.l.b16 %v2143
    %v2432 = vunpack.c.l.b16 %v2144
    %v2433 = vunpack.c.l.b16 %v2145
    %v2434 = vunpack.c.l.b16 %v2146
    %v2435 = vunpack.c.l.b16 %v2147
    %v2436 = vunpack.c.l.b16 %v2148
    %v2437 = vunpack.c.l.b16 %v2149
    %v2438 = vunpack.c.l.b16 %v2150
    %v2439 = vunpack.c.l.b16 %v2151
    %v2440 = vunpack.c.l.b16 %v2152
    %v2441 = vunpack.c.l.b16 %v2153
    %v2442 = vunpack.c.l.b16 %v2154
    %v2443 = vunpack.c.l.b16 %v2155
    %v2444 = vunpack.c.l.b16 %v2156
    %v2445 = vunpack.c.l.b16 %v2157
    %v2446 = vunpack.c.l.b16 %v2158
    %v2447 = vunpack.c.l.b16 %v2159
    %v2448 = vunpack.c.l.b16 %v2160
    %v2449 = vunpack.c.l.b16 %v2161
    %v2450 = vunpack.c.l.b16 %v2162
    %v2451 = vunpack.c.l.b16 %v2163
    %v2452 = vunpack.c.l.b16 %v2164
    %v2453 = vunpack.c.l.b16 %v2165
    %v2454 = vunpack.c.l.b16 %v2166
    %v2455 = vunpack.c.l.b16 %v2167
    %v2456 = vunpack.c.l.b16 %v2168
    %v2457 = vunpack.c.l.b16 %v2169
    %v2458 = vunpack.c.l.b16 %v2170
    %v2459 = vunpack.c.l.b16 %v2171
    %v2460 = vpack.c.b16 %v2317, %v2316
    %v2461 = vpack.c.b16 %v2319, %v2318
    %v2462 = vpack.c.b16 %v2321, %v2320
    %v2463 = vpack.c.b16 %v2323, %v2322
    %v2464 = vpack.c.b16 %v2325, %v2324
    %v2465 = vpack.c.b16 %v2327, %v2326
    %v2466 = vpack.c.b16 %v2329, %v2328
    %v2467 = vpack.c.b16 %v2331, %v2330
    %v2468 = vpack.c.b16 %v2333, %v2332
    %v2469 = vpack.c.b16 %v2335, %v2334
    %v2470 = vpack.c.b16 %v2337, %v2336
    %v2471 = vpack.c.b16 %v2339, %v2338
    %v2472 = vpack.c.b16 %v2341, %v2340
    %v2473 = vpack.c.b16 %v2343, %v2342
    %v2474 = vpack.c.b16 %v2345, %v2344
    %v2475 = vpack.c.b16 %v2347, %v2346
    %v2476 = vpack.c.b16 %v2349, %v2348
    %v2477 = vpack.c.b16 %v2351, %v2350
    %v2478 = vpack.c.b16 %v2353, %v2352
    %v2479 = vpack.c.b16 %v2355, %v2354
    %v2480 = vpack.c.b16 %v2357, %v2356
    %v2481 = vpack.c.b16 %v2359, %v2358
    %v2482 = vpack.c.b16 %v2361, %v2360
    %v2483 = vpack.c.b16 %v2363, %v2362
    %v2484 = vpack.c.b16 %v2365, %v2364
    %v2485 = vpack.c.b16 %v2367, %v2366
    %v2486 = vpack.c.b16 %v2369, %v2368
    %v2487 = vpack.c.b16 %v2371, %v2370
    %v2488 = vpack.c.b16 %v2373, %v2372
    %v2489 = vpack.c.b16 %v2375, %v2374
    %v2490 = vpack.c.b16 %v2377, %v2376
    %v2491 = vpack.c.b16 %v2379, %v2378
    %v2492 = vpack.c.b16 %v2381, %v2380
    %v2493 = vpack.c.b16 %v2383, %v2382
    %v2494 = vpack.c.b16 %v2385, %v2384
    %v2495 = vpack.c.b16 %v2387, %v2386
    %v2496 = vpack.c.b16 %v2389, %v2388
    %v2497 = vpack.c.b16 %v2391, %v2390
    %v2498 = vpack.c.b16 %v2393, %v2392
    %v2499 = vpack.c.b16 %v2395, %v2394
    %v2500 = vpack.c.b16 %v2397, %v2396
    %v2501 = vpack.c.b16 %v2399, %v2398
    %v2502 = vpack.c.b16 %v2401, %v2400
    %v2503 = vpack.c.b16 %v2403, %v2402
    %v2504 = vpack.c.b16 %v2405, %v2404
    %v2505 = vpack.c.b16 %v2407, %v2406
    %v2506 = vpack.c.b16 %v2409, %v2408
    %v2507 = vpack.c.b16 %v2411, %v2410
    %v2508 = vpack.c.b16 %v2413, %v2412
    %v2509 = vpack.c.b16 %v2415, %v2414
    %v2510 = vpack.c.b16 %v2417, %v2416
    %v2511 = vpack.c.b16 %v2419, %v2418
    %v2512 = vpack.c.b16 %v2421, %v2420
    %v2513 = vpack.c.b16 %v2423, %v2422
    %v2514 = vpack.c.b16 %v2425, %v2424
    %v2515 = vpack.c.b16 %v2427, %v2426
    %v2516 = vpack.c.b16 %v2429, %v2428
    %v2517 = vpack.c.b16 %v2431, %v2430
    %v2518 = vpack.c.b16 %v2433, %v2432
    %v2519 = vpack.c.b16 %v2435, %v2434
    %v2520 = vpack.c.b16 %v2437, %v2436
    %v2521 = vpack.c.b16 %v2439, %v2438
    %v2522 = vpack.c.b16 %v2441, %v2440
    %v2523 = vpack.c.b16 %v2443, %v2442
    %v2524 = vpack.c.b16 %v2445, %v2444
    %v2525 = vpack.c.b16 %v2447, %v2446
    %v2526 = vpack.c.b16 %v2449, %v2448
    %v2527 = vpack.c.b16 %v2451, %v2450
    %v2528 = vpack.c.b16 %v2453, %v2452
    %v2529 = vpack.c.b16 %v2455, %v2454
    %v2530 = vpack.c.b16 %v2457, %v2456
    %v2531 = vpack.c.b16 %v2459, %v2458
    %2604 = vmatpush.bf16.msra.mxu0 %v2467
    %2605 = vmatpush.bf16.msra.mxu0 %v2466
    %2606 = vmatpush.bf16.msra.mxu0 %v2465
    %2607 = vmatpush.bf16.msra.mxu0 %v2464
    %2608 = vmatpush.bf16.msra.mxu0 %v2463
    %2609 = vmatpush.bf16.msra.mxu0 %v2462
    %2610 = vmatpush.bf16.msra.mxu0 %v2461
    %2611 = vmatpush.bf16.msra.mxu0 %v2460
    %2612 = vmatmul.bf16.gmra.mxu0 %v2010
    %v2613 = vpop.f32.mrf.mxu0
    %v2614 = vadd.f32 0.0, %v2613
    %v2615 = vpop.f32.mrf.mxu0
    %v2616 = vadd.f32 0.0, %v2615
    %2617 = vmatmul.bf16.gmra.mxu0 %v2019
    %v2618 = vpop.f32.mrf.mxu0
    %v2619 = vadd.f32 0.0, %v2618
    %v2620 = vpop.f32.mrf.mxu0
    %v2621 = vadd.f32 0.0, %v2620
    %2622 = vdwg.mxu0
    %2623 = vmatpush.bf16.msra.mxu0 %v2475
    %2624 = vmatpush.bf16.msra.mxu0 %v2474
    %2625 = vmatpush.bf16.msra.mxu0 %v2473
    %2626 = vmatpush.bf16.msra.mxu0 %v2472
    %2627 = vmatpush.bf16.msra.mxu0 %v2471
    %2628 = vmatpush.bf16.msra.mxu0 %v2470
    %2629 = vmatpush.bf16.msra.mxu0 %v2469
    %2630 = vmatpush.bf16.msra.mxu0 %v2468
    %2631 = vmatmul.bf16.gmra.mxu0 %v2011
    %v2632 = vpop.f32.mrf.mxu0
    %v2633 = vadd.f32 %v2614, %v2632
    %v2634 = vpop.f32.mrf.mxu0
    %v2635 = vadd.f32 %v2616, %v2634
    %2636 = vmatmul.bf16.gmra.mxu0 %v2020
    %v2637 = vpop.f32.mrf.mxu0
    %v2638 = vadd.f32 %v2619, %v2637
    %v2639 = vpop.f32.mrf.mxu0
    %v2640 = vadd.f32 %v2621, %v2639
    %2641 = vdwg.mxu0
    %2642 = vmatpush.bf16.msra.mxu0 %v2483
    %2643 = vmatpush.bf16.msra.mxu0 %v2482
    %2644 = vmatpush.bf16.msra.mxu0 %v2481
    %2645 = vmatpush.bf16.msra.mxu0 %v2480
    %2646 = vmatpush.bf16.msra.mxu0 %v2479
    %2647 = vmatpush.bf16.msra.mxu0 %v2478
    %2648 = vmatpush.bf16.msra.mxu0 %v2477
    %2649 = vmatpush.bf16.msra.mxu0 %v2476
    %2650 = vmatmul.bf16.gmra.mxu0 %v2012
    %v2651 = vpop.f32.mrf.mxu0
    %v2652 = vadd.f32 %v2633, %v2651
    %v2653 = vpop.f32.mrf.mxu0
    %v2654 = vadd.f32 %v2635, %v2653
    %2655 = vmatmul.bf16.gmra.mxu0 %v2021
    %v2656 = vpop.f32.mrf.mxu0
    %v2657 = vadd.f32 %v2638, %v2656
    %v2658 = vpop.f32.mrf.mxu0
    %v2659 = vadd.f32 %v2640, %v2658
    %2660 = vdwg.mxu0
    %2661 = vmatpush.bf16.msra.mxu0 %v2491
    %2662 = vmatpush.bf16.msra.mxu0 %v2490
    %2663 = vmatpush.bf16.msra.mxu0 %v2489
    %2664 = vmatpush.bf16.msra.mxu0 %v2488
    %2665 = vmatpush.bf16.msra.mxu0 %v2487
    %2666 = vmatpush.bf16.msra.mxu0 %v2486
    %2667 = vmatpush.bf16.msra.mxu0 %v2485
    %2668 = vmatpush.bf16.msra.mxu0 %v2484
    %2669 = vmatmul.bf16.gmra.mxu0 %v2013
    %v2670 = vpop.f32.mrf.mxu0
    %v2671 = vadd.f32 %v2652, %v2670
    %v2672 = vpop.f32.mrf.mxu0
    %v2673 = vadd.f32 %v2654, %v2672
    %2674 = vmatmul.bf16.gmra.mxu0 %v2022
    %v2675 = vpop.f32.mrf.mxu0
    %v2676 = vadd.f32 %v2657, %v2675
    %v2677 = vpop.f32.mrf.mxu0
    %v2678 = vadd.f32 %v2659, %v2677
    %2679 = vdwg.mxu0
    %2680 = vmatpush.bf16.msra.mxu0 %v2499
    %2681 = vmatpush.bf16.msra.mxu0 %v2498
    %2682 = vmatpush.bf16.msra.mxu0 %v2497
    %2683 = vmatpush.bf16.msra.mxu0 %v2496
    %2684 = vmatpush.bf16.msra.mxu0 %v2495
    %2685 = vmatpush.bf16.msra.mxu0 %v2494
    %2686 = vmatpush.bf16.msra.mxu0 %v2493
    %2687 = vmatpush.bf16.msra.mxu0 %v2492
    %2688 = vmatmul.bf16.gmra.mxu0 %v2014
    %v2689 = vpop.f32.mrf.mxu0
    %v2690 = vadd.f32 %v2671, %v2689
    %v2691 = vpop.f32.mrf.mxu0
    %v2692 = vadd.f32 %v2673, %v2691
    %2693 = vmatmul.bf16.gmra.mxu0 %v2023
    %v2694 = vpop.f32.mrf.mxu0
    %v2695 = vadd.f32 %v2676, %v2694
    %v2696 = vpop.f32.mrf.mxu0
    %v2697 = vadd.f32 %v2678, %v2696
    %2698 = vdwg.mxu0
    %2699 = vmatpush.bf16.msra.mxu0 %v2507
    %2700 = vmatpush.bf16.msra.mxu0 %v2506
    %2701 = vmatpush.bf16.msra.mxu0 %v2505
    %2702 = vmatpush.bf16.msra.mxu0 %v2504
    %2703 = vmatpush.bf16.msra.mxu0 %v2503
    %2704 = vmatpush.bf16.msra.mxu0 %v2502
    %2705 = vmatpush.bf16.msra.mxu0 %v2501
    %2706 = vmatpush.bf16.msra.mxu0 %v2500
    %2707 = vmatmul.bf16.gmra.mxu0 %v2015
    %v2708 = vpop.f32.mrf.mxu0
    %v2709 = vadd.f32 %v2690, %v2708
    %v2710 = vpop.f32.mrf.mxu0
    %v2711 = vadd.f32 %v2692, %v2710
    %2712 = vmatmul.bf16.gmra.mxu0 %v2024
    %v2713 = vpop.f32.mrf.mxu0
    %v2714 = vadd.f32 %v2695, %v2713
    %v2715 = vpop.f32.mrf.mxu0
    %v2716 = vadd.f32 %v2697, %v2715
    %2717 = vdwg.mxu0
    %2718 = vmatpush.bf16.msra.mxu0 %v2515
    %2719 = vmatpush.bf16.msra.mxu0 %v2514
    %2720 = vmatpush.bf16.msra.mxu0 %v2513
    %2721 = vmatpush.bf16.msra.mxu0 %v2512
    %2722 = vmatpush.bf16.msra.mxu0 %v2511
    %2723 = vmatpush.bf16.msra.mxu0 %v2510
    %2724 = vmatpush.bf16.msra.mxu0 %v2509
    %2725 = vmatpush.bf16.msra.mxu0 %v2508
    %2726 = vmatmul.bf16.gmra.mxu0 %v2016
    %v2727 = vpop.f32.mrf.mxu0
    %v2728 = vadd.f32 %v2709, %v2727
    %v2729 = vpop.f32.mrf.mxu0
    %v2730 = vadd.f32 %v2711, %v2729
    %2731 = vmatmul.bf16.gmra.mxu0 %v2025
    %v2732 = vpop.f32.mrf.mxu0
    %v2733 = vadd.f32 %v2714, %v2732
    %v2734 = vpop.f32.mrf.mxu0
    %v2735 = vadd.f32 %v2716, %v2734
    %2736 = vdwg.mxu0
    %2737 = vmatpush.bf16.msra.mxu0 %v2523
    %2738 = vmatpush.bf16.msra.mxu0 %v2522
    %2739 = vmatpush.bf16.msra.mxu0 %v2521
    %2740 = vmatpush.bf16.msra.mxu0 %v2520
    %2741 = vmatpush.bf16.msra.mxu0 %v2519
    %2742 = vmatpush.bf16.msra.mxu0 %v2518
    %2743 = vmatpush.bf16.msra.mxu0 %v2517
    %2744 = vmatpush.bf16.msra.mxu0 %v2516
    %2745 = vmatmul.bf16.gmra.mxu0 %v2017
    %v2746 = vpop.f32.mrf.mxu0
    %v2747 = vadd.f32 %v2728, %v2746
    %v2748 = vpop.f32.mrf.mxu0
    %v2749 = vadd.f32 %v2730, %v2748
    %2750 = vmatmul.bf16.gmra.mxu0 %v2026
    %v2751 = vpop.f32.mrf.mxu0
    %v2752 = vadd.f32 %v2733, %v2751
    %v2753 = vpop.f32.mrf.mxu0
    %v2754 = vadd.f32 %v2735, %v2753
    %2755 = vdwg.mxu0
    %2756 = vmatpush.bf16.msra.mxu0 %v2531
    %2757 = vmatpush.bf16.msra.mxu0 %v2530
    %2758 = vmatpush.bf16.msra.mxu0 %v2529
    %2759 = vmatpush.bf16.msra.mxu0 %v2528
    %2760 = vmatpush.bf16.msra.mxu0 %v2527
    %2761 = vmatpush.bf16.msra.mxu0 %v2526
    %2762 = vmatpush.bf16.msra.mxu0 %v2525
    %2763 = vmatpush.bf16.msra.mxu0 %v2524
    %2764 = vmatmul.bf16.gmra.mxu0 %v2018
    %v2765 = vpop.f32.mrf.mxu0
    %v2766 = vadd.f32 %v2747, %v2765
    %v2767 = vpop.f32.mrf.mxu0
    %v2768 = vadd.f32 %v2749, %v2767
    %2769 = vmatmul.bf16.gmra.mxu0 %v2027
    %v2770 = vpop.f32.mrf.mxu0
    %v2771 = vadd.f32 %v2752, %v2770
    %v2772 = vpop.f32.mrf.mxu0
    %v2773 = vadd.f32 %v2754, %v2772
    %2774 = vdwg.mxu0
    %v2775 = vadd.f32 %v2766, %v2768
    %v2776 = vadd.f32 %v2775, %v2771
    %v2777 = vadd.f32 %v2776, %v2773
    %v2778 = vrot.slane %v2777, 4
    %v2779 = vadd.f32 %v2777, %v2778
    %v2780 = vrot.slane %v2779, 2
    %v2781 = vadd.f32 %v2779, %v2780
    %v2782 = vrot.slane %v2781, 1
    %v2783 = vadd.f32 %v2781, %v2782
    %v2784 = vrcp.pop 32.0
    %v2785 = vmul.f32 32.0, %v2784
    %v2786 = vsub.f32 1.0, %v2785
    %v2787 = vmul.f32 %v2784, %v2786
    %v2788 = vadd.f32 %v2784, %v2787
    %vm2789 = vweird.f32 %v2784
    %v2790 = vsel %vm2789, %v2784, %v2788
    %v2791 = vmul.f32 %v2783, %v2790
    %v2792 = vsub.f32 %v2766, %v2791
    %v2793 = vsub.f32 %v2768, %v2791
    %v2794 = vsub.f32 %v2771, %v2791
    %v2795 = vsub.f32 %v2773, %v2791
    %v2796 = vmul.f32 %v2792, %v2792
    %v2797 = vmul.f32 %v2793, %v2793
    %v2798 = vmul.f32 %v2794, %v2794
    %v2799 = vmul.f32 %v2795, %v2795
    %v2800 = vadd.f32 %v2796, %v2797
    %v2801 = vadd.f32 %v2800, %v2798
    %v2802 = vadd.f32 %v2801, %v2799
    %v2803 = vrot.slane %v2802, 4
    %v2804 = vadd.f32 %v2802, %v2803
    %v2805 = vrot.slane %v2804, 2
    %v2806 = vadd.f32 %v2804, %v2805
    %v2807 = vrot.slane %v2806, 1
    %v2808 = vadd.f32 %v2806, %v2807
    %v2809 = vmul.f32 %v2808, %v2790
    %v2810 = vadd.f32 %v2809, 1e-05
    %v2811 = vrsqrt.pop %v2810
    %v2812 = vmul.f32 %v2811, %v2810
    %v2813 = vmul.f32 %v2812, %v2811
    %v2814 = vmul.f32 0.5, %v2813
    %v2815 = vsub.f32 1.5, %v2814
    %v2816 = vmul.f32 %v2811, %v2815
    %vm2817 = vweird.f32 %v2810
    %vm2818 = vweird.f32 %v2811
    %vm2819 = vmor %vm2817, %vm2818
    %v2820 = vsel %vm2819, %v2811, %v2816
    %v2821 = vmul.f32 %v2792, %v2820
    %v2822 = vmul.f32 %v2793, %v2820
    %v2823 = vmul.f32 %v2794, %v2820
    %v2824 = vmul.f32 %v2795, %v2820
    %v2825 = vld [vmem:[%s8] sm:$0x1]
    %v2827 = vperm.slane %v2825, 0
    %v2829 = vmul.f32 %v2821, %v2827
    %v2830 = vmul.f32 %v2822, %v2827
    %v2831 = vmul.f32 %v2823, %v2827
    %v2832 = vmul.f32 %v2824, %v2827
    %v2833 = vld [vmem:[%s9] sm:$0x1]
    %v2835 = vperm.slane %v2833, 0
    %v2837 = vadd.f32 %v2829, %v2835
    %v2838 = vadd.f32 %v2830, %v2835
    %v2839 = vadd.f32 %v2831, %v2835
    %v2840 = vadd.f32 %v2832, %v2835
    %v2841 = vmax.f32 %v2837, 0.0
    %v2842 = vmax.f32 %v2838, 0.0
    %v2843 = vmax.f32 %v2839, 0.0
    %v2844 = vmax.f32 %v2840, 0.0
    %v2845 = vrot.slane %v2841, 1
    %v2846 = vrot.slane %v2842, 1
    %v2847 = vrot.slane %v2843, 1
    %v2848 = vrot.slane %v2844, 1
    %v2849 = vsel %vm228, %v2847, %v2848
    %v2850 = vsel %vm228, %v2846, %v2847
    %v2851 = vsel %vm228, %v2845, %v2846
    %v2852 = vsel %vm228, %v2848, %v2845
    %v2853 = vmax.f32 %v2841, %v2851
    %v2854 = vmax.f32 %v2842, %v2850
    %v2855 = vmax.f32 %v2843, %v2849
    %v2856 = vmax.f32 %v2844, %v2852
    %v2857 = vrot.slane %v2853, 4
    %v2858 = vrot.slane %v2854, 4
    %v2859 = vrot.slane %v2855, 4
    %v2860 = vrot.slane %v2856, 4
    %v2861 = vsel %vm1908, %v2859, %v2860
    %v2862 = vsel %vm1908, %v2858, %v2859
    %v2863 = vsel %vm1908, %v2857, %v2858
    %v2864 = vsel %vm1908, %v2860, %v2857
    %v2865 = vmax.f32 %v2853, %v2863
    %v2866 = vmax.f32 %v2854, %v2862
    %v2867 = vmax.f32 %v2855, %v2861
    %v2868 = vmax.f32 %v2856, %v2864
    %v2869 = vld [vmem:[%s10] sm:$0xf]
    %v2870 = vpack.c.bf16 %v2866, %v2865
    %v2871 = vpack.c.bf16 %v2868, %v2867
    %vm2872 = vcmask 261120
    %v2874 = vsel %vm2872, %v2869, 0
    %2876 = vmatpush.bf16.msra.mxu0 0
    %2877 = vmatpush.bf16.msra.mxu0 0
    %2878 = vmatpush.bf16.msra.mxu0 0
    %2879 = vmatpush.bf16.msra.mxu0 0
    %2880 = vmatpush.bf16.msra.mxu0 0
    %2881 = vmatpush.bf16.msra.mxu0 0
    %2882 = vmatpush.bf16.msra.mxu0 %v2871
    %2883 = vmatpush.bf16.msra.mxu0 %v2870
    %2884 = vmatmul.bf16.gmra.mxu0 %v2874
    %v2885 = vpop.f32.mrf.mxu0
    %v2886 = vadd.f32 0.0, %v2885
    %v2887 = vpop.f32.mrf.mxu0
    %2888 = vdwg.mxu0
    %v2889 = vrot.slane %v2886, 5
    %v2890 = vrot.slane %v2886, 6
    %v2891 = vrot.slane %v2886, 7
    %v2892 = vrot.slane %v2886, 1
    %v2893 = vrot.slane %v2886, 2
    %v2894 = vrot.slane %v2886, 3
    %v2895 = vld [vmem:[%s11] sm:$0xff]
    %v2896 = vld [vmem:[%s11 + $0x8] sm:$0xff]
    %v2897 = vld [vmem:[%s11 + $0x10] sm:$0xff]
    %v2898 = vld [vmem:[%s11 + $0x18] sm:$0xff]
    %v2899 = vld [vmem:[%s11 + $0x20] sm:$0xff]
    %v2900 = vld [vmem:[%s11 + $0x28] sm:$0xff]
    %v2901 = vld [vmem:[%s11 + $0x30] sm:$0xff]
    %v2902 = vld [vmem:[%s11 + $0x38] sm:$0xff]
    %v2903 = vld [vmem:[%s11 + $0x40] sm:$0xff]
    %v2904 = vmul.f32 %v2889, %v2895
    %v2905 = vmul.f32 %v2890, %v2896
    %v2906 = vmul.f32 %v2891, %v2897
    %v2907 = vmul.f32 %v2891, %v2898
    %v2908 = vmul.f32 %v2886, %v2899
    %v2909 = vmul.f32 %v2892, %v2900
    %v2910 = vmul.f32 %v2892, %v2901
    %v2911 = vmul.f32 %v2893, %v2902
    %v2912 = vmul.f32 %v2894, %v2903
    %v2913 = vpack.c.bf16 %v2904, %v2904
    %v2914 = vpack.c.bf16 %v2905, %v2905
    %v2915 = vpack.c.bf16 %v2906, %v2906
    %v2916 = vpack.c.bf16 %v2907, %v2907
    %v2917 = vpack.c.bf16 %v2908, %v2908
    %v2918 = vpack.c.bf16 %v2909, %v2909
    %v2919 = vpack.c.bf16 %v2910, %v2910
    %v2920 = vpack.c.bf16 %v2911, %v2911
    %v2921 = vpack.c.bf16 %v2912, %v2912
    %v2922 = vld [vmem:[#allocation8] sm:$0xf]
    %v2923 = vld [vmem:[#allocation8 + $0x4] sm:$0xf]
    %v2924 = vld [vmem:[#allocation8 + $0x8] sm:$0xf]
    %v2925 = vld [vmem:[#allocation8 + $0xc] sm:$0xf]
    %v2926 = vld [vmem:[#allocation8 + $0x10] sm:$0xf]
    %v2927 = vld [vmem:[#allocation8 + $0x14] sm:$0xf]
    %v2928 = vld [vmem:[#allocation8 + $0x18] sm:$0xf]
    %v2929 = vld [vmem:[#allocation8 + $0x1c] sm:$0xf]
    %v2930 = vld [vmem:[#allocation8 + $0x20] sm:$0xf]
    %v2931 = vld [vmem:[#allocation8 + $0x24] sm:$0xf]
    %v2932 = vld [vmem:[#allocation8 + $0x28] sm:$0xf]
    %v2933 = vld [vmem:[#allocation8 + $0x2c] sm:$0xf]
    %v2934 = vld [vmem:[#allocation8 + $0x30] sm:$0xf]
    %v2935 = vld [vmem:[#allocation8 + $0x34] sm:$0xf]
    %v2936 = vld [vmem:[#allocation8 + $0x38] sm:$0xf]
    %v2937 = vld [vmem:[#allocation8 + $0x3c] sm:$0xf]
    %v2938 = vld [vmem:[#allocation8 + $0x40] sm:$0xf]
    %v2939 = vld [vmem:[#allocation8 + $0x44] sm:$0xf]
    %v2940 = vld [vmem:[#allocation8 + $0x48] sm:$0xf]
    %v2941 = vld [vmem:[#allocation8 + $0x4c] sm:$0xf]
    %v2942 = vld [vmem:[#allocation8 + $0x50] sm:$0xf]
    %v2943 = vld [vmem:[#allocation8 + $0x54] sm:$0xf]
    %v2944 = vld [vmem:[#allocation8 + $0x58] sm:$0xf]
    %v2945 = vld [vmem:[#allocation8 + $0x5c] sm:$0xf]
    %v2946 = vld [vmem:[#allocation8 + $0x60] sm:$0xf]
    %v2947 = vld [vmem:[#allocation8 + $0x64] sm:$0xf]
    %v2948 = vld [vmem:[#allocation8 + $0x68] sm:$0xf]
    %v2949 = vld [vmem:[#allocation8 + $0x6c] sm:$0xf]
    %v2950 = vld [vmem:[#allocation8 + $0x70] sm:$0xf]
    %v2951 = vld [vmem:[#allocation8 + $0x74] sm:$0xf]
    %v2952 = vld [vmem:[#allocation8 + $0x78] sm:$0xf]
    %v2953 = vld [vmem:[#allocation8 + $0x7c] sm:$0xf]
    %v2954 = vld [vmem:[#allocation8 + $0x80] sm:$0xf]
    %v2955 = vld [vmem:[#allocation8 + $0x84] sm:$0xf]
    %v2956 = vld [vmem:[#allocation8 + $0x88] sm:$0xf]
    %v2957 = vld [vmem:[#allocation8 + $0x8c] sm:$0xf]
    %v2958 = vld [vmem:[#allocation8 + $0x90] sm:$0xf]
    %v2959 = vld [vmem:[#allocation8 + $0x94] sm:$0xf]
    %v2960 = vld [vmem:[#allocation8 + $0x98] sm:$0xf]
    %v2961 = vld [vmem:[#allocation8 + $0x9c] sm:$0xf]
    %v2962 = vld [vmem:[#allocation8 + $0xa0] sm:$0xf]
    %v2963 = vld [vmem:[#allocation8 + $0xa4] sm:$0xf]
    %v2964 = vld [vmem:[#allocation8 + $0xa8] sm:$0xf]
    %v2965 = vld [vmem:[#allocation8 + $0xac] sm:$0xf]
    %v2966 = vld [vmem:[#allocation8 + $0xb0] sm:$0xf]
    %v2967 = vld [vmem:[#allocation8 + $0xb4] sm:$0xf]
    %v2968 = vld [vmem:[#allocation8 + $0xb8] sm:$0xf]
    %v2969 = vld [vmem:[#allocation8 + $0xbc] sm:$0xf]
    %v2970 = vld [vmem:[#allocation8 + $0xc0] sm:$0xf]
    %v2971 = vld [vmem:[#allocation8 + $0xc4] sm:$0xf]
    %v2972 = vld [vmem:[#allocation8 + $0xc8] sm:$0xf]
    %v2973 = vld [vmem:[#allocation8 + $0xcc] sm:$0xf]
    %v2974 = vld [vmem:[#allocation8 + $0xd0] sm:$0xf]
    %v2975 = vld [vmem:[#allocation8 + $0xd4] sm:$0xf]
    %v2976 = vld [vmem:[#allocation8 + $0xd8] sm:$0xf]
    %v2977 = vld [vmem:[#allocation8 + $0xdc] sm:$0xf]
    %v2978 = vld [vmem:[#allocation8 + $0xe0] sm:$0xf]
    %v2979 = vld [vmem:[#allocation8 + $0xe4] sm:$0xf]
    %v2980 = vld [vmem:[#allocation8 + $0xe8] sm:$0xf]
    %v2981 = vld [vmem:[#allocation8 + $0xec] sm:$0xf]
    %v2982 = vld [vmem:[#allocation8 + $0xf0] sm:$0xf]
    %v2983 = vld [vmem:[#allocation8 + $0xf4] sm:$0xf]
    %v2984 = vld [vmem:[#allocation8 + $0xf8] sm:$0xf]
    %v2985 = vld [vmem:[#allocation8 + $0xfc] sm:$0xf]
    %v2986 = vld [vmem:[#allocation8 + $0x100] sm:$0xf]
    %v2987 = vld [vmem:[#allocation8 + $0x104] sm:$0xf]
    %v2988 = vld [vmem:[#allocation8 + $0x108] sm:$0xf]
    %v2989 = vld [vmem:[#allocation8 + $0x10c] sm:$0xf]
    %v2990 = vld [vmem:[#allocation8 + $0x110] sm:$0xf]
    %v2991 = vld [vmem:[#allocation8 + $0x114] sm:$0xf]
    %v2992 = vld [vmem:[#allocation8 + $0x118] sm:$0xf]
    %v2993 = vld [vmem:[#allocation8 + $0x11c] sm:$0xf]
    %v2994 = vld [vmem:[#allocation8 + $0x120] sm:$0xf]
    %v2995 = vld [vmem:[#allocation8 + $0x124] sm:$0xf]
    %v2996 = vld [vmem:[#allocation8 + $0x128] sm:$0xf]
    %v2997 = vld [vmem:[#allocation8 + $0x12c] sm:$0xf]
    %v2998 = vld [vmem:[#allocation8 + $0x130] sm:$0xf]
    %v2999 = vld [vmem:[#allocation8 + $0x134] sm:$0xf]
    %v3000 = vld [vmem:[#allocation8 + $0x138] sm:$0xf]
    %v3001 = vld [vmem:[#allocation8 + $0x13c] sm:$0xf]
    %v3002 = vld [vmem:[#allocation8 + $0x140] sm:$0xf]
    %v3003 = vld [vmem:[#allocation8 + $0x144] sm:$0xf]
    %v3004 = vld [vmem:[#allocation8 + $0x148] sm:$0xf]
    %v3005 = vld [vmem:[#allocation8 + $0x14c] sm:$0xf]
    %v3006 = vld [vmem:[#allocation8 + $0x150] sm:$0xf]
    %v3007 = vld [vmem:[#allocation8 + $0x154] sm:$0xf]
    %v3008 = vld [vmem:[#allocation8 + $0x158] sm:$0xf]
    %v3009 = vld [vmem:[#allocation8 + $0x15c] sm:$0xf]
    %v3010 = vld [vmem:[#allocation8 + $0x160] sm:$0xf]
    %v3011 = vld [vmem:[#allocation8 + $0x164] sm:$0xf]
    %v3012 = vld [vmem:[#allocation8 + $0x168] sm:$0xf]
    %v3013 = vld [vmem:[#allocation8 + $0x16c] sm:$0xf]
    %v3014 = vld [vmem:[#allocation8 + $0x170] sm:$0xf]
    %v3015 = vld [vmem:[#allocation8 + $0x174] sm:$0xf]
    %v3016 = vld [vmem:[#allocation8 + $0x178] sm:$0xf]
    %v3017 = vld [vmem:[#allocation8 + $0x17c] sm:$0xf]
    %v3018 = vld [vmem:[#allocation8 + $0x180] sm:$0xf]
    %v3019 = vld [vmem:[#allocation8 + $0x184] sm:$0xf]
    %v3020 = vld [vmem:[#allocation8 + $0x188] sm:$0xf]
    %v3021 = vld [vmem:[#allocation8 + $0x18c] sm:$0xf]
    %v3022 = vld [vmem:[#allocation8 + $0x190] sm:$0xf]
    %v3023 = vld [vmem:[#allocation8 + $0x194] sm:$0xf]
    %v3024 = vld [vmem:[#allocation8 + $0x198] sm:$0xf]
    %v3025 = vld [vmem:[#allocation8 + $0x19c] sm:$0xf]
    %v3026 = vld [vmem:[#allocation8 + $0x1a0] sm:$0xf]
    %v3027 = vld [vmem:[#allocation8 + $0x1a4] sm:$0xf]
    %v3028 = vld [vmem:[#allocation8 + $0x1a8] sm:$0xf]
    %v3029 = vld [vmem:[#allocation8 + $0x1ac] sm:$0xf]
    %v3030 = vld [vmem:[#allocation8 + $0x1b0] sm:$0xf]
    %v3031 = vld [vmem:[#allocation8 + $0x1b4] sm:$0xf]
    %v3032 = vld [vmem:[#allocation8 + $0x1b8] sm:$0xf]
    %v3033 = vld [vmem:[#allocation8 + $0x1bc] sm:$0xf]
    %v3034 = vld [vmem:[#allocation8 + $0x1c0] sm:$0xf]
    %v3035 = vld [vmem:[#allocation8 + $0x1c4] sm:$0xf]
    %v3036 = vld [vmem:[#allocation8 + $0x1c8] sm:$0xf]
    %v3037 = vld [vmem:[#allocation8 + $0x1cc] sm:$0xf]
    %v3038 = vld [vmem:[#allocation8 + $0x1d0] sm:$0xf]
    %v3039 = vld [vmem:[#allocation8 + $0x1d4] sm:$0xf]
    %v3040 = vld [vmem:[#allocation8 + $0x1d8] sm:$0xf]
    %v3041 = vld [vmem:[#allocation8 + $0x1dc] sm:$0xf]
    %v3042 = vld [vmem:[#allocation8 + $0x1e0] sm:$0xf]
    %v3043 = vld [vmem:[#allocation8 + $0x1e4] sm:$0xf]
    %v3044 = vld [vmem:[#allocation8 + $0x1e8] sm:$0xf]
    %v3045 = vld [vmem:[#allocation8 + $0x1ec] sm:$0xf]
    %v3046 = vld [vmem:[#allocation8 + $0x1f0] sm:$0xf]
    %v3047 = vld [vmem:[#allocation8 + $0x1f4] sm:$0xf]
    %v3048 = vld [vmem:[#allocation8 + $0x1f8] sm:$0xf]
    %v3049 = vld [vmem:[#allocation8 + $0x1fc] sm:$0xf]
    %v3050 = vld [vmem:[#allocation8 + $0x200] sm:$0xf]
    %v3051 = vld [vmem:[#allocation8 + $0x204] sm:$0xf]
    %v3052 = vld [vmem:[#allocation8 + $0x208] sm:$0xf]
    %v3053 = vld [vmem:[#allocation8 + $0x20c] sm:$0xf]
    %v3054 = vld [vmem:[#allocation8 + $0x210] sm:$0xf]
    %v3055 = vld [vmem:[#allocation8 + $0x214] sm:$0xf]
    %v3056 = vld [vmem:[#allocation8 + $0x218] sm:$0xf]
    %v3057 = vld [vmem:[#allocation8 + $0x21c] sm:$0xf]
    %v3058 = vld [vmem:[#allocation8 + $0x220] sm:$0xf]
    %v3059 = vld [vmem:[#allocation8 + $0x224] sm:$0xf]
    %v3060 = vld [vmem:[#allocation8 + $0x228] sm:$0xf]
    %v3061 = vld [vmem:[#allocation8 + $0x22c] sm:$0xf]
    %v3062 = vld [vmem:[#allocation8 + $0x230] sm:$0xf]
    %v3063 = vld [vmem:[#allocation8 + $0x234] sm:$0xf]
    %v3064 = vld [vmem:[#allocation8 + $0x238] sm:$0xf]
    %v3065 = vld [vmem:[#allocation8 + $0x23c] sm:$0xf]
    %v3210 = vunpack.c.l.b16 %v2922
    %v3211 = vunpack.c.l.b16 %v2923
    %v3212 = vunpack.c.l.b16 %v2924
    %v3213 = vunpack.c.l.b16 %v2925
    %v3214 = vunpack.c.l.b16 %v2926
    %v3215 = vunpack.c.l.b16 %v2927
    %v3216 = vunpack.c.l.b16 %v2928
    %v3217 = vunpack.c.l.b16 %v2929
    %v3218 = vunpack.c.l.b16 %v2930
    %v3219 = vunpack.c.l.b16 %v2931
    %v3220 = vunpack.c.l.b16 %v2932
    %v3221 = vunpack.c.l.b16 %v2933
    %v3222 = vunpack.c.l.b16 %v2934
    %v3223 = vunpack.c.l.b16 %v2935
    %v3224 = vunpack.c.l.b16 %v2936
    %v3225 = vunpack.c.l.b16 %v2937
    %v3226 = vunpack.c.l.b16 %v2938
    %v3227 = vunpack.c.l.b16 %v2939
    %v3228 = vunpack.c.l.b16 %v2940
    %v3229 = vunpack.c.l.b16 %v2941
    %v3230 = vunpack.c.l.b16 %v2942
    %v3231 = vunpack.c.l.b16 %v2943
    %v3232 = vunpack.c.l.b16 %v2944
    %v3233 = vunpack.c.l.b16 %v2945
    %v3234 = vunpack.c.l.b16 %v2946
    %v3235 = vunpack.c.l.b16 %v2947
    %v3236 = vunpack.c.l.b16 %v2948
    %v3237 = vunpack.c.l.b16 %v2949
    %v3238 = vunpack.c.l.b16 %v2950
    %v3239 = vunpack.c.l.b16 %v2951
    %v3240 = vunpack.c.l.b16 %v2952
    %v3241 = vunpack.c.l.b16 %v2953
    %v3242 = vunpack.c.l.b16 %v2954
    %v3243 = vunpack.c.l.b16 %v2955
    %v3244 = vunpack.c.l.b16 %v2956
    %v3245 = vunpack.c.l.b16 %v2957
    %v3246 = vunpack.c.l.b16 %v2958
    %v3247 = vunpack.c.l.b16 %v2959
    %v3248 = vunpack.c.l.b16 %v2960
    %v3249 = vunpack.c.l.b16 %v2961
    %v3250 = vunpack.c.l.b16 %v2962
    %v3251 = vunpack.c.l.b16 %v2963
    %v3252 = vunpack.c.l.b16 %v2964
    %v3253 = vunpack.c.l.b16 %v2965
    %v3254 = vunpack.c.l.b16 %v2966
    %v3255 = vunpack.c.l.b16 %v2967
    %v3256 = vunpack.c.l.b16 %v2968
    %v3257 = vunpack.c.l.b16 %v2969
    %v3258 = vunpack.c.l.b16 %v2970
    %v3259 = vunpack.c.l.b16 %v2971
    %v3260 = vunpack.c.l.b16 %v2972
    %v3261 = vunpack.c.l.b16 %v2973
    %v3262 = vunpack.c.l.b16 %v2974
    %v3263 = vunpack.c.l.b16 %v2975
    %v3264 = vunpack.c.l.b16 %v2976
    %v3265 = vunpack.c.l.b16 %v2977
    %v3266 = vunpack.c.l.b16 %v2978
    %v3267 = vunpack.c.l.b16 %v2979
    %v3268 = vunpack.c.l.b16 %v2980
    %v3269 = vunpack.c.l.b16 %v2981
    %v3270 = vunpack.c.l.b16 %v2982
    %v3271 = vunpack.c.l.b16 %v2983
    %v3272 = vunpack.c.l.b16 %v2984
    %v3273 = vunpack.c.l.b16 %v2985
    %v3274 = vunpack.c.l.b16 %v2986
    %v3275 = vunpack.c.l.b16 %v2987
    %v3276 = vunpack.c.l.b16 %v2988
    %v3277 = vunpack.c.l.b16 %v2989
    %v3278 = vunpack.c.l.b16 %v2990
    %v3279 = vunpack.c.l.b16 %v2991
    %v3280 = vunpack.c.l.b16 %v2992
    %v3281 = vunpack.c.l.b16 %v2993
    %v3282 = vunpack.c.l.b16 %v2994
    %v3283 = vunpack.c.l.b16 %v2995
    %v3284 = vunpack.c.l.b16 %v2996
    %v3285 = vunpack.c.l.b16 %v2997
    %v3286 = vunpack.c.l.b16 %v2998
    %v3287 = vunpack.c.l.b16 %v2999
    %v3288 = vunpack.c.l.b16 %v3000
    %v3289 = vunpack.c.l.b16 %v3001
    %v3290 = vunpack.c.l.b16 %v3002
    %v3291 = vunpack.c.l.b16 %v3003
    %v3292 = vunpack.c.l.b16 %v3004
    %v3293 = vunpack.c.l.b16 %v3005
    %v3294 = vunpack.c.l.b16 %v3006
    %v3295 = vunpack.c.l.b16 %v3007
    %v3296 = vunpack.c.l.b16 %v3008
    %v3297 = vunpack.c.l.b16 %v3009
    %v3298 = vunpack.c.l.b16 %v3010
    %v3299 = vunpack.c.l.b16 %v3011
    %v3300 = vunpack.c.l.b16 %v3012
    %v3301 = vunpack.c.l.b16 %v3013
    %v3302 = vunpack.c.l.b16 %v3014
    %v3303 = vunpack.c.l.b16 %v3015
    %v3304 = vunpack.c.l.b16 %v3016
    %v3305 = vunpack.c.l.b16 %v3017
    %v3306 = vunpack.c.l.b16 %v3018
    %v3307 = vunpack.c.l.b16 %v3019
    %v3308 = vunpack.c.l.b16 %v3020
    %v3309 = vunpack.c.l.b16 %v3021
    %v3310 = vunpack.c.l.b16 %v3022
    %v3311 = vunpack.c.l.b16 %v3023
    %v3312 = vunpack.c.l.b16 %v3024
    %v3313 = vunpack.c.l.b16 %v3025
    %v3314 = vunpack.c.l.b16 %v3026
    %v3315 = vunpack.c.l.b16 %v3027
    %v3316 = vunpack.c.l.b16 %v3028
    %v3317 = vunpack.c.l.b16 %v3029
    %v3318 = vunpack.c.l.b16 %v3030
    %v3319 = vunpack.c.l.b16 %v3031
    %v3320 = vunpack.c.l.b16 %v3032
    %v3321 = vunpack.c.l.b16 %v3033
    %v3322 = vunpack.c.l.b16 %v3034
    %v3323 = vunpack.c.l.b16 %v3035
    %v3324 = vunpack.c.l.b16 %v3036
    %v3325 = vunpack.c.l.b16 %v3037
    %v3326 = vunpack.c.l.b16 %v3038
    %v3327 = vunpack.c.l.b16 %v3039
    %v3328 = vunpack.c.l.b16 %v3040
    %v3329 = vunpack.c.l.b16 %v3041
    %v3330 = vunpack.c.l.b16 %v3042
    %v3331 = vunpack.c.l.b16 %v3043
    %v3332 = vunpack.c.l.b16 %v3044
    %v3333 = vunpack.c.l.b16 %v3045
    %v3334 = vunpack.c.l.b16 %v3046
    %v3335 = vunpack.c.l.b16 %v3047
    %v3336 = vunpack.c.l.b16 %v3048
    %v3337 = vunpack.c.l.b16 %v3049
    %v3338 = vunpack.c.l.b16 %v3050
    %v3339 = vunpack.c.l.b16 %v3051
    %v3340 = vunpack.c.l.b16 %v3052
    %v3341 = vunpack.c.l.b16 %v3053
    %v3342 = vunpack.c.l.b16 %v3054
    %v3343 = vunpack.c.l.b16 %v3055
    %v3344 = vunpack.c.l.b16 %v3056
    %v3345 = vunpack.c.l.b16 %v3057
    %v3346 = vunpack.c.l.b16 %v3058
    %v3347 = vunpack.c.l.b16 %v3059
    %v3348 = vunpack.c.l.b16 %v3060
    %v3349 = vunpack.c.l.b16 %v3061
    %v3350 = vunpack.c.l.b16 %v3062
    %v3351 = vunpack.c.l.b16 %v3063
    %v3352 = vunpack.c.l.b16 %v3064
    %v3353 = vunpack.c.l.b16 %v3065
    %v3354 = vpack.c.b16 %v3211, %v3210
    %v3355 = vpack.c.b16 %v3213, %v3212
    %v3356 = vpack.c.b16 %v3215, %v3214
    %v3357 = vpack.c.b16 %v3217, %v3216
    %v3358 = vpack.c.b16 %v3219, %v3218
    %v3359 = vpack.c.b16 %v3221, %v3220
    %v3360 = vpack.c.b16 %v3223, %v3222
    %v3361 = vpack.c.b16 %v3225, %v3224
    %v3362 = vpack.c.b16 %v3227, %v3226
    %v3363 = vpack.c.b16 %v3229, %v3228
    %v3364 = vpack.c.b16 %v3231, %v3230
    %v3365 = vpack.c.b16 %v3233, %v3232
    %v3366 = vpack.c.b16 %v3235, %v3234
    %v3367 = vpack.c.b16 %v3237, %v3236
    %v3368 = vpack.c.b16 %v3239, %v3238
    %v3369 = vpack.c.b16 %v3241, %v3240
    %v3370 = vpack.c.b16 %v3243, %v3242
    %v3371 = vpack.c.b16 %v3245, %v3244
    %v3372 = vpack.c.b16 %v3247, %v3246
    %v3373 = vpack.c.b16 %v3249, %v3248
    %v3374 = vpack.c.b16 %v3251, %v3250
    %v3375 = vpack.c.b16 %v3253, %v3252
    %v3376 = vpack.c.b16 %v3255, %v3254
    %v3377 = vpack.c.b16 %v3257, %v3256
    %v3378 = vpack.c.b16 %v3259, %v3258
    %v3379 = vpack.c.b16 %v3261, %v3260
    %v3380 = vpack.c.b16 %v3263, %v3262
    %v3381 = vpack.c.b16 %v3265, %v3264
    %v3382 = vpack.c.b16 %v3267, %v3266
    %v3383 = vpack.c.b16 %v3269, %v3268
    %v3384 = vpack.c.b16 %v3271, %v3270
    %v3385 = vpack.c.b16 %v3273, %v3272
    %v3386 = vpack.c.b16 %v3275, %v3274
    %v3387 = vpack.c.b16 %v3277, %v3276
    %v3388 = vpack.c.b16 %v3279, %v3278
    %v3389 = vpack.c.b16 %v3281, %v3280
    %v3390 = vpack.c.b16 %v3283, %v3282
    %v3391 = vpack.c.b16 %v3285, %v3284
    %v3392 = vpack.c.b16 %v3287, %v3286
    %v3393 = vpack.c.b16 %v3289, %v3288
    %v3394 = vpack.c.b16 %v3291, %v3290
    %v3395 = vpack.c.b16 %v3293, %v3292
    %v3396 = vpack.c.b16 %v3295, %v3294
    %v3397 = vpack.c.b16 %v3297, %v3296
    %v3398 = vpack.c.b16 %v3299, %v3298
    %v3399 = vpack.c.b16 %v3301, %v3300
    %v3400 = vpack.c.b16 %v3303, %v3302
    %v3401 = vpack.c.b16 %v3305, %v3304
    %v3402 = vpack.c.b16 %v3307, %v3306
    %v3403 = vpack.c.b16 %v3309, %v3308
    %v3404 = vpack.c.b16 %v3311, %v3310
    %v3405 = vpack.c.b16 %v3313, %v3312
    %v3406 = vpack.c.b16 %v3315, %v3314
    %v3407 = vpack.c.b16 %v3317, %v3316
    %v3408 = vpack.c.b16 %v3319, %v3318
    %v3409 = vpack.c.b16 %v3321, %v3320
    %v3410 = vpack.c.b16 %v3323, %v3322
    %v3411 = vpack.c.b16 %v3325, %v3324
    %v3412 = vpack.c.b16 %v3327, %v3326
    %v3413 = vpack.c.b16 %v3329, %v3328
    %v3414 = vpack.c.b16 %v3331, %v3330
    %v3415 = vpack.c.b16 %v3333, %v3332
    %v3416 = vpack.c.b16 %v3335, %v3334
    %v3417 = vpack.c.b16 %v3337, %v3336
    %v3418 = vpack.c.b16 %v3339, %v3338
    %v3419 = vpack.c.b16 %v3341, %v3340
    %v3420 = vpack.c.b16 %v3343, %v3342
    %v3421 = vpack.c.b16 %v3345, %v3344
    %v3422 = vpack.c.b16 %v3347, %v3346
    %v3423 = vpack.c.b16 %v3349, %v3348
    %v3424 = vpack.c.b16 %v3351, %v3350
    %v3425 = vpack.c.b16 %v3353, %v3352
    %3498 = vmatpush.bf16.msra.mxu0 %v3361
    %3499 = vmatpush.bf16.msra.mxu0 %v3360
    %3500 = vmatpush.bf16.msra.mxu0 %v3359
    %3501 = vmatpush.bf16.msra.mxu0 %v3358
    %3502 = vmatpush.bf16.msra.mxu0 %v3357
    %3503 = vmatpush.bf16.msra.mxu0 %v3356
    %3504 = vmatpush.bf16.msra.mxu0 %v3355
    %3505 = vmatpush.bf16.msra.mxu0 %v3354
    %3506 = vmatmul.bf16.gmra.mxu0 %v2913
    %v3507 = vpop.f32.mrf.mxu0
    %v3508 = vadd.f32 0.0, %v3507
    %v3509 = vpop.f32.mrf.mxu0
    %3510 = vdwg.mxu0
    %3511 = vmatpush.bf16.msra.mxu0 %v3369
    %3512 = vmatpush.bf16.msra.mxu0 %v3368
    %3513 = vmatpush.bf16.msra.mxu0 %v3367
    %3514 = vmatpush.bf16.msra.mxu0 %v3366
    %3515 = vmatpush.bf16.msra.mxu0 %v3365
    %3516 = vmatpush.bf16.msra.mxu0 %v3364
    %3517 = vmatpush.bf16.msra.mxu0 %v3363
    %3518 = vmatpush.bf16.msra.mxu0 %v3362
    %3519 = vmatmul.bf16.gmra.mxu0 %v2914
    %v3520 = vpop.f32.mrf.mxu0
    %v3521 = vadd.f32 %v3508, %v3520
    %v3522 = vpop.f32.mrf.mxu0
    %3523 = vdwg.mxu0
    %3524 = vmatpush.bf16.msra.mxu0 %v3377
    %3525 = vmatpush.bf16.msra.mxu0 %v3376
    %3526 = vmatpush.bf16.msra.mxu0 %v3375
    %3527 = vmatpush.bf16.msra.mxu0 %v3374
    %3528 = vmatpush.bf16.msra.mxu0 %v3373
    %3529 = vmatpush.bf16.msra.mxu0 %v3372
    %3530 = vmatpush.bf16.msra.mxu0 %v3371
    %3531 = vmatpush.bf16.msra.mxu0 %v3370
    %3532 = vmatmul.bf16.gmra.mxu0 %v2915
    %v3533 = vpop.f32.mrf.mxu0
    %v3534 = vadd.f32 %v3521, %v3533
    %v3535 = vpop.f32.mrf.mxu0
    %3536 = vdwg.mxu0
    %3537 = vmatpush.bf16.msra.mxu0 %v3385
    %3538 = vmatpush.bf16.msra.mxu0 %v3384
    %3539 = vmatpush.bf16.msra.mxu0 %v3383
    %3540 = vmatpush.bf16.msra.mxu0 %v3382
    %3541 = vmatpush.bf16.msra.mxu0 %v3381
    %3542 = vmatpush.bf16.msra.mxu0 %v3380
    %3543 = vmatpush.bf16.msra.mxu0 %v3379
    %3544 = vmatpush.bf16.msra.mxu0 %v3378
    %3545 = vmatmul.bf16.gmra.mxu0 %v2916
    %v3546 = vpop.f32.mrf.mxu0
    %v3547 = vadd.f32 %v3534, %v3546
    %v3548 = vpop.f32.mrf.mxu0
    %3549 = vdwg.mxu0
    %3550 = vmatpush.bf16.msra.mxu0 %v3393
    %3551 = vmatpush.bf16.msra.mxu0 %v3392
    %3552 = vmatpush.bf16.msra.mxu0 %v3391
    %3553 = vmatpush.bf16.msra.mxu0 %v3390
    %3554 = vmatpush.bf16.msra.mxu0 %v3389
    %3555 = vmatpush.bf16.msra.mxu0 %v3388
    %3556 = vmatpush.bf16.msra.mxu0 %v3387
    %3557 = vmatpush.bf16.msra.mxu0 %v3386
    %3558 = vmatmul.bf16.gmra.mxu0 %v2917
    %v3559 = vpop.f32.mrf.mxu0
    %v3560 = vadd.f32 %v3547, %v3559
    %v3561 = vpop.f32.mrf.mxu0
    %3562 = vdwg.mxu0
    %3563 = vmatpush.bf16.msra.mxu0 %v3401
    %3564 = vmatpush.bf16.msra.mxu0 %v3400
    %3565 = vmatpush.bf16.msra.mxu0 %v3399
    %3566 = vmatpush.bf16.msra.mxu0 %v3398
    %3567 = vmatpush.bf16.msra.mxu0 %v3397
    %3568 = vmatpush.bf16.msra.mxu0 %v3396
    %3569 = vmatpush.bf16.msra.mxu0 %v3395
    %3570 = vmatpush.bf16.msra.mxu0 %v3394
    %3571 = vmatmul.bf16.gmra.mxu0 %v2918
    %v3572 = vpop.f32.mrf.mxu0
    %v3573 = vadd.f32 %v3560, %v3572
    %v3574 = vpop.f32.mrf.mxu0
    %3575 = vdwg.mxu0
    %3576 = vmatpush.bf16.msra.mxu0 %v3409
    %3577 = vmatpush.bf16.msra.mxu0 %v3408
    %3578 = vmatpush.bf16.msra.mxu0 %v3407
    %3579 = vmatpush.bf16.msra.mxu0 %v3406
    %3580 = vmatpush.bf16.msra.mxu0 %v3405
    %3581 = vmatpush.bf16.msra.mxu0 %v3404
    %3582 = vmatpush.bf16.msra.mxu0 %v3403
    %3583 = vmatpush.bf16.msra.mxu0 %v3402
    %3584 = vmatmul.bf16.gmra.mxu0 %v2919
    %v3585 = vpop.f32.mrf.mxu0
    %v3586 = vadd.f32 %v3573, %v3585
    %v3587 = vpop.f32.mrf.mxu0
    %3588 = vdwg.mxu0
    %3589 = vmatpush.bf16.msra.mxu0 %v3417
    %3590 = vmatpush.bf16.msra.mxu0 %v3416
    %3591 = vmatpush.bf16.msra.mxu0 %v3415
    %3592 = vmatpush.bf16.msra.mxu0 %v3414
    %3593 = vmatpush.bf16.msra.mxu0 %v3413
    %3594 = vmatpush.bf16.msra.mxu0 %v3412
    %3595 = vmatpush.bf16.msra.mxu0 %v3411
    %3596 = vmatpush.bf16.msra.mxu0 %v3410
    %3597 = vmatmul.bf16.gmra.mxu0 %v2920
    %v3598 = vpop.f32.mrf.mxu0
    %v3599 = vadd.f32 %v3586, %v3598
    %v3600 = vpop.f32.mrf.mxu0
    %3601 = vdwg.mxu0
    %3602 = vmatpush.bf16.msra.mxu0 %v3425
    %3603 = vmatpush.bf16.msra.mxu0 %v3424
    %3604 = vmatpush.bf16.msra.mxu0 %v3423
    %3605 = vmatpush.bf16.msra.mxu0 %v3422
    %3606 = vmatpush.bf16.msra.mxu0 %v3421
    %3607 = vmatpush.bf16.msra.mxu0 %v3420
    %3608 = vmatpush.bf16.msra.mxu0 %v3419
    %3609 = vmatpush.bf16.msra.mxu0 %v3418
    %3610 = vmatmul.bf16.gmra.mxu0 %v2921
    %v3611 = vpop.f32.mrf.mxu0
    %v3612 = vadd.f32 %v3599, %v3611
    %v3613 = vpop.f32.mrf.mxu0
    %3614 = vdwg.mxu0
    %v3615 = vrot.slane %v3612, 4
    %v3616 = vadd.f32 %v3612, %v3615
    %v3617 = vrot.slane %v3616, 2
    %v3618 = vadd.f32 %v3616, %v3617
    %v3619 = vrot.slane %v3618, 1
    %v3620 = vadd.f32 %v3618, %v3619
    %v3621 = vrcp.pop 8.0
    %v3622 = vmul.f32 8.0, %v3621
    %v3623 = vsub.f32 1.0, %v3622
    %v3624 = vmul.f32 %v3621, %v3623
    %v3625 = vadd.f32 %v3621, %v3624
    %vm3626 = vweird.f32 %v3621
    %v3627 = vsel %vm3626, %v3621, %v3625
    %v3628 = vmul.f32 %v3620, %v3627
    %v3629 = vsub.f32 %v3612, %v3628
    %v3630 = vmul.f32 %v3629, %v3629
    %v3631 = vrot.slane %v3630, 4
    %v3632 = vadd.f32 %v3630, %v3631
    %v3633 = vrot.slane %v3632, 2
    %v3634 = vadd.f32 %v3632, %v3633
    %v3635 = vrot.slane %v3634, 1
    %v3636 = vadd.f32 %v3634, %v3635
    %v3637 = vmul.f32 %v3636, %v3627
    %v3638 = vadd.f32 %v3637, 1e-05
    %v3639 = vrsqrt.pop %v3638
    %v3640 = vmul.f32 %v3639, %v3638
    %v3641 = vmul.f32 %v3640, %v3639
    %v3642 = vmul.f32 0.5, %v3641
    %v3643 = vsub.f32 1.5, %v3642
    %v3644 = vmul.f32 %v3639, %v3643
    %vm3645 = vweird.f32 %v3638
    %vm3646 = vweird.f32 %v3639
    %vm3647 = vmor %vm3645, %vm3646
    %v3648 = vsel %vm3647, %v3639, %v3644
    %v3649 = vmul.f32 %v3629, %v3648
    %v3650 = vld [vmem:[%s13] sm:$0x1]
    %v3652 = vperm.slane %v3650, 0
    %v3654 = vmul.f32 %v3649, %v3652
    %v3655 = vld [vmem:[%s14] sm:$0x1]
    %v3657 = vperm.slane %v3655, 0
    %v3659 = vadd.f32 %v3654, %v3657
    %v3660 = vmax.f32 %v3659, 0.0
    %v3661 = vrot.slane %v3660, 1
    %v3662 = vrot.slane %v3660, 2
    %v3663 = vrot.slane %v3660, 3
    %v3664 = vld [vmem:[%s15] sm:$0x1]
    %v3665 = vpack.c.bf16 %v3660, %v3660
    %v3666 = vpack.c.bf16 %v3661, %v3661
    %v3667 = vpack.c.bf16 %v3662, %v3662
    %v3668 = vpack.c.bf16 %v3663, %v3663
    %vm3669 = vcmask 64512
    %v3671 = vsel %vm3669, %v3664, 0
    %vm3673 = vcmask 1043456
    %v3675 = vsel %vm3673, %v3665, 0
    %v3678 = vsel %vm3673, %v3666, 0
    %v3681 = vsel %vm3673, %v3667, 0
    %v3684 = vsel %vm3673, %v3668, 0
    %3686 = vmatpush.bf16.msra.mxu0 0
    %3687 = vmatpush.bf16.msra.mxu0 0
    %3688 = vmatpush.bf16.msra.mxu0 0
    %3689 = vmatpush.bf16.msra.mxu0 0
    %3690 = vmatpush.bf16.msra.mxu0 0
    %3691 = vmatpush.bf16.msra.mxu0 0
    %3692 = vmatpush.bf16.msra.mxu0 0
    %3693 = vmatpush.bf16.msra.mxu0 %v3675
    %3694 = vmatmul.bf16.gmra.mxu0 %v3671
    %v3695 = vpop.f32.mrf.mxu0
    %v3696 = vadd.f32 0.0, %v3695
    %v3697 = vpop.f32.mrf.mxu0
    %3698 = vdwg.mxu0
    %3699 = vmatpush.bf16.msra.mxu0 0
    %3700 = vmatpush.bf16.msra.mxu0 0
    %3701 = vmatpush.bf16.msra.mxu0 0
    %3702 = vmatpush.bf16.msra.mxu0 0
    %3703 = vmatpush.bf16.msra.mxu0 0
    %3704 = vmatpush.bf16.msra.mxu0 0
    %3705 = vmatpush.bf16.msra.mxu0 0
    %3706 = vmatpush.bf16.msra.mxu0 %v3678
    %3707 = vmatmul.bf16.gmra.mxu0 %v3671
    %v3708 = vpop.f32.mrf.mxu0
    %v3709 = vadd.f32 0.0, %v3708
    %v3710 = vpop.f32.mrf.mxu0
    %3711 = vdwg.mxu0
    %3712 = vmatpush.bf16.msra.mxu0 0
    %3713 = vmatpush.bf16.msra.mxu0 0
    %3714 = vmatpush.bf16.msra.mxu0 0
    %3715 = vmatpush.bf16.msra.mxu0 0
    %3716 = vmatpush.bf16.msra.mxu0 0
    %3717 = vmatpush.bf16.msra.mxu0 0
    %3718 = vmatpush.bf16.msra.mxu0 0
    %3719 = vmatpush.bf16.msra.mxu0 %v3681
    %3720 = vmatmul.bf16.gmra.mxu0 %v3671
    %v3721 = vpop.f32.mrf.mxu0
    %v3722 = vadd.f32 0.0, %v3721
    %v3723 = vpop.f32.mrf.mxu0
    %3724 = vdwg.mxu0
    %3725 = vmatpush.bf16.msra.mxu0 0
    %3726 = vmatpush.bf16.msra.mxu0 0
    %3727 = vmatpush.bf16.msra.mxu0 0
    %3728 = vmatpush.bf16.msra.mxu0 0
    %3729 = vmatpush.bf16.msra.mxu0 0
    %3730 = vmatpush.bf16.msra.mxu0 0
    %3731 = vmatpush.bf16.msra.mxu0 0
    %3732 = vmatpush.bf16.msra.mxu0 %v3684
    %3733 = vmatmul.bf16.gmra.mxu0 %v3671
    %v3734 = vpop.f32.mrf.mxu0
    %v3735 = vadd.f32 0.0, %v3734
    %v3736 = vpop.f32.mrf.mxu0
    %3737 = vdwg.mxu0
    %v3738 = vpack.c.bf16 %v3696, %v3696
    %v3739 = vpack.c.bf16 %v3709, %v3709
    %v3740 = vpack.c.bf16 %v3722, %v3722
    %v3741 = vpack.c.bf16 %v3735, %v3735
    %v3742 = vld [vmem:[#allocation10] sm:$0xff]
    %v3743 = vld [vmem:[#allocation10 + $0x8] sm:$0xff]
    %v3744 = vld [vmem:[#allocation10 + $0x10] sm:$0xff]
    %v3745 = vld [vmem:[#allocation10 + $0x18] sm:$0xff]
    %v3746 = vld [vmem:[#allocation10 + $0x20] sm:$0xff]
    %v3747 = vld [vmem:[#allocation10 + $0x28] sm:$0xff]
    %v3748 = vld [vmem:[#allocation10 + $0x30] sm:$0xff]
    %v3749 = vld [vmem:[#allocation10 + $0x38] sm:$0xff]
    %v3750 = vld [vmem:[#allocation10 + $0x40] sm:$0xff]
    %v3751 = vld [vmem:[#allocation10 + $0x48] sm:$0xff]
    %v3752 = vld [vmem:[#allocation10 + $0x50] sm:$0xff]
    %v3753 = vld [vmem:[#allocation10 + $0x58] sm:$0xff]
    %v3754 = vld [vmem:[#allocation10 + $0x60] sm:$0xff]
    %v3755 = vld [vmem:[#allocation10 + $0x68] sm:$0xff]
    %v3756 = vld [vmem:[#allocation10 + $0x70] sm:$0xff]
    %v3757 = vld [vmem:[#allocation10 + $0x78] sm:$0xff]
    %v3758 = vld [vmem:[#allocation10 + $0x80] sm:$0xff]
    %v3759 = vld [vmem:[#allocation10 + $0x88] sm:$0xff]
    %v3760 = vld [vmem:[#allocation10 + $0x90] sm:$0xff]
    %v3761 = vld [vmem:[#allocation10 + $0x98] sm:$0xff]
    %v3762 = vld [vmem:[#allocation10 + $0xa0] sm:$0xff]
    %v3763 = vld [vmem:[#allocation10 + $0xa8] sm:$0xff]
    %v3764 = vld [vmem:[#allocation10 + $0xb0] sm:$0xff]
    %v3765 = vld [vmem:[#allocation10 + $0xb8] sm:$0xff]
    %v3766 = vld [vmem:[#allocation10 + $0xc0] sm:$0xff]
    %v3767 = vld [vmem:[#allocation10 + $0xc8] sm:$0xff]
    %v3768 = vld [vmem:[#allocation10 + $0xd0] sm:$0xff]
    %v3769 = vld [vmem:[#allocation10 + $0xd8] sm:$0xff]
    %v3770 = vld [vmem:[#allocation10 + $0xe0] sm:$0xff]
    %v3771 = vld [vmem:[#allocation10 + $0xe8] sm:$0xff]
    %v3772 = vld [vmem:[#allocation10 + $0xf0] sm:$0xff]
    %v3773 = vld [vmem:[#allocation10 + $0xf8] sm:$0xff]
    %v3774 = vld [vmem:[#allocation10 + $0x100] sm:$0xff]
    %v3775 = vld [vmem:[#allocation10 + $0x108] sm:$0xff]
    %v3776 = vld [vmem:[#allocation10 + $0x110] sm:$0xff]
    %v3777 = vld [vmem:[#allocation10 + $0x118] sm:$0xff]
    %v3778 = vld [vmem:[#allocation10 + $0x120] sm:$0xff]
    %v3779 = vld [vmem:[#allocation10 + $0x128] sm:$0xff]
    %v3780 = vld [vmem:[#allocation10 + $0x130] sm:$0xff]
    %v3781 = vld [vmem:[#allocation10 + $0x138] sm:$0xff]
    %v3782 = vld [vmem:[#allocation10 + $0x140] sm:$0xff]
    %v3783 = vld [vmem:[#allocation10 + $0x148] sm:$0xff]
    %v3784 = vld [vmem:[#allocation10 + $0x150] sm:$0xff]
    %v3785 = vld [vmem:[#allocation10 + $0x158] sm:$0xff]
    %v3786 = vld [vmem:[#allocation10 + $0x160] sm:$0xff]
    %v3787 = vld [vmem:[#allocation10 + $0x168] sm:$0xff]
    %v3788 = vld [vmem:[#allocation10 + $0x170] sm:$0xff]
    %v3789 = vld [vmem:[#allocation10 + $0x178] sm:$0xff]
    %v3790 = vld [vmem:[#allocation10 + $0x180] sm:$0xff]
    %v3791 = vld [vmem:[#allocation10 + $0x188] sm:$0xff]
    %v3792 = vld [vmem:[#allocation10 + $0x190] sm:$0xff]
    %v3793 = vld [vmem:[#allocation10 + $0x198] sm:$0xff]
    %v3794 = vld [vmem:[#allocation10 + $0x1a0] sm:$0xff]
    %v3795 = vld [vmem:[#allocation10 + $0x1a8] sm:$0xff]
    %v3796 = vld [vmem:[#allocation10 + $0x1b0] sm:$0xff]
    %v3797 = vld [vmem:[#allocation10 + $0x1b8] sm:$0xff]
    %v3798 = vld [vmem:[#allocation10 + $0x1c0] sm:$0xff]
    %v3799 = vld [vmem:[#allocation10 + $0x1c8] sm:$0xff]
    %v3800 = vld [vmem:[#allocation10 + $0x1d0] sm:$0xff]
    %v3801 = vld [vmem:[#allocation10 + $0x1d8] sm:$0xff]
    %v3802 = vld [vmem:[#allocation10 + $0x1e0] sm:$0xff]
    %v3803 = vld [vmem:[#allocation10 + $0x1e8] sm:$0xff]
    %v3804 = vld [vmem:[#allocation10 + $0x1f0] sm:$0xff]
    %v3805 = vld [vmem:[#allocation10 + $0x1f8] sm:$0xff]
    %v3806 = vld [vmem:[#allocation10 + $0x200] sm:$0xff]
    %v3807 = vld [vmem:[#allocation10 + $0x208] sm:$0xff]
    %v3808 = vld [vmem:[#allocation10 + $0x210] sm:$0xff]
    %v3809 = vld [vmem:[#allocation10 + $0x218] sm:$0xff]
    %v3810 = vld [vmem:[#allocation10 + $0x220] sm:$0xff]
    %v3811 = vld [vmem:[#allocation10 + $0x228] sm:$0xff]
    %v3812 = vld [vmem:[#allocation10 + $0x230] sm:$0xff]
    %v3813 = vld [vmem:[#allocation10 + $0x238] sm:$0xff]
    %v3814 = vld [vmem:[#allocation10 + $0x240] sm:$0xff]
    %v3815 = vld [vmem:[#allocation10 + $0x248] sm:$0xff]
    %v3816 = vld [vmem:[#allocation10 + $0x250] sm:$0xff]
    %v3817 = vld [vmem:[#allocation10 + $0x258] sm:$0xff]
    %v3818 = vld [vmem:[#allocation10 + $0x260] sm:$0xff]
    %v3819 = vld [vmem:[#allocation10 + $0x268] sm:$0xff]
    %v3820 = vld [vmem:[#allocation10 + $0x270] sm:$0xff]
    %v3821 = vld [vmem:[#allocation10 + $0x278] sm:$0xff]
    %v3822 = vld [vmem:[#allocation10 + $0x280] sm:$0xff]
    %v3823 = vld [vmem:[#allocation10 + $0x288] sm:$0xff]
    %v3824 = vld [vmem:[#allocation10 + $0x290] sm:$0xff]
    %v3825 = vld [vmem:[#allocation10 + $0x298] sm:$0xff]
    %v3826 = vld [vmem:[#allocation10 + $0x2a0] sm:$0xff]
    %v3827 = vld [vmem:[#allocation10 + $0x2a8] sm:$0xff]
    %v3828 = vld [vmem:[#allocation10 + $0x2b0] sm:$0xff]
    %v3829 = vld [vmem:[#allocation10 + $0x2b8] sm:$0xff]
    %v3830 = vld [vmem:[#allocation10 + $0x2c0] sm:$0xff]
    %v3831 = vld [vmem:[#allocation10 + $0x2c8] sm:$0xff]
    %v3832 = vld [vmem:[#allocation10 + $0x2d0] sm:$0xff]
    %v3833 = vld [vmem:[#allocation10 + $0x2d8] sm:$0xff]
    %v3834 = vld [vmem:[#allocation10 + $0x2e0] sm:$0xff]
    %v3835 = vld [vmem:[#allocation10 + $0x2e8] sm:$0xff]
    %v3836 = vld [vmem:[#allocation10 + $0x2f0] sm:$0xff]
    %v3837 = vld [vmem:[#allocation10 + $0x2f8] sm:$0xff]
    %v3838 = vld [vmem:[#allocation10 + $0x300] sm:$0xff]
    %v3839 = vld [vmem:[#allocation10 + $0x308] sm:$0xff]
    %v3840 = vld [vmem:[#allocation10 + $0x310] sm:$0xff]
    %v3841 = vld [vmem:[#allocation10 + $0x318] sm:$0xff]
    %v3842 = vld [vmem:[#allocation10 + $0x320] sm:$0xff]
    %v3843 = vld [vmem:[#allocation10 + $0x328] sm:$0xff]
    %v3844 = vld [vmem:[#allocation10 + $0x330] sm:$0xff]
    %v3845 = vld [vmem:[#allocation10 + $0x338] sm:$0xff]
    %v3846 = vld [vmem:[#allocation10 + $0x340] sm:$0xff]
    %v3847 = vld [vmem:[#allocation10 + $0x348] sm:$0xff]
    %v3848 = vld [vmem:[#allocation10 + $0x350] sm:$0xff]
    %v3849 = vld [vmem:[#allocation10 + $0x358] sm:$0xff]
    %v3850 = vld [vmem:[#allocation10 + $0x360] sm:$0xff]
    %v3851 = vld [vmem:[#allocation10 + $0x368] sm:$0xff]
    %v3852 = vld [vmem:[#allocation10 + $0x370] sm:$0xff]
    %v3853 = vld [vmem:[#allocation10 + $0x378] sm:$0xff]
    %v3854 = vld [vmem:[#allocation10 + $0x380] sm:$0xff]
    %v3855 = vld [vmem:[#allocation10 + $0x388] sm:$0xff]
    %v3856 = vld [vmem:[#allocation10 + $0x390] sm:$0xff]
    %v3857 = vld [vmem:[#allocation10 + $0x398] sm:$0xff]
    %v3858 = vld [vmem:[#allocation10 + $0x3a0] sm:$0xff]
    %v3859 = vld [vmem:[#allocation10 + $0x3a8] sm:$0xff]
    %v3860 = vld [vmem:[#allocation10 + $0x3b0] sm:$0xff]
    %v3861 = vld [vmem:[#allocation10 + $0x3b8] sm:$0xff]
    %v3862 = vld [vmem:[#allocation10 + $0x3c0] sm:$0xff]
    %v3863 = vld [vmem:[#allocation10 + $0x3c8] sm:$0xff]
    %v3864 = vld [vmem:[#allocation10 + $0x3d0] sm:$0xff]
    %v3865 = vld [vmem:[#allocation10 + $0x3d8] sm:$0xff]
    %v3866 = vld [vmem:[#allocation10 + $0x3e0] sm:$0xff]
    %v3867 = vld [vmem:[#allocation10 + $0x3e8] sm:$0xff]
    %v3868 = vld [vmem:[#allocation10 + $0x3f0] sm:$0xff]
    %v3869 = vld [vmem:[#allocation10 + $0x3f8] sm:$0xff]
    %v3870 = vld [vmem:[%s17] sm:$0xf]
    %v3872 = vperm.slane %v3870, 0
    %v3873 = vperm.slane %v3870, 1
    %v3874 = vperm.slane %v3870, 2
    %v3875 = vperm.slane %v3870, 3
    %v4008 = vunpack.c.l.b16 %v3742
    %v4009 = vunpack.c.h.b16 %v3742
    %v4010 = vunpack.c.l.b16 %v3743
    %v4011 = vunpack.c.h.b16 %v3743
    %v4012 = vunpack.c.l.b16 %v3744
    %v4013 = vunpack.c.h.b16 %v3744
    %v4014 = vunpack.c.l.b16 %v3745
    %v4015 = vunpack.c.h.b16 %v3745
    %v4016 = vunpack.c.l.b16 %v3746
    %v4017 = vunpack.c.h.b16 %v3746
    %v4018 = vunpack.c.l.b16 %v3747
    %v4019 = vunpack.c.h.b16 %v3747
    %v4020 = vunpack.c.l.b16 %v3748
    %v4021 = vunpack.c.h.b16 %v3748
    %v4022 = vunpack.c.l.b16 %v3749
    %v4023 = vunpack.c.h.b16 %v3749
    %v4024 = vunpack.c.l.b16 %v3750
    %v4025 = vunpack.c.h.b16 %v3750
    %v4026 = vunpack.c.l.b16 %v3751
    %v4027 = vunpack.c.h.b16 %v3751
    %v4028 = vunpack.c.l.b16 %v3752
    %v4029 = vunpack.c.h.b16 %v3752
    %v4030 = vunpack.c.l.b16 %v3753
    %v4031 = vunpack.c.h.b16 %v3753
    %v4032 = vunpack.c.l.b16 %v3754
    %v4033 = vunpack.c.h.b16 %v3754
    %v4034 = vunpack.c.l.b16 %v3755
    %v4035 = vunpack.c.h.b16 %v3755
    %v4036 = vunpack.c.l.b16 %v3756
    %v4037 = vunpack.c.h.b16 %v3756
    %v4038 = vunpack.c.l.b16 %v3757
    %v4039 = vunpack.c.h.b16 %v3757
    %v4040 = vunpack.c.l.b16 %v3758
    %v4041 = vunpack.c.h.b16 %v3758
    %v4042 = vunpack.c.l.b16 %v3759
    %v4043 = vunpack.c.h.b16 %v3759
    %v4044 = vunpack.c.l.b16 %v3760
    %v4045 = vunpack.c.h.b16 %v3760
    %v4046 = vunpack.c.l.b16 %v3761
    %v4047 = vunpack.c.h.b16 %v3761
    %v4048 = vunpack.c.l.b16 %v3762
    %v4049 = vunpack.c.h.b16 %v3762
    %v4050 = vunpack.c.l.b16 %v3763
    %v4051 = vunpack.c.h.b16 %v3763
    %v4052 = vunpack.c.l.b16 %v3764
    %v4053 = vunpack.c.h.b16 %v3764
    %v4054 = vunpack.c.l.b16 %v3765
    %v4055 = vunpack.c.h.b16 %v3765
    %v4056 = vunpack.c.l.b16 %v3766
    %v4057 = vunpack.c.h.b16 %v3766
    %v4058 = vunpack.c.l.b16 %v3767
    %v4059 = vunpack.c.h.b16 %v3767
    %v4060 = vunpack.c.l.b16 %v3768
    %v4061 = vunpack.c.h.b16 %v3768
    %v4062 = vunpack.c.l.b16 %v3769
    %v4063 = vunpack.c.h.b16 %v3769
    %v4064 = vunpack.c.l.b16 %v3770
    %v4065 = vunpack.c.h.b16 %v3770
    %v4066 = vunpack.c.l.b16 %v3771
    %v4067 = vunpack.c.h.b16 %v3771
    %v4068 = vunpack.c.l.b16 %v3772
    %v4069 = vunpack.c.h.b16 %v3772
    %v4070 = vunpack.c.l.b16 %v3773
    %v4071 = vunpack.c.h.b16 %v3773
    %v4072 = vunpack.c.l.b16 %v3774
    %v4073 = vunpack.c.h.b16 %v3774
    %v4074 = vunpack.c.l.b16 %v3775
    %v4075 = vunpack.c.h.b16 %v3775
    %v4076 = vunpack.c.l.b16 %v3776
    %v4077 = vunpack.c.h.b16 %v3776
    %v4078 = vunpack.c.l.b16 %v3777
    %v4079 = vunpack.c.h.b16 %v3777
    %v4080 = vunpack.c.l.b16 %v3778
    %v4081 = vunpack.c.h.b16 %v3778
    %v4082 = vunpack.c.l.b16 %v3779
    %v4083 = vunpack.c.h.b16 %v3779
    %v4084 = vunpack.c.l.b16 %v3780
    %v4085 = vunpack.c.h.b16 %v3780
    %v4086 = vunpack.c.l.b16 %v3781
    %v4087 = vunpack.c.h.b16 %v3781
    %v4088 = vunpack.c.l.b16 %v3782
    %v4089 = vunpack.c.h.b16 %v3782
    %v4090 = vunpack.c.l.b16 %v3783
    %v4091 = vunpack.c.h.b16 %v3783
    %v4092 = vunpack.c.l.b16 %v3784
    %v4093 = vunpack.c.h.b16 %v3784
    %v4094 = vunpack.c.l.b16 %v3785
    %v4095 = vunpack.c.h.b16 %v3785
    %v4096 = vunpack.c.l.b16 %v3786
    %v4097 = vunpack.c.h.b16 %v3786
    %v4098 = vunpack.c.l.b16 %v3787
    %v4099 = vunpack.c.h.b16 %v3787
    %v4100 = vunpack.c.l.b16 %v3788
    %v4101 = vunpack.c.h.b16 %v3788
    %v4102 = vunpack.c.l.b16 %v3789
    %v4103 = vunpack.c.h.b16 %v3789
    %v4104 = vunpack.c.l.b16 %v3790
    %v4105 = vunpack.c.h.b16 %v3790
    %v4106 = vunpack.c.l.b16 %v3791
    %v4107 = vunpack.c.h.b16 %v3791
    %v4108 = vunpack.c.l.b16 %v3792
    %v4109 = vunpack.c.h.b16 %v3792
    %v4110 = vunpack.c.l.b16 %v3793
    %v4111 = vunpack.c.h.b16 %v3793
    %v4112 = vunpack.c.l.b16 %v3794
    %v4113 = vunpack.c.h.b16 %v3794
    %v4114 = vunpack.c.l.b16 %v3795
    %v4115 = vunpack.c.h.b16 %v3795
    %v4116 = vunpack.c.l.b16 %v3796
    %v4117 = vunpack.c.h.b16 %v3796
    %v4118 = vunpack.c.l.b16 %v3797
    %v4119 = vunpack.c.h.b16 %v3797
    %v4120 = vunpack.c.l.b16 %v3798
    %v4121 = vunpack.c.h.b16 %v3798
    %v4122 = vunpack.c.l.b16 %v3799
    %v4123 = vunpack.c.h.b16 %v3799
    %v4124 = vunpack.c.l.b16 %v3800
    %v4125 = vunpack.c.h.b16 %v3800
    %v4126 = vunpack.c.l.b16 %v3801
    %v4127 = vunpack.c.h.b16 %v3801
    %v4128 = vunpack.c.l.b16 %v3802
    %v4129 = vunpack.c.h.b16 %v3802
    %v4130 = vunpack.c.l.b16 %v3803
    %v4131 = vunpack.c.h.b16 %v3803
    %v4132 = vunpack.c.l.b16 %v3804
    %v4133 = vunpack.c.h.b16 %v3804
    %v4134 = vunpack.c.l.b16 %v3805
    %v4135 = vunpack.c.h.b16 %v3805
    %v4136 = vunpack.c.l.b16 %v3806
    %v4137 = vunpack.c.h.b16 %v3806
    %v4138 = vunpack.c.l.b16 %v3807
    %v4139 = vunpack.c.h.b16 %v3807
    %v4140 = vunpack.c.l.b16 %v3808
    %v4141 = vunpack.c.h.b16 %v3808
    %v4142 = vunpack.c.l.b16 %v3809
    %v4143 = vunpack.c.h.b16 %v3809
    %v4144 = vunpack.c.l.b16 %v3810
    %v4145 = vunpack.c.h.b16 %v3810
    %v4146 = vunpack.c.l.b16 %v3811
    %v4147 = vunpack.c.h.b16 %v3811
    %v4148 = vunpack.c.l.b16 %v3812
    %v4149 = vunpack.c.h.b16 %v3812
    %v4150 = vunpack.c.l.b16 %v3813
    %v4151 = vunpack.c.h.b16 %v3813
    %v4152 = vunpack.c.l.b16 %v3814
    %v4153 = vunpack.c.h.b16 %v3814
    %v4154 = vunpack.c.l.b16 %v3815
    %v4155 = vunpack.c.h.b16 %v3815
    %v4156 = vunpack.c.l.b16 %v3816
    %v4157 = vunpack.c.h.b16 %v3816
    %v4158 = vunpack.c.l.b16 %v3817
    %v4159 = vunpack.c.h.b16 %v3817
    %v4160 = vunpack.c.l.b16 %v3818
    %v4161 = vunpack.c.h.b16 %v3818
    %v4162 = vunpack.c.l.b16 %v3819
    %v4163 = vunpack.c.h.b16 %v3819
    %v4164 = vunpack.c.l.b16 %v3820
    %v4165 = vunpack.c.h.b16 %v3820
    %v4166 = vunpack.c.l.b16 %v3821
    %v4167 = vunpack.c.h.b16 %v3821
    %v4168 = vunpack.c.l.b16 %v3822
    %v4169 = vunpack.c.h.b16 %v3822
    %v4170 = vunpack.c.l.b16 %v3823
    %v4171 = vunpack.c.h.b16 %v3823
    %v4172 = vunpack.c.l.b16 %v3824
    %v4173 = vunpack.c.h.b16 %v3824
    %v4174 = vunpack.c.l.b16 %v3825
    %v4175 = vunpack.c.h.b16 %v3825
    %v4176 = vunpack.c.l.b16 %v3826
    %v4177 = vunpack.c.h.b16 %v3826
    %v4178 = vunpack.c.l.b16 %v3827
    %v4179 = vunpack.c.h.b16 %v3827
    %v4180 = vunpack.c.l.b16 %v3828
    %v4181 = vunpack.c.h.b16 %v3828
    %v4182 = vunpack.c.l.b16 %v3829
    %v4183 = vunpack.c.h.b16 %v3829
    %v4184 = vunpack.c.l.b16 %v3830
    %v4185 = vunpack.c.h.b16 %v3830
    %v4186 = vunpack.c.l.b16 %v3831
    %v4187 = vunpack.c.h.b16 %v3831
    %v4188 = vunpack.c.l.b16 %v3832
    %v4189 = vunpack.c.h.b16 %v3832
    %v4190 = vunpack.c.l.b16 %v3833
    %v4191 = vunpack.c.h.b16 %v3833
    %v4192 = vunpack.c.l.b16 %v3834
    %v4193 = vunpack.c.h.b16 %v3834
    %v4194 = vunpack.c.l.b16 %v3835
    %v4195 = vunpack.c.h.b16 %v3835
    %v4196 = vunpack.c.l.b16 %v3836
    %v4197 = vunpack.c.h.b16 %v3836
    %v4198 = vunpack.c.l.b16 %v3837
    %v4199 = vunpack.c.h.b16 %v3837
    %v4200 = vunpack.c.l.b16 %v3838
    %v4201 = vunpack.c.h.b16 %v3838
    %v4202 = vunpack.c.l.b16 %v3839
    %v4203 = vunpack.c.h.b16 %v3839
    %v4204 = vunpack.c.l.b16 %v3840
    %v4205 = vunpack.c.h.b16 %v3840
    %v4206 = vunpack.c.l.b16 %v3841
    %v4207 = vunpack.c.h.b16 %v3841
    %v4208 = vunpack.c.l.b16 %v3842
    %v4209 = vunpack.c.h.b16 %v3842
    %v4210 = vunpack.c.l.b16 %v3843
    %v4211 = vunpack.c.h.b16 %v3843
    %v4212 = vunpack.c.l.b16 %v3844
    %v4213 = vunpack.c.h.b16 %v3844
    %v4214 = vunpack.c.l.b16 %v3845
    %v4215 = vunpack.c.h.b16 %v3845
    %v4216 = vunpack.c.l.b16 %v3846
    %v4217 = vunpack.c.h.b16 %v3846
    %v4218 = vunpack.c.l.b16 %v3847
    %v4219 = vunpack.c.h.b16 %v3847
    %v4220 = vunpack.c.l.b16 %v3848
    %v4221 = vunpack.c.h.b16 %v3848
    %v4222 = vunpack.c.l.b16 %v3849
    %v4223 = vunpack.c.h.b16 %v3849
    %v4224 = vunpack.c.l.b16 %v3850
    %v4225 = vunpack.c.h.b16 %v3850
    %v4226 = vunpack.c.l.b16 %v3851
    %v4227 = vunpack.c.h.b16 %v3851
    %v4228 = vunpack.c.l.b16 %v3852
    %v4229 = vunpack.c.h.b16 %v3852
    %v4230 = vunpack.c.l.b16 %v3853
    %v4231 = vunpack.c.h.b16 %v3853
    %v4232 = vunpack.c.l.b16 %v3854
    %v4233 = vunpack.c.h.b16 %v3854
    %v4234 = vunpack.c.l.b16 %v3855
    %v4235 = vunpack.c.h.b16 %v3855
    %v4236 = vunpack.c.l.b16 %v3856
    %v4237 = vunpack.c.h.b16 %v3856
    %v4238 = vunpack.c.l.b16 %v3857
    %v4239 = vunpack.c.h.b16 %v3857
    %v4240 = vunpack.c.l.b16 %v3858
    %v4241 = vunpack.c.h.b16 %v3858
    %v4242 = vunpack.c.l.b16 %v3859
    %v4243 = vunpack.c.h.b16 %v3859
    %v4244 = vunpack.c.l.b16 %v3860
    %v4245 = vunpack.c.h.b16 %v3860
    %v4246 = vunpack.c.l.b16 %v3861
    %v4247 = vunpack.c.h.b16 %v3861
    %v4248 = vunpack.c.l.b16 %v3862
    %v4249 = vunpack.c.h.b16 %v3862
    %v4250 = vunpack.c.l.b16 %v3863
    %v4251 = vunpack.c.h.b16 %v3863
    %v4252 = vunpack.c.l.b16 %v3864
    %v4253 = vunpack.c.h.b16 %v3864
    %v4254 = vunpack.c.l.b16 %v3865
    %v4255 = vunpack.c.h.b16 %v3865
    %v4256 = vunpack.c.l.b16 %v3866
    %v4257 = vunpack.c.h.b16 %v3866
    %v4258 = vunpack.c.l.b16 %v3867
    %v4259 = vunpack.c.h.b16 %v3867
    %v4260 = vunpack.c.l.b16 %v3868
    %v4261 = vunpack.c.h.b16 %v3868
    %v4262 = vunpack.c.l.b16 %v3869
    %v4263 = vunpack.c.h.b16 %v3869
    %v4264 = vpack.c.b16 %v4012, %v4008
    %v4265 = vpack.c.b16 %v4013, %v4009
    %v4266 = vpack.c.b16 %v4014, %v4010
    %v4267 = vpack.c.b16 %v4015, %v4011
    %v4268 = vpack.c.b16 %v4020, %v4016
    %v4269 = vpack.c.b16 %v4021, %v4017
    %v4270 = vpack.c.b16 %v4022, %v4018
    %v4271 = vpack.c.b16 %v4023, %v4019
    %v4272 = vpack.c.b16 %v4028, %v4024
    %v4273 = vpack.c.b16 %v4029, %v4025
    %v4274 = vpack.c.b16 %v4030, %v4026
    %v4275 = vpack.c.b16 %v4031, %v4027
    %v4276 = vpack.c.b16 %v4036, %v4032
    %v4277 = vpack.c.b16 %v4037, %v4033
    %v4278 = vpack.c.b16 %v4038, %v4034
    %v4279 = vpack.c.b16 %v4039, %v4035
    %v4280 = vpack.c.b16 %v4044, %v4040
    %v4281 = vpack.c.b16 %v4045, %v4041
    %v4282 = vpack.c.b16 %v4046, %v4042
    %v4283 = vpack.c.b16 %v4047, %v4043
    %v4284 = vpack.c.b16 %v4052, %v4048
    %v4285 = vpack.c.b16 %v4053, %v4049
    %v4286 = vpack.c.b16 %v4054, %v4050
    %v4287 = vpack.c.b16 %v4055, %v4051
    %v4288 = vpack.c.b16 %v4060, %v4056
    %v4289 = vpack.c.b16 %v4061, %v4057
    %v4290 = vpack.c.b16 %v4062, %v4058
    %v4291 = vpack.c.b16 %v4063, %v4059
    %v4292 = vpack.c.b16 %v4068, %v4064
    %v4293 = vpack.c.b16 %v4069, %v4065
    %v4294 = vpack.c.b16 %v4070, %v4066
    %v4295 = vpack.c.b16 %v4071, %v4067
    %v4296 = vpack.c.b16 %v4076, %v4072
    %v4297 = vpack.c.b16 %v4077, %v4073
    %v4298 = vpack.c.b16 %v4078, %v4074
    %v4299 = vpack.c.b16 %v4079, %v4075
    %v4300 = vpack.c.b16 %v4084, %v4080
    %v4301 = vpack.c.b16 %v4085, %v4081
    %v4302 = vpack.c.b16 %v4086, %v4082
    %v4303 = vpack.c.b16 %v4087, %v4083
    %v4304 = vpack.c.b16 %v4092, %v4088
    %v4305 = vpack.c.b16 %v4093, %v4089
    %v4306 = vpack.c.b16 %v4094, %v4090
    %v4307 = vpack.c.b16 %v4095, %v4091
    %v4308 = vpack.c.b16 %v4100, %v4096
    %v4309 = vpack.c.b16 %v4101, %v4097
    %v4310 = vpack.c.b16 %v4102, %v4098
    %v4311 = vpack.c.b16 %v4103, %v4099
    %v4312 = vpack.c.b16 %v4108, %v4104
    %v4313 = vpack.c.b16 %v4109, %v4105
    %v4314 = vpack.c.b16 %v4110, %v4106
    %v4315 = vpack.c.b16 %v4111, %v4107
    %v4316 = vpack.c.b16 %v4116, %v4112
    %v4317 = vpack.c.b16 %v4117, %v4113
    %v4318 = vpack.c.b16 %v4118, %v4114
    %v4319 = vpack.c.b16 %v4119, %v4115
    %v4320 = vpack.c.b16 %v4124, %v4120
    %v4321 = vpack.c.b16 %v4125, %v4121
    %v4322 = vpack.c.b16 %v4126, %v4122
    %v4323 = vpack.c.b16 %v4127, %v4123
    %v4324 = vpack.c.b16 %v4132, %v4128
    %v4325 = vpack.c.b16 %v4133, %v4129
    %v4326 = vpack.c.b16 %v4134, %v4130
    %v4327 = vpack.c.b16 %v4135, %v4131
    %v4328 = vpack.c.b16 %v4140, %v4136
    %v4329 = vpack.c.b16 %v4141, %v4137
    %v4330 = vpack.c.b16 %v4142, %v4138
    %v4331 = vpack.c.b16 %v4143, %v4139
    %v4332 = vpack.c.b16 %v4148, %v4144
    %v4333 = vpack.c.b16 %v4149, %v4145
    %v4334 = vpack.c.b16 %v4150, %v4146
    %v4335 = vpack.c.b16 %v4151, %v4147
    %v4336 = vpack.c.b16 %v4156, %v4152
    %v4337 = vpack.c.b16 %v4157, %v4153
    %v4338 = vpack.c.b16 %v4158, %v4154
    %v4339 = vpack.c.b16 %v4159, %v4155
    %v4340 = vpack.c.b16 %v4164, %v4160
    %v4341 = vpack.c.b16 %v4165, %v4161
    %v4342 = vpack.c.b16 %v4166, %v4162
    %v4343 = vpack.c.b16 %v4167, %v4163
    %v4344 = vpack.c.b16 %v4172, %v4168
    %v4345 = vpack.c.b16 %v4173, %v4169
    %v4346 = vpack.c.b16 %v4174, %v4170
    %v4347 = vpack.c.b16 %v4175, %v4171
    %v4348 = vpack.c.b16 %v4180, %v4176
    %v4349 = vpack.c.b16 %v4181, %v4177
    %v4350 = vpack.c.b16 %v4182, %v4178
    %v4351 = vpack.c.b16 %v4183, %v4179
    %v4352 = vpack.c.b16 %v4188, %v4184
    %v4353 = vpack.c.b16 %v4189, %v4185
    %v4354 = vpack.c.b16 %v4190, %v4186
    %v4355 = vpack.c.b16 %v4191, %v4187
    %v4356 = vpack.c.b16 %v4196, %v4192
    %v4357 = vpack.c.b16 %v4197, %v4193
    %v4358 = vpack.c.b16 %v4198, %v4194
    %v4359 = vpack.c.b16 %v4199, %v4195
    %v4360 = vpack.c.b16 %v4204, %v4200
    %v4361 = vpack.c.b16 %v4205, %v4201
    %v4362 = vpack.c.b16 %v4206, %v4202
    %v4363 = vpack.c.b16 %v4207, %v4203
    %v4364 = vpack.c.b16 %v4212, %v4208
    %v4365 = vpack.c.b16 %v4213, %v4209
    %v4366 = vpack.c.b16 %v4214, %v4210
    %v4367 = vpack.c.b16 %v4215, %v4211
    %v4368 = vpack.c.b16 %v4220, %v4216
    %v4369 = vpack.c.b16 %v4221, %v4217
    %v4370 = vpack.c.b16 %v4222, %v4218
    %v4371 = vpack.c.b16 %v4223, %v4219
    %v4372 = vpack.c.b16 %v4228, %v4224
    %v4373 = vpack.c.b16 %v4229, %v4225
    %v4374 = vpack.c.b16 %v4230, %v4226
    %v4375 = vpack.c.b16 %v4231, %v4227
    %v4376 = vpack.c.b16 %v4236, %v4232
    %v4377 = vpack.c.b16 %v4237, %v4233
    %v4378 = vpack.c.b16 %v4238, %v4234
    %v4379 = vpack.c.b16 %v4239, %v4235
    %v4380 = vpack.c.b16 %v4244, %v4240
    %v4381 = vpack.c.b16 %v4245, %v4241
    %v4382 = vpack.c.b16 %v4246, %v4242
    %v4383 = vpack.c.b16 %v4247, %v4243
    %v4384 = vpack.c.b16 %v4252, %v4248
    %v4385 = vpack.c.b16 %v4253, %v4249
    %v4386 = vpack.c.b16 %v4254, %v4250
    %v4387 = vpack.c.b16 %v4255, %v4251
    %v4388 = vpack.c.b16 %v4260, %v4256
    %v4389 = vpack.c.b16 %v4261, %v4257
    %v4390 = vpack.c.b16 %v4262, %v4258
    %v4391 = vpack.c.b16 %v4263, %v4259
    %4520 = vmatpush.bf16.msra.mxu0 %v4292
    %4521 = vmatpush.bf16.msra.mxu0 %v4288
    %4522 = vmatpush.bf16.msra.mxu0 %v4284
    %4523 = vmatpush.bf16.msra.mxu0 %v4280
    %4524 = vmatpush.bf16.msra.mxu0 %v4276
    %4525 = vmatpush.bf16.msra.mxu0 %v4272
    %4526 = vmatpush.bf16.msra.mxu0 %v4268
    %4527 = vmatpush.bf16.msra.mxu0 %v4264
    %4528 = vmatmul.bf16.gmra.mxu0 %v3738
    %v4529 = vpop.f32.mrf.mxu0
    %v4530 = vadd.f32 %v3872, %v4529
    %v4531 = vpop.f32.mrf.mxu0
    %4532 = vdwg.mxu0
    %4533 = vmatpush.bf16.msra.mxu0 %v4324
    %4534 = vmatpush.bf16.msra.mxu0 %v4320
    %4535 = vmatpush.bf16.msra.mxu0 %v4316
    %4536 = vmatpush.bf16.msra.mxu0 %v4312
    %4537 = vmatpush.bf16.msra.mxu0 %v4308
    %4538 = vmatpush.bf16.msra.mxu0 %v4304
    %4539 = vmatpush.bf16.msra.mxu0 %v4300
    %4540 = vmatpush.bf16.msra.mxu0 %v4296
    %4541 = vmatmul.bf16.gmra.mxu0 %v3739
    %v4542 = vpop.f32.mrf.mxu0
    %v4543 = vadd.f32 %v4530, %v4542
    %v4544 = vpop.f32.mrf.mxu0
    %4545 = vdwg.mxu0
    %4546 = vmatpush.bf16.msra.mxu0 %v4356
    %4547 = vmatpush.bf16.msra.mxu0 %v4352
    %4548 = vmatpush.bf16.msra.mxu0 %v4348
    %4549 = vmatpush.bf16.msra.mxu0 %v4344
    %4550 = vmatpush.bf16.msra.mxu0 %v4340
    %4551 = vmatpush.bf16.msra.mxu0 %v4336
    %4552 = vmatpush.bf16.msra.mxu0 %v4332
    %4553 = vmatpush.bf16.msra.mxu0 %v4328
    %4554 = vmatmul.bf16.gmra.mxu0 %v3740
    %v4555 = vpop.f32.mrf.mxu0
    %v4556 = vadd.f32 %v4543, %v4555
    %v4557 = vpop.f32.mrf.mxu0
    %4558 = vdwg.mxu0
    %4559 = vmatpush.bf16.msra.mxu0 %v4388
    %4560 = vmatpush.bf16.msra.mxu0 %v4384
    %4561 = vmatpush.bf16.msra.mxu0 %v4380
    %4562 = vmatpush.bf16.msra.mxu0 %v4376
    %4563 = vmatpush.bf16.msra.mxu0 %v4372
    %4564 = vmatpush.bf16.msra.mxu0 %v4368
    %4565 = vmatpush.bf16.msra.mxu0 %v4364
    %4566 = vmatpush.bf16.msra.mxu0 %v4360
    %4567 = vmatmul.bf16.gmra.mxu0 %v3741
    %v4568 = vpop.f32.mrf.mxu0
    %v4569 = vadd.f32 %v4556, %v4568
    %v4570 = vpop.f32.mrf.mxu0
    %4571 = vdwg.mxu0
    %4572 = vmatpush.bf16.msra.mxu0 %v4293
    %4573 = vmatpush.bf16.msra.mxu0 %v4289
    %4574 = vmatpush.bf16.msra.mxu0 %v4285
    %4575 = vmatpush.bf16.msra.mxu0 %v4281
    %4576 = vmatpush.bf16.msra.mxu0 %v4277
    %4577 = vmatpush.bf16.msra.mxu0 %v4273
    %4578 = vmatpush.bf16.msra.mxu0 %v4269
    %4579 = vmatpush.bf16.msra.mxu0 %v4265
    %4580 = vmatmul.bf16.gmra.mxu0 %v3738
    %v4581 = vpop.f32.mrf.mxu0
    %v4582 = vadd.f32 %v3873, %v4581
    %v4583 = vpop.f32.mrf.mxu0
    %4584 = vdwg.mxu0
    %4585 = vmatpush.bf16.msra.mxu0 %v4325
    %4586 = vmatpush.bf16.msra.mxu0 %v4321
    %4587 = vmatpush.bf16.msra.mxu0 %v4317
    %4588 = vmatpush.bf16.msra.mxu0 %v4313
    %4589 = vmatpush.bf16.msra.mxu0 %v4309
    %4590 = vmatpush.bf16.msra.mxu0 %v4305
    %4591 = vmatpush.bf16.msra.mxu0 %v4301
    %4592 = vmatpush.bf16.msra.mxu0 %v4297
    %4593 = vmatmul.bf16.gmra.mxu0 %v3739
    %v4594 = vpop.f32.mrf.mxu0
    %v4595 = vadd.f32 %v4582, %v4594
    %v4596 = vpop.f32.mrf.mxu0
    %4597 = vdwg.mxu0
    %4598 = vmatpush.bf16.msra.mxu0 %v4357
    %4599 = vmatpush.bf16.msra.mxu0 %v4353
    %4600 = vmatpush.bf16.msra.mxu0 %v4349
    %4601 = vmatpush.bf16.msra.mxu0 %v4345
    %4602 = vmatpush.bf16.msra.mxu0 %v4341
    %4603 = vmatpush.bf16.msra.mxu0 %v4337
    %4604 = vmatpush.bf16.msra.mxu0 %v4333
    %4605 = vmatpush.bf16.msra.mxu0 %v4329
    %4606 = vmatmul.bf16.gmra.mxu0 %v3740
    %v4607 = vpop.f32.mrf.mxu0
    %v4608 = vadd.f32 %v4595, %v4607
    %v4609 = vpop.f32.mrf.mxu0
    %4610 = vdwg.mxu0
    %4611 = vmatpush.bf16.msra.mxu0 %v4389
    %4612 = vmatpush.bf16.msra.mxu0 %v4385
    %4613 = vmatpush.bf16.msra.mxu0 %v4381
    %4614 = vmatpush.bf16.msra.mxu0 %v4377
    %4615 = vmatpush.bf16.msra.mxu0 %v4373
    %4616 = vmatpush.bf16.msra.mxu0 %v4369
    %4617 = vmatpush.bf16.msra.mxu0 %v4365
    %4618 = vmatpush.bf16.msra.mxu0 %v4361
    %4619 = vmatmul.bf16.gmra.mxu0 %v3741
    %v4620 = vpop.f32.mrf.mxu0
    %v4621 = vadd.f32 %v4608, %v4620
    %v4622 = vpop.f32.mrf.mxu0
    %4623 = vdwg.mxu0
    %4624 = vmatpush.bf16.msra.mxu0 %v4294
    %4625 = vmatpush.bf16.msra.mxu0 %v4290
    %4626 = vmatpush.bf16.msra.mxu0 %v4286
    %4627 = vmatpush.bf16.msra.mxu0 %v4282
    %4628 = vmatpush.bf16.msra.mxu0 %v4278
    %4629 = vmatpush.bf16.msra.mxu0 %v4274
    %4630 = vmatpush.bf16.msra.mxu0 %v4270
    %4631 = vmatpush.bf16.msra.mxu0 %v4266
    %4632 = vmatmul.bf16.gmra.mxu0 %v3738
    %v4633 = vpop.f32.mrf.mxu0
    %v4634 = vadd.f32 %v3874, %v4633
    %v4635 = vpop.f32.mrf.mxu0
    %4636 = vdwg.mxu0
    %4637 = vmatpush.bf16.msra.mxu0 %v4326
    %4638 = vmatpush.bf16.msra.mxu0 %v4322
    %4639 = vmatpush.bf16.msra.mxu0 %v4318
    %4640 = vmatpush.bf16.msra.mxu0 %v4314
    %4641 = vmatpush.bf16.msra.mxu0 %v4310
    %4642 = vmatpush.bf16.msra.mxu0 %v4306
    %4643 = vmatpush.bf16.msra.mxu0 %v4302
    %4644 = vmatpush.bf16.msra.mxu0 %v4298
    %4645 = vmatmul.bf16.gmra.mxu0 %v3739
    %v4646 = vpop.f32.mrf.mxu0
    %v4647 = vadd.f32 %v4634, %v4646
    %v4648 = vpop.f32.mrf.mxu0
    %4649 = vdwg.mxu0
    %4650 = vmatpush.bf16.msra.mxu0 %v4358
    %4651 = vmatpush.bf16.msra.mxu0 %v4354
    %4652 = vmatpush.bf16.msra.mxu0 %v4350
    %4653 = vmatpush.bf16.msra.mxu0 %v4346
    %4654 = vmatpush.bf16.msra.mxu0 %v4342
    %4655 = vmatpush.bf16.msra.mxu0 %v4338
    %4656 = vmatpush.bf16.msra.mxu0 %v4334
    %4657 = vmatpush.bf16.msra.mxu0 %v4330
    %4658 = vmatmul.bf16.gmra.mxu0 %v3740
    %v4659 = vpop.f32.mrf.mxu0
    %v4660 = vadd.f32 %v4647, %v4659
    %v4661 = vpop.f32.mrf.mxu0
    %4662 = vdwg.mxu0
    %4663 = vmatpush.bf16.msra.mxu0 %v4390
    %4664 = vmatpush.bf16.msra.mxu0 %v4386
    %4665 = vmatpush.bf16.msra.mxu0 %v4382
    %4666 = vmatpush.bf16.msra.mxu0 %v4378
    %4667 = vmatpush.bf16.msra.mxu0 %v4374
    %4668 = vmatpush.bf16.msra.mxu0 %v4370
    %4669 = vmatpush.bf16.msra.mxu0 %v4366
    %4670 = vmatpush.bf16.msra.mxu0 %v4362
    %4671 = vmatmul.bf16.gmra.mxu0 %v3741
    %v4672 = vpop.f32.mrf.mxu0
    %v4673 = vadd.f32 %v4660, %v4672
    %v4674 = vpop.f32.mrf.mxu0
    %4675 = vdwg.mxu0
    %4676 = vmatpush.bf16.msra.mxu0 %v4295
    %4677 = vmatpush.bf16.msra.mxu0 %v4291
    %4678 = vmatpush.bf16.msra.mxu0 %v4287
    %4679 = vmatpush.bf16.msra.mxu0 %v4283
    %4680 = vmatpush.bf16.msra.mxu0 %v4279
    %4681 = vmatpush.bf16.msra.mxu0 %v4275
    %4682 = vmatpush.bf16.msra.mxu0 %v4271
    %4683 = vmatpush.bf16.msra.mxu0 %v4267
    %4684 = vmatmul.bf16.gmra.mxu0 %v3738
    %v4685 = vpop.f32.mrf.mxu0
    %v4686 = vadd.f32 %v3875, %v4685
    %v4687 = vpop.f32.mrf.mxu0
    %4688 = vdwg.mxu0
    %4689 = vmatpush.bf16.msra.mxu0 %v4327
    %4690 = vmatpush.bf16.msra.mxu0 %v4323
    %4691 = vmatpush.bf16.msra.mxu0 %v4319
    %4692 = vmatpush.bf16.msra.mxu0 %v4315
    %4693 = vmatpush.bf16.msra.mxu0 %v4311
    %4694 = vmatpush.bf16.msra.mxu0 %v4307
    %4695 = vmatpush.bf16.msra.mxu0 %v4303
    %4696 = vmatpush.bf16.msra.mxu0 %v4299
    %4697 = vmatmul.bf16.gmra.mxu0 %v3739
    %v4698 = vpop.f32.mrf.mxu0
    %v4699 = vadd.f32 %v4686, %v4698
    %v4700 = vpop.f32.mrf.mxu0
    %4701 = vdwg.mxu0
    %4702 = vmatpush.bf16.msra.mxu0 %v4359
    %4703 = vmatpush.bf16.msra.mxu0 %v4355
    %4704 = vmatpush.bf16.msra.mxu0 %v4351
    %4705 = vmatpush.bf16.msra.mxu0 %v4347
    %4706 = vmatpush.bf16.msra.mxu0 %v4343
    %4707 = vmatpush.bf16.msra.mxu0 %v4339
    %4708 = vmatpush.bf16.msra.mxu0 %v4335
    %4709 = vmatpush.bf16.msra.mxu0 %v4331
    %4710 = vmatmul.bf16.gmra.mxu0 %v3740
    %v4711 = vpop.f32.mrf.mxu0
    %v4712 = vadd.f32 %v4699, %v4711
    %v4713 = vpop.f32.mrf.mxu0
    %4714 = vdwg.mxu0
    %4715 = vmatpush.bf16.msra.mxu0 %v4391
    %4716 = vmatpush.bf16.msra.mxu0 %v4387
    %4717 = vmatpush.bf16.msra.mxu0 %v4383
    %4718 = vmatpush.bf16.msra.mxu0 %v4379
    %4719 = vmatpush.bf16.msra.mxu0 %v4375
    %4720 = vmatpush.bf16.msra.mxu0 %v4371
    %4721 = vmatpush.bf16.msra.mxu0 %v4367
    %4722 = vmatpush.bf16.msra.mxu0 %v4363
    %4723 = vmatmul.bf16.gmra.mxu0 %v3741
    %v4724 = vpop.f32.mrf.mxu0
    %v4725 = vadd.f32 %v4712, %v4724
    %v4726 = vpop.f32.mrf.mxu0
    %4727 = vdwg.mxu0
    %v4728 = vmax.f32 %v4569, 0.0
    %v4729 = vmax.f32 %v4621, 0.0
    %v4730 = vmax.f32 %v4673, 0.0
    %v4731 = vmax.f32 %v4725, 0.0
    %v4732 = vpack.c.bf16 %v4728, %v4728
    %v4733 = vpack.c.bf16 %v4729, %v4729
    %v4734 = vpack.c.bf16 %v4730, %v4730
    %v4735 = vpack.c.bf16 %v4731, %v4731
    %v4736 = vld [vmem:[#allocation11] sm:$0xf]
    %v4737 = vld [vmem:[#allocation11 + $0x4] sm:$0xf]
    %v4738 = vld [vmem:[#allocation11 + $0x8] sm:$0xf]
    %v4739 = vld [vmem:[#allocation11 + $0xc] sm:$0xf]
    %v4740 = vld [vmem:[#allocation11 + $0x10] sm:$0xf]
    %v4741 = vld [vmem:[#allocation11 + $0x14] sm:$0xf]
    %v4742 = vld [vmem:[#allocation11 + $0x18] sm:$0xf]
    %v4743 = vld [vmem:[#allocation11 + $0x1c] sm:$0xf]
    %v4744 = vld [vmem:[#allocation11 + $0x20] sm:$0xf]
    %v4745 = vld [vmem:[#allocation11 + $0x24] sm:$0xf]
    %v4746 = vld [vmem:[#allocation11 + $0x28] sm:$0xf]
    %v4747 = vld [vmem:[#allocation11 + $0x2c] sm:$0xf]
    %v4748 = vld [vmem:[#allocation11 + $0x30] sm:$0xf]
    %v4749 = vld [vmem:[#allocation11 + $0x34] sm:$0xf]
    %v4750 = vld [vmem:[#allocation11 + $0x38] sm:$0xf]
    %v4751 = vld [vmem:[#allocation11 + $0x3c] sm:$0xf]
    %v4752 = vld [vmem:[#allocation11 + $0x40] sm:$0xf]
    %v4753 = vld [vmem:[#allocation11 + $0x44] sm:$0xf]
    %v4754 = vld [vmem:[#allocation11 + $0x48] sm:$0xf]
    %v4755 = vld [vmem:[#allocation11 + $0x4c] sm:$0xf]
    %v4756 = vld [vmem:[#allocation11 + $0x50] sm:$0xf]
    %v4757 = vld [vmem:[#allocation11 + $0x54] sm:$0xf]
    %v4758 = vld [vmem:[#allocation11 + $0x58] sm:$0xf]
    %v4759 = vld [vmem:[#allocation11 + $0x5c] sm:$0xf]
    %v4760 = vld [vmem:[#allocation11 + $0x60] sm:$0xf]
    %v4761 = vld [vmem:[#allocation11 + $0x64] sm:$0xf]
    %v4762 = vld [vmem:[#allocation11 + $0x68] sm:$0xf]
    %v4763 = vld [vmem:[#allocation11 + $0x6c] sm:$0xf]
    %v4764 = vld [vmem:[#allocation11 + $0x70] sm:$0xf]
    %v4765 = vld [vmem:[#allocation11 + $0x74] sm:$0xf]
    %v4766 = vld [vmem:[#allocation11 + $0x78] sm:$0xf]
    %v4767 = vld [vmem:[#allocation11 + $0x7c] sm:$0xf]
    %v4768 = vld [vmem:[#allocation11 + $0x80] sm:$0xf]
    %v4769 = vld [vmem:[#allocation11 + $0x84] sm:$0xf]
    %v4770 = vld [vmem:[#allocation11 + $0x88] sm:$0xf]
    %v4771 = vld [vmem:[#allocation11 + $0x8c] sm:$0xf]
    %v4772 = vld [vmem:[#allocation11 + $0x90] sm:$0xf]
    %v4773 = vld [vmem:[#allocation11 + $0x94] sm:$0xf]
    %v4774 = vld [vmem:[#allocation11 + $0x98] sm:$0xf]
    %v4775 = vld [vmem:[#allocation11 + $0x9c] sm:$0xf]
    %v4776 = vld [vmem:[#allocation11 + $0xa0] sm:$0xf]
    %v4777 = vld [vmem:[#allocation11 + $0xa4] sm:$0xf]
    %v4778 = vld [vmem:[#allocation11 + $0xa8] sm:$0xf]
    %v4779 = vld [vmem:[#allocation11 + $0xac] sm:$0xf]
    %v4780 = vld [vmem:[#allocation11 + $0xb0] sm:$0xf]
    %v4781 = vld [vmem:[#allocation11 + $0xb4] sm:$0xf]
    %v4782 = vld [vmem:[#allocation11 + $0xb8] sm:$0xf]
    %v4783 = vld [vmem:[#allocation11 + $0xbc] sm:$0xf]
    %v4784 = vld [vmem:[#allocation11 + $0xc0] sm:$0xf]
    %v4785 = vld [vmem:[#allocation11 + $0xc4] sm:$0xf]
    %v4786 = vld [vmem:[#allocation11 + $0xc8] sm:$0xf]
    %v4787 = vld [vmem:[#allocation11 + $0xcc] sm:$0xf]
    %v4788 = vld [vmem:[#allocation11 + $0xd0] sm:$0xf]
    %v4789 = vld [vmem:[#allocation11 + $0xd4] sm:$0xf]
    %v4790 = vld [vmem:[#allocation11 + $0xd8] sm:$0xf]
    %v4791 = vld [vmem:[#allocation11 + $0xdc] sm:$0xf]
    %v4792 = vld [vmem:[#allocation11 + $0xe0] sm:$0xf]
    %v4793 = vld [vmem:[#allocation11 + $0xe4] sm:$0xf]
    %v4794 = vld [vmem:[#allocation11 + $0xe8] sm:$0xf]
    %v4795 = vld [vmem:[#allocation11 + $0xec] sm:$0xf]
    %v4796 = vld [vmem:[#allocation11 + $0xf0] sm:$0xf]
    %v4797 = vld [vmem:[#allocation11 + $0xf4] sm:$0xf]
    %v4798 = vld [vmem:[#allocation11 + $0xf8] sm:$0xf]
    %v4799 = vld [vmem:[#allocation11 + $0xfc] sm:$0xf]
    %v4800 = vld [vmem:[%s19] sm:$0x1]
    %v4802 = vperm.slane %v4800, 0
    %v4868 = vunpack.c.l.b16 %v4736
    %v4869 = vunpack.c.l.b16 %v4737
    %v4870 = vunpack.c.l.b16 %v4738
    %v4871 = vunpack.c.l.b16 %v4739
    %v4872 = vunpack.c.l.b16 %v4740
    %v4873 = vunpack.c.l.b16 %v4741
    %v4874 = vunpack.c.l.b16 %v4742
    %v4875 = vunpack.c.l.b16 %v4743
    %v4876 = vunpack.c.l.b16 %v4744
    %v4877 = vunpack.c.l.b16 %v4745
    %v4878 = vunpack.c.l.b16 %v4746
    %v4879 = vunpack.c.l.b16 %v4747
    %v4880 = vunpack.c.l.b16 %v4748
    %v4881 = vunpack.c.l.b16 %v4749
    %v4882 = vunpack.c.l.b16 %v4750
    %v4883 = vunpack.c.l.b16 %v4751
    %v4884 = vunpack.c.l.b16 %v4752
    %v4885 = vunpack.c.l.b16 %v4753
    %v4886 = vunpack.c.l.b16 %v4754
    %v4887 = vunpack.c.l.b16 %v4755
    %v4888 = vunpack.c.l.b16 %v4756
    %v4889 = vunpack.c.l.b16 %v4757
    %v4890 = vunpack.c.l.b16 %v4758
    %v4891 = vunpack.c.l.b16 %v4759
    %v4892 = vunpack.c.l.b16 %v4760
    %v4893 = vunpack.c.l.b16 %v4761
    %v4894 = vunpack.c.l.b16 %v4762
    %v4895 = vunpack.c.l.b16 %v4763
    %v4896 = vunpack.c.l.b16 %v4764
    %v4897 = vunpack.c.l.b16 %v4765
    %v4898 = vunpack.c.l.b16 %v4766
    %v4899 = vunpack.c.l.b16 %v4767
    %v4900 = vunpack.c.l.b16 %v4768
    %v4901 = vunpack.c.l.b16 %v4769
    %v4902 = vunpack.c.l.b16 %v4770
    %v4903 = vunpack.c.l.b16 %v4771
    %v4904 = vunpack.c.l.b16 %v4772
    %v4905 = vunpack.c.l.b16 %v4773
    %v4906 = vunpack.c.l.b16 %v4774
    %v4907 = vunpack.c.l.b16 %v4775
    %v4908 = vunpack.c.l.b16 %v4776
    %v4909 = vunpack.c.l.b16 %v4777
    %v4910 = vunpack.c.l.b16 %v4778
    %v4911 = vunpack.c.l.b16 %v4779
    %v4912 = vunpack.c.l.b16 %v4780
    %v4913 = vunpack.c.l.b16 %v4781
    %v4914 = vunpack.c.l.b16 %v4782
    %v4915 = vunpack.c.l.b16 %v4783
    %v4916 = vunpack.c.l.b16 %v4784
    %v4917 = vunpack.c.l.b16 %v4785
    %v4918 = vunpack.c.l.b16 %v4786
    %v4919 = vunpack.c.l.b16 %v4787
    %v4920 = vunpack.c.l.b16 %v4788
    %v4921 = vunpack.c.l.b16 %v4789
    %v4922 = vunpack.c.l.b16 %v4790
    %v4923 = vunpack.c.l.b16 %v4791
    %v4924 = vunpack.c.l.b16 %v4792
    %v4925 = vunpack.c.l.b16 %v4793
    %v4926 = vunpack.c.l.b16 %v4794
    %v4927 = vunpack.c.l.b16 %v4795
    %v4928 = vunpack.c.l.b16 %v4796
    %v4929 = vunpack.c.l.b16 %v4797
    %v4930 = vunpack.c.l.b16 %v4798
    %v4931 = vunpack.c.l.b16 %v4799
    %v4932 = vpack.c.b16 %v4869, %v4868
    %v4933 = vpack.c.b16 %v4871, %v4870
    %v4934 = vpack.c.b16 %v4873, %v4872
    %v4935 = vpack.c.b16 %v4875, %v4874
    %v4936 = vpack.c.b16 %v4877, %v4876
    %v4937 = vpack.c.b16 %v4879, %v4878
    %v4938 = vpack.c.b16 %v4881, %v4880
    %v4939 = vpack.c.b16 %v4883, %v4882
    %v4940 = vpack.c.b16 %v4885, %v4884
    %v4941 = vpack.c.b16 %v4887, %v4886
    %v4942 = vpack.c.b16 %v4889, %v4888
    %v4943 = vpack.c.b16 %v4891, %v4890
    %v4944 = vpack.c.b16 %v4893, %v4892
    %v4945 = vpack.c.b16 %v4895, %v4894
    %v4946 = vpack.c.b16 %v4897, %v4896
    %v4947 = vpack.c.b16 %v4899, %v4898
    %v4948 = vpack.c.b16 %v4901, %v4900
    %v4949 = vpack.c.b16 %v4903, %v4902
    %v4950 = vpack.c.b16 %v4905, %v4904
    %v4951 = vpack.c.b16 %v4907, %v4906
    %v4952 = vpack.c.b16 %v4909, %v4908
    %v4953 = vpack.c.b16 %v4911, %v4910
    %v4954 = vpack.c.b16 %v4913, %v4912
    %v4955 = vpack.c.b16 %v4915, %v4914
    %v4956 = vpack.c.b16 %v4917, %v4916
    %v4957 = vpack.c.b16 %v4919, %v4918
    %v4958 = vpack.c.b16 %v4921, %v4920
    %v4959 = vpack.c.b16 %v4923, %v4922
    %v4960 = vpack.c.b16 %v4925, %v4924
    %v4961 = vpack.c.b16 %v4927, %v4926
    %v4962 = vpack.c.b16 %v4929, %v4928
    %v4963 = vpack.c.b16 %v4931, %v4930
    %4996 = vmatpush.bf16.msra.mxu0 %v4939
    %4997 = vmatpush.bf16.msra.mxu0 %v4938
    %4998 = vmatpush.bf16.msra.mxu0 %v4937
    %4999 = vmatpush.bf16.msra.mxu0 %v4936
    %5000 = vmatpush.bf16.msra.mxu0 %v4935
    %5001 = vmatpush.bf16.msra.mxu0 %v4934
    %5002 = vmatpush.bf16.msra.mxu0 %v4933
    %5003 = vmatpush.bf16.msra.mxu0 %v4932
    %5004 = vmatmul.bf16.gmra.mxu0 %v4732
    %v5005 = vpop.f32.mrf.mxu0
    %v5006 = vadd.f32 %v4802, %v5005
    %v5007 = vpop.f32.mrf.mxu0
    %5008 = vdwg.mxu0
    %5009 = vmatpush.bf16.msra.mxu0 %v4947
    %5010 = vmatpush.bf16.msra.mxu0 %v4946
    %5011 = vmatpush.bf16.msra.mxu0 %v4945
    %5012 = vmatpush.bf16.msra.mxu0 %v4944
    %5013 = vmatpush.bf16.msra.mxu0 %v4943
    %5014 = vmatpush.bf16.msra.mxu0 %v4942
    %5015 = vmatpush.bf16.msra.mxu0 %v4941
    %5016 = vmatpush.bf16.msra.mxu0 %v4940
    %5017 = vmatmul.bf16.gmra.mxu0 %v4733
    %v5018 = vpop.f32.mrf.mxu0
    %v5019 = vadd.f32 %v5006, %v5018
    %v5020 = vpop.f32.mrf.mxu0
    %5021 = vdwg.mxu0
    %5022 = vmatpush.bf16.msra.mxu0 %v4955
    %5023 = vmatpush.bf16.msra.mxu0 %v4954
    %5024 = vmatpush.bf16.msra.mxu0 %v4953
    %5025 = vmatpush.bf16.msra.mxu0 %v4952
    %5026 = vmatpush.bf16.msra.mxu0 %v4951
    %5027 = vmatpush.bf16.msra.mxu0 %v4950
    %5028 = vmatpush.bf16.msra.mxu0 %v4949
    %5029 = vmatpush.bf16.msra.mxu0 %v4948
    %5030 = vmatmul.bf16.gmra.mxu0 %v4734
    %v5031 = vpop.f32.mrf.mxu0
    %v5032 = vadd.f32 %v5019, %v5031
    %v5033 = vpop.f32.mrf.mxu0
    %5034 = vdwg.mxu0
    %5035 = vmatpush.bf16.msra.mxu0 %v4963
    %5036 = vmatpush.bf16.msra.mxu0 %v4962
    %5037 = vmatpush.bf16.msra.mxu0 %v4961
    %5038 = vmatpush.bf16.msra.mxu0 %v4960
    %5039 = vmatpush.bf16.msra.mxu0 %v4959
    %5040 = vmatpush.bf16.msra.mxu0 %v4958
    %5041 = vmatpush.bf16.msra.mxu0 %v4957
    %5042 = vmatpush.bf16.msra.mxu0 %v4956
    %5043 = vmatmul.bf16.gmra.mxu0 %v4735
    %v5044 = vpop.f32.mrf.mxu0
    %v5045 = vadd.f32 %v5032, %v5044
    %v5046 = vpop.f32.mrf.mxu0
    %5047 = vdwg.mxu0
    %5048 = vst [vmem:[#allocation13] sm:$0x3] %v5045
    // Predicated region
    $region106: #{dqn_forward.1} parent=1 // pred_check
      _
    $region107: #{dqn_forward.1} parent=1 // pred_check_branch
      %5050 = sbr.rel (0) target = $region109
    $region108: #{dqn_forward.1} parent=1 // pred_region
      %5052 = vsyncadd [#allocation4], 0
      %s5054 = sshll.u32 [#allocation13], 4
      %s5055 = int_to_ptr.vmem [resolvable:$true] %s5054
      %s5056 = sshll.u32 %s20, 4
      %s5057 = int_to_ptr.hbm [resolvable:$true] %s5056
      %5059 = dma.vmem_to_hbm [thread:$0]  %s5055, 32, %s5057, [#allocation4]
    $region109: #{dqn_forward.1} parent=1 // pred_fallthru
      _
    // Predicated region
    $region110: #{dqn_forward.1} parent=1 // pred_check
      _
    $region111: #{dqn_forward.1} parent=1 // pred_check_branch
      %5061 = sbr.rel (0) target = $region113
    $region112: #{dqn_forward.1} parent=1 // pred_region
      %5063 = dma.done [#allocation4], 32
    $region113: #{dqn_forward.1} parent=1 // pred_fallthru
      _
    %5064 = vsyncpa [#allocation3], 1
    %5065 = vsyncpa [#allocation6], 1
    %5066 = vsyncpa [#allocation9], 1
    %5067 = vsyncpa [#allocation12], 1
    %5068 = vsyncpa [#allocation4], 1

</llo_original>
